<compile_context>
chip_gen: v7x
topology: tpu7x:2x2x1
jax: 0.10.0
libtpu: 0.0.40
codegen_flags: <defaults>
</compile_context>

<pallas_src>
import functools

import numpy as np
import jax
import jax.numpy as jnp
from jax.experimental import pallas as pl
from jax.experimental.pallas import tpu as pltpu

BN_EPS = 1e-5


def _round_up(x, m):
    return (x + m - 1) // m * m


# ------------------------------ fused kernel ---------------------------------

def _make_ir_kernel(*, stride, th, wo_t, win_h, win_w, img_h, img_w,
                    hidden, expand, use_res):
    """Fused 1x1-expand -> 3x3-depthwise -> 1x1-project for one image."""

    def kernel(*refs):
        it = iter(refs)
        xw_ref = next(it)                                   # (1, win_h, win_w, Cin) f32
        if expand:
            we_ref, be_ref = next(it), next(it)             # (Cin, hid) bf16 / (1, hid) f32
        wd_ref, bd_ref = next(it), next(it)                 # (9, 1, hid) f32 / (1, hid) f32
        wp_ref, bp_ref = next(it), next(it)                 # (hid, Cout) bf16 / (1, Cout) f32
        o_ref = next(it)                                    # (1, th*wo_t, Cout) f32
        h_ref = next(it) if expand else None                # VMEM (win_h, win_w, hid) bf16

        # ---- 1x1 expansion (+folded BN) + ReLU6; hidden lives only in VMEM ----
        if expand:
            cin = xw_ref.shape[-1]
            xm = xw_ref[0].reshape(win_h * win_w, cin).astype(jnp.bfloat16)
            hm = jnp.dot(xm, we_ref[...], preferred_element_type=jnp.float32)
            hm = jnp.clip(hm + be_ref[...], 0.0, 6.0)
            h_ref[...] = hm.reshape(win_h, win_w, hidden).astype(jnp.bfloat16)
            # The depthwise conv's spatial zero-padding must be exactly zero in
            # h, but the folded BN bias made it relu6(be) != 0 there.  Zero only
            # the O(border) pad slices (all indices static: whole image / step).
            h_ref[:, pl.ds(0, 1), :] = jnp.zeros((win_h, 1, hidden), jnp.bfloat16)
            right = win_w - (img_w + 1)
            h_ref[:, pl.ds(img_w + 1, right), :] = (
                jnp.zeros((win_h, right, hidden), jnp.bfloat16))
            h_ref[pl.ds(0, 1), :, :] = jnp.zeros((1, win_w, hidden), jnp.bfloat16)
            bot = win_h - (img_h + 1)
            if bot > 0:
                h_ref[pl.ds(img_h + 1, bot), :, :] = (
                    jnp.zeros((bot, win_w, hidden), jnp.bfloat16))

        # ---- 3x3 depthwise (+folded BN) + ReLU6 (f32 MAC, v5e-safe) ----
        if stride == 2:
            # Load the window once; each tap is a strided slice of the *value*
            # (vectorized full-tile accumulate; no per-row loop, no strided Ref
            # indexing -> lowers cleanly in both Mosaic and interpret mode).
            hv = h_ref[...] if expand else xw_ref[0]
        acc = jnp.zeros((th, wo_t, hidden), jnp.float32)
        for kh in range(3):
            for kw in range(3):
                if stride == 1:
                    if expand:
                        t = h_ref[pl.ds(kh, th), pl.ds(kw, wo_t), :]
                    else:
                        t = xw_ref[0, pl.ds(kh, th), pl.ds(kw, wo_t), :]
                else:
                    t = jax.lax.slice(
                        hv, (kh, kw, 0),
                        (kh + 2 * th - 1, kw + 2 * wo_t - 1, hidden),
                        (2, 2, 1))
                acc = acc + t.astype(jnp.float32) * wd_ref[kh * 3 + kw]
        dwv = jnp.clip(acc + bd_ref[...], 0.0, 6.0)

        # ---- 1x1 projection (+folded BN); residual from the resident window ----
        ym = jnp.dot(dwv.reshape(th * wo_t, hidden).astype(jnp.bfloat16),
                     wp_ref[...], preferred_element_type=jnp.float32)
        y = ym + bp_ref[...]
        if use_res:
            # x for this tile == window shifted by the (1,1) conv padding.
            res = xw_ref[0, pl.ds(1, th), pl.ds(1, wo_t), :]
            y = y + res.reshape(th * wo_t, -1)
        o_ref[0] = y.astype(o_ref.dtype)

    return kernel


# ------------------------------- wrappers --------------------------------------

def inverted_residual_nhwc(x, params, *, stride, expand_ratio):
    """InvertedResidual forward (eval mode).  x: NHWC f32 -> NHWC f32."""
    N, H, W, Cin = x.shape
    assert stride in (1, 2)
    expand = expand_ratio != 1
    hidden = params["wd"].shape[-1]
    Cout = params["wp"].shape[-1]
    use_res = stride == 1 and Cin == Cout            # same rule as the torch module

    Ho = (H - 1) // stride + 1                       # 3x3 conv, pad=1
    Wo = (W - 1) // stride + 1
    # Whole image per grid step: no halo duplication, no window stacking, and
    # the matmul M-dims (win_h*win_w and Ho*wo_t) are as large as possible.
    th = Ho
    wo_t = _round_up(Wo, 8)                          # sublane-friendly output width
    win_h = (th - 1) * stride + 3
    win_w = _round_up(max(W + 2, stride * (wo_t - 1) + 3), 8)

    x = x.astype(jnp.float32)
    xp = jnp.pad(x, ((0, 0), (1, win_h - (H + 1)), (1, win_w - (W + 1)), (0, 0)))

    args = [xp]
    in_specs = [pl.BlockSpec((1, win_h, win_w, Cin), lambda n: (n, 0, 0, 0))]
    if expand:
        args += [params["we"], params["be"]]
        in_specs += [pl.BlockSpec((Cin, hidden), lambda n: (0, 0)),
                     pl.BlockSpec((1, hidden), lambda n: (0, 0))]
    args += [params["wd"], params["bd"], params["wp"], params["bp"]]
    in_specs += [pl.BlockSpec((9, 1, hidden), lambda n: (0, 0, 0)),
                 pl.BlockSpec((1, hidden), lambda n: (0, 0)),
                 pl.BlockSpec((hidden, Cout), lambda n: (0, 0)),
                 pl.BlockSpec((1, Cout), lambda n: (0, 0))]

    # Weights are tiny at SSD sizes; default double-buffering costs only a few
    # KiB of VMEM, so pl.Buffered(1) headroom is not needed here.
    scratch = []
    if expand:
        scratch.append(pltpu.VMEM((win_h, win_w, hidden), jnp.bfloat16))

    kernel = _make_ir_kernel(stride=stride, th=th, wo_t=wo_t, win_h=win_h,
                             win_w=win_w, img_h=H, img_w=W, hidden=hidden,
                             expand=expand, use_res=use_res)

    flops = N * (2 * th * wo_t * hidden * (9 + Cout)
                 + (2 * win_h * win_w * Cin * hidden if expand else 0))
    wbytes = sum(int(v.size) * v.dtype.itemsize for v in params.values())
    bytes_accessed = N * 4 * (win_h * win_w * Cin + th * wo_t * Cout) + wbytes
    cost = pl.CostEstimate(flops=int(flops), transcendentals=0,
                           bytes_accessed=int(bytes_accessed))

    out = pl.pallas_call(
        kernel,
        grid=(N,),
        in_specs=in_specs,
        out_specs=pl.BlockSpec((1, th * wo_t, Cout), lambda n: (n, 0, 0)),
        out_shape=jax.ShapeDtypeStruct((N, th * wo_t, Cout), jnp.float32),
        scratch_shapes=scratch,
        cost_estimate=cost,
        compiler_params=pltpu.CompilerParams(
            dimension_semantics=("parallel",),
            # ~1 MiB/step at these sizes; 32 MiB cap is safe on v7x's 64 MiB
            # VMEM and leaves full pipeline depth on v5e/v6e.
            vmem_limit_bytes=32 * 1024 * 1024),
    )(*args)

    return out.reshape(N, th, wo_t, Cout)[:, :, :Wo, :]


def inverted_residual(x_nchw, params, *, stride, expand_ratio):
    """NCHW wrapper for torch parity.  Inside a network keep activations NHWC
    and call `inverted_residual_nhwc` directly (saves two HBM passes/layer)."""
    x = jnp.transpose(x_nchw, (0, 2, 3, 1))
    y = inverted_residual_nhwc(x, params, stride=stride, expand_ratio=expand_ratio)
    return jnp.transpose(y, (0, 3, 1, 2))


# ------------------------- parameters (BN folded) ------------------------------

def _fold_bn(key, cout):
    kg, kb, km, kv = jax.random.split(key, 4)
    gamma = 1.0 + 0.1 * jax.random.normal(kg, (cout,), jnp.float32)
    beta = 0.1 * jax.random.normal(kb, (cout,), jnp.float32)
    mean = 0.1 * jax.random.normal(km, (cout,), jnp.float32)
    var = 0.5 + jax.random.uniform(kv, (cout,), jnp.float32)
    scale = gamma / jnp.sqrt(var + BN_EPS)
    return scale, beta - mean * scale


def init_inverted_residual_params(key, inp, oup, expand_ratio):
    # TODO(synk): replace deterministic random init with real torch Conv2d/BN weights.
    hidden = int(round(inp * expand_ratio))
    keys = jax.random.split(key, 6)
    p = {}
    if expand_ratio != 1:
        w = jax.random.normal(keys[0], (inp, hidden), jnp.float32) / np.sqrt(inp)
        s, b = _fold_bn(keys[1], hidden)
        p["we"] = (w * s[None, :]).astype(jnp.bfloat16)   # BN scale folded, bf16 for MXU
        p["be"] = b.reshape(1, hidden)
    wd = jax.random.normal(keys[2], (9, 1, hidden), jnp.float32) / 3.0
    s, b = _fold_bn(keys[3], hidden)
    p["wd"] = wd * s.reshape(1, 1, hidden)                # f32 depthwise MAC (v5e-safe)
    p["bd"] = b.reshape(1, hidden)
    wp = jax.random.normal(keys[4], (hidden, oup), jnp.float32) / np.sqrt(hidden)
    s, b = _fold_bn(keys[5], oup)
    p["wp"] = (wp * s[None, :]).astype(jnp.bfloat16)
    p["bp"] = b.reshape(1, oup)
    return p


# -------------------------- pure-JAX reference ---------------------------------

def inverted_residual_ref(x_nchw, params, *, stride, expand_ratio):
    x = jnp.transpose(x_nchw, (0, 2, 3, 1)).astype(jnp.float32)
    N, H, W, Cin = x.shape
    Cout = params["wp"].shape[-1]
    if expand_ratio != 1:
        h = jnp.einsum("nhwc,cd->nhwd", x.astype(jnp.bfloat16), params["we"],
                       preferred_element_type=jnp.float32)
        h = jnp.clip(h + params["be"][0], 0.0, 6.0)
        # The kernel stores the expanded activation in bf16 VMEM; mirror that
        # precision policy here (depthwise accumulation stays f32).
        h = h.astype(jnp.bfloat16).astype(jnp.float32)
    else:
        h = x
    hp = jnp.pad(h, ((0, 0), (1, 1), (1, 1), (0, 0)))
    Ho = (H - 1) // stride + 1
    Wo = (W - 1) // stride + 1
    acc = jnp.zeros((N, Ho, Wo, h.shape[-1]), jnp.float32)
    for kh in range(3):
        for kw in range(3):
            tap = hp[:, kh:kh + stride * (Ho - 1) + 1:stride,
                     kw:kw + stride * (Wo - 1) + 1:stride, :]
            acc = acc + tap * params["wd"][kh * 3 + kw, 0]
    dw = jnp.clip(acc + params["bd"][0], 0.0, 6.0)
    y = jnp.einsum("nhwc,cd->nhwd", dw.astype(jnp.bfloat16), params["wp"],
                   preferred_element_type=jnp.float32) + params["bp"][0]
    if stride == 1 and Cin == Cout:
        y = y + x
    return jnp.transpose(y, (0, 3, 1, 2))


# ----------------------------------- main ---------------------------------------

if __name__ == "__main__":
    root = jax.random.PRNGKey(0)
    N, H, W = 2, 16, 16
    configs = [
        dict(inp=32, oup=32, stride=1, expand_ratio=6),   # expand + residual
        dict(inp=16, oup=24, stride=2, expand_ratio=6),   # expand + downsample
        dict(inp=32, oup=16, stride=1, expand_ratio=1),   # no expansion (t == 1)
    ]
    for idx, cfg in enumerate(configs):
        kp, kx = jax.random.split(jax.random.fold_in(root, idx))
        params = init_inverted_residual_params(kp, cfg["inp"], cfg["oup"],
                                               cfg["expand_ratio"])
        x = jax.random.normal(kx, (N, cfg["inp"], H, W), jnp.float32)
        fwd = jax.jit(functools.partial(inverted_residual, stride=cfg["stride"],
                                        expand_ratio=cfg["expand_ratio"]))
        y = fwd(x, params)
        jax.block_until_ready(y)
        Ho = (H - 1) // cfg["stride"] + 1
        Wo = (W - 1) // cfg["stride"] + 1
        assert y.shape == (N, cfg["oup"], Ho, Wo), y.shape
        assert y.dtype == jnp.float32
        y_ref = inverted_residual_ref(x, params, stride=cfg["stride"],
                                      expand_ratio=cfg["expand_ratio"])
        np.testing.assert_allclose(np.asarray(y), np.asarray(y_ref),
                                   rtol=2e-2, atol=2e-2)
    print("KERNEL_OK")
</pallas_src>

<mosaic_0001>
module attributes {stable_mosaic.version = 11 : i64} {
  func.func @kernel(%arg0: i32, %arg1: memref<1x18x24x32xf32, #tpu.memory_space<vmem>>, %arg2: memref<32x192xbf16, #tpu.memory_space<vmem>>, %arg3: memref<1x192xf32, #tpu.memory_space<vmem>>, %arg4: memref<9x1x192xf32, #tpu.memory_space<vmem>>, %arg5: memref<1x192xf32, #tpu.memory_space<vmem>>, %arg6: memref<192x32xbf16, #tpu.memory_space<vmem>>, %arg7: memref<1x32xf32, #tpu.memory_space<vmem>>, %arg8: memref<1x256x32xf32, #tpu.memory_space<vmem>>, %arg9: memref<18x24x192xbf16, #tpu.memory_space<vmem>>) attributes {dimension_semantics = [#tpu.dimension_semantics<parallel>], iteration_bounds = array<i64: 2>, scalar_prefetch = 0 : i64, scratch_operands = 1 : i64, tpu.core_type = #tpu.core_type<tc>, window_params = [{transform_indices = @transform_0, window_bounds = array<i64: 1, 18, 24, 32>}, {pipeline_mode = #tpu.pipeline_mode<synchronous>, transform_indices = @transform_1, window_bounds = array<i64: 32, 192>}, {pipeline_mode = #tpu.pipeline_mode<synchronous>, transform_indices = @transform_2, window_bounds = array<i64: 1, 192>}, {pipeline_mode = #tpu.pipeline_mode<synchronous>, transform_indices = @transform_3, window_bounds = array<i64: 9, 1, 192>}, {pipeline_mode = #tpu.pipeline_mode<synchronous>, transform_indices = @transform_4, window_bounds = array<i64: 1, 192>}, {pipeline_mode = #tpu.pipeline_mode<synchronous>, transform_indices = @transform_5, window_bounds = array<i64: 192, 32>}, {pipeline_mode = #tpu.pipeline_mode<synchronous>, transform_indices = @transform_6, window_bounds = array<i64: 1, 32>}, {transform_indices = @transform_7, window_bounds = array<i64: 1, 256, 32>}]} {
    %c0 = arith.constant 0 : index
    %c0_0 = arith.constant 0 : index
    %c0_1 = arith.constant 0 : index
    %c0_2 = arith.constant 0 : index
    %0 = vector.load %arg1[%c0, %c0_0, %c0_1, %c0_2] : memref<1x18x24x32xf32, #tpu.memory_space<vmem>>, vector<1x18x24x32xf32>
    %1 = vector.shape_cast %0 : vector<1x18x24x32xf32> to vector<18x24x32xf32>
    %2 = vector.shape_cast %1 : vector<18x24x32xf32> to vector<432x32xf32>
    %3 = arith.truncf %2 : vector<432x32xf32> to vector<432x32xbf16>
    %c0_3 = arith.constant 0 : index
    %c0_4 = arith.constant 0 : index
    %4 = vector.load %arg2[%c0_3, %c0_4] : memref<32x192xbf16, #tpu.memory_space<vmem>>, vector<32x192xbf16>
    %cst = arith.constant dense<0.000000e+00> : vector<432x192xf32>
    %5 = tpu.matmul %3, %4, %cst {dimension_numbers = #tpu.dot_dimension_numbers<[1], [0], [0], [1], [0, 0, 1, 1], [], []>} : vector<432x32xbf16>, vector<32x192xbf16>, vector<432x192xf32> -> vector<432x192xf32>
    %c0_5 = arith.constant 0 : index
    %c0_6 = arith.constant 0 : index
    %6 = vector.load %arg3[%c0_5, %c0_6] : memref<1x192xf32, #tpu.memory_space<vmem>>, vector<1x192xf32>
    %7 = vector.broadcast %6 : vector<1x192xf32> to vector<432x192xf32>
    %8 = arith.addf %5, %7 : vector<432x192xf32>
    %cst_7 = arith.constant 0.000000e+00 : f32
    %cst_8 = arith.constant 6.000000e+00 : f32
    %9 = vector.broadcast %cst_7 : f32 to vector<432x192xf32>
    %10 = arith.maximumf %9, %8 : vector<432x192xf32>
    %11 = vector.broadcast %cst_8 : f32 to vector<432x192xf32>
    %12 = arith.minimumf %11, %10 : vector<432x192xf32>
    %13 = vector.shape_cast %12 : vector<432x192xf32> to vector<18x24x192xf32>
    %14 = arith.truncf %13 : vector<18x24x192xf32> to vector<18x24x192xbf16>
    %c0_9 = arith.constant 0 : index
    %c0_10 = arith.constant 0 : index
    %c0_11 = arith.constant 0 : index
    %15 = vector.load %arg9[%c0_9, %c0_10, %c0_11] : memref<18x24x192xbf16, #tpu.memory_space<vmem>>, vector<18x24x192xbf16>
    tpu.vector_store %arg9[%c0_9, %c0_10, %c0_11], %14 {strides = array<i32>} : memref<18x24x192xbf16, #tpu.memory_space<vmem>>, vector<18x24x192xbf16>,
    %cst_12 = arith.constant 0.000000e+00 : bf16
    %16 = vector.broadcast %cst_12 : bf16 to vector<18x1x192xbf16>
    %c0_13 = arith.constant 0 : index
    %c0_14 = arith.constant 0 : index
    %c0_15 = arith.constant 0 : index
    %17 = vector.load %arg9[%c0_13, %c0_14, %c0_15] : memref<18x24x192xbf16, #tpu.memory_space<vmem>>, vector<18x1x192xbf16>
    tpu.vector_store %arg9[%c0_13, %c0_14, %c0_15], %16 {strides = array<i32>} : memref<18x24x192xbf16, #tpu.memory_space<vmem>>, vector<18x1x192xbf16>,
    %cst_16 = arith.constant 0.000000e+00 : bf16
    %18 = vector.broadcast %cst_16 : bf16 to vector<18x7x192xbf16>
    %c0_17 = arith.constant 0 : index
    %c17 = arith.constant 17 : index
    %c0_18 = arith.constant 0 : index
    %19 = vector.load %arg9[%c0_17, %c17, %c0_18] : memref<18x24x192xbf16, #tpu.memory_space<vmem>>, vector<18x7x192xbf16>
    tpu.vector_store %arg9[%c0_17, %c17, %c0_18], %18 {strides = array<i32>} : memref<18x24x192xbf16, #tpu.memory_space<vmem>>, vector<18x7x192xbf16>,
    %cst_19 = arith.constant 0.000000e+00 : bf16
    %20 = vector.broadcast %cst_19 : bf16 to vector<1x24x192xbf16>
    %c0_20 = arith.constant 0 : index
    %c0_21 = arith.constant 0 : index
    %c0_22 = arith.constant 0 : index
    %21 = vector.load %arg9[%c0_20, %c0_21, %c0_22] : memref<18x24x192xbf16, #tpu.memory_space<vmem>>, vector<1x24x192xbf16>
    tpu.vector_store %arg9[%c0_20, %c0_21, %c0_22], %20 {strides = array<i32>} : memref<18x24x192xbf16, #tpu.memory_space<vmem>>, vector<1x24x192xbf16>,
    %cst_23 = arith.constant 0.000000e+00 : bf16
    %22 = vector.broadcast %cst_23 : bf16 to vector<1x24x192xbf16>
    %c17_24 = arith.constant 17 : index
    %c0_25 = arith.constant 0 : index
    %c0_26 = arith.constant 0 : index
    %23 = vector.load %arg9[%c17_24, %c0_25, %c0_26] : memref<18x24x192xbf16, #tpu.memory_space<vmem>>, vector<1x24x192xbf16>
    tpu.vector_store %arg9[%c17_24, %c0_25, %c0_26], %22 {strides = array<i32>} : memref<18x24x192xbf16, #tpu.memory_space<vmem>>, vector<1x24x192xbf16>,
    %cst_27 = arith.constant 0.000000e+00 : f32
    %24 = vector.broadcast %cst_27 : f32 to vector<16x16x192xf32>
    %c0_28 = arith.constant 0 : index
    %c0_29 = arith.constant 0 : index
    %c0_30 = arith.constant 0 : index
    %25 = vector.load %arg9[%c0_28, %c0_29, %c0_30] : memref<18x24x192xbf16, #tpu.memory_space<vmem>>, vector<16x16x192xbf16>
    %26 = arith.extf %25 : vector<16x16x192xbf16> to vector<16x16x192xf32>
    %c0_31 = arith.constant 0 : index
    %c0_32 = arith.constant 0 : index
    %c0_33 = arith.constant 0 : index
    %27 = vector.load %arg4[%c0_31, %c0_32, %c0_33] : memref<9x1x192xf32, #tpu.memory_space<vmem>>, vector<1x1x192xf32>
    %28 = vector.shape_cast %27 : vector<1x1x192xf32> to vector<1x192xf32>
    %29 = vector.shape_cast %28 : vector<1x192xf32> to vector<1x1x192xf32>
    %30 = vector.broadcast %29 : vector<1x1x192xf32> to vector<16x16x192xf32>
    %31 = arith.mulf %26, %30 : vector<16x16x192xf32>
    %32 = arith.addf %24, %31 : vector<16x16x192xf32>
    %c0_34 = arith.constant 0 : index
    %c1 = arith.constant 1 : index
    %c0_35 = arith.constant 0 : index
    %33 = vector.load %arg9[%c0_34, %c1, %c0_35] : memref<18x24x192xbf16, #tpu.memory_space<vmem>>, vector<16x16x192xbf16>
    %34 = arith.extf %33 : vector<16x16x192xbf16> to vector<16x16x192xf32>
    %c1_36 = arith.constant 1 : index
    %c0_37 = arith.constant 0 : index
    %c0_38 = arith.constant 0 : index
    %35 = vector.load %arg4[%c1_36, %c0_37, %c0_38] : memref<9x1x192xf32, #tpu.memory_space<vmem>>, vector<1x1x192xf32>
    %36 = vector.shape_cast %35 : vector<1x1x192xf32> to vector<1x192xf32>
    %37 = vector.shape_cast %36 : vector<1x192xf32> to vector<1x1x192xf32>
    %38 = vector.broadcast %37 : vector<1x1x192xf32> to vector<16x16x192xf32>
    %39 = arith.mulf %34, %38 : vector<16x16x192xf32>
    %40 = arith.addf %32, %39 : vector<16x16x192xf32>
    %c0_39 = arith.constant 0 : index
    %c2 = arith.constant 2 : index
    %c0_40 = arith.constant 0 : index
    %41 = vector.load %arg9[%c0_39, %c2, %c0_40] : memref<18x24x192xbf16, #tpu.memory_space<vmem>>, vector<16x16x192xbf16>
    %42 = arith.extf %41 : vector<16x16x192xbf16> to vector<16x16x192xf32>
    %c2_41 = arith.constant 2 : index
    %c0_42 = arith.constant 0 : index
    %c0_43 = arith.constant 0 : index
    %43 = vector.load %arg4[%c2_41, %c0_42, %c0_43] : memref<9x1x192xf32, #tpu.memory_space<vmem>>, vector<1x1x192xf32>
    %44 = vector.shape_cast %43 : vector<1x1x192xf32> to vector<1x192xf32>
    %45 = vector.shape_cast %44 : vector<1x192xf32> to vector<1x1x192xf32>
    %46 = vector.broadcast %45 : vector<1x1x192xf32> to vector<16x16x192xf32>
    %47 = arith.mulf %42, %46 : vector<16x16x192xf32>
    %48 = arith.addf %40, %47 : vector<16x16x192xf32>
    %c1_44 = arith.constant 1 : index
    %c0_45 = arith.constant 0 : index
    %c0_46 = arith.constant 0 : index
    %49 = vector.load %arg9[%c1_44, %c0_45, %c0_46] : memref<18x24x192xbf16, #tpu.memory_space<vmem>>, vector<16x16x192xbf16>
    %50 = arith.extf %49 : vector<16x16x192xbf16> to vector<16x16x192xf32>
    %c3 = arith.constant 3 : index
    %c0_47 = arith.constant 0 : index
    %c0_48 = arith.constant 0 : index
    %51 = vector.load %arg4[%c3, %c0_47, %c0_48] : memref<9x1x192xf32, #tpu.memory_space<vmem>>, vector<1x1x192xf32>
    %52 = vector.shape_cast %51 : vector<1x1x192xf32> to vector<1x192xf32>
    %53 = vector.shape_cast %52 : vector<1x192xf32> to vector<1x1x192xf32>
    %54 = vector.broadcast %53 : vector<1x1x192xf32> to vector<16x16x192xf32>
    %55 = arith.mulf %50, %54 : vector<16x16x192xf32>
    %56 = arith.addf %48, %55 : vector<16x16x192xf32>
    %c1_49 = arith.constant 1 : index
    %c1_50 = arith.constant 1 : index
    %c0_51 = arith.constant 0 : index
    %57 = vector.load %arg9[%c1_49, %c1_50, %c0_51] : memref<18x24x192xbf16, #tpu.memory_space<vmem>>, vector<16x16x192xbf16>
    %58 = arith.extf %57 : vector<16x16x192xbf16> to vector<16x16x192xf32>
    %c4 = arith.constant 4 : index
    %c0_52 = arith.constant 0 : index
    %c0_53 = arith.constant 0 : index
    %59 = vector.load %arg4[%c4, %c0_52, %c0_53] : memref<9x1x192xf32, #tpu.memory_space<vmem>>, vector<1x1x192xf32>
    %60 = vector.shape_cast %59 : vector<1x1x192xf32> to vector<1x192xf32>
    %61 = vector.shape_cast %60 : vector<1x192xf32> to vector<1x1x192xf32>
    %62 = vector.broadcast %61 : vector<1x1x192xf32> to vector<16x16x192xf32>
    %63 = arith.mulf %58, %62 : vector<16x16x192xf32>
    %64 = arith.addf %56, %63 : vector<16x16x192xf32>
    %c1_54 = arith.constant 1 : index
    %c2_55 = arith.constant 2 : index
    %c0_56 = arith.constant 0 : index
    %65 = vector.load %arg9[%c1_54, %c2_55, %c0_56] : memref<18x24x192xbf16, #tpu.memory_space<vmem>>, vector<16x16x192xbf16>
    %66 = arith.extf %65 : vector<16x16x192xbf16> to vector<16x16x192xf32>
    %c5 = arith.constant 5 : index
    %c0_57 = arith.constant 0 : index
    %c0_58 = arith.constant 0 : index
    %67 = vector.load %arg4[%c5, %c0_57, %c0_58] : memref<9x1x192xf32, #tpu.memory_space<vmem>>, vector<1x1x192xf32>
    %68 = vector.shape_cast %67 : vector<1x1x192xf32> to vector<1x192xf32>
    %69 = vector.shape_cast %68 : vector<1x192xf32> to vector<1x1x192xf32>
    %70 = vector.broadcast %69 : vector<1x1x192xf32> to vector<16x16x192xf32>
    %71 = arith.mulf %66, %70 : vector<16x16x192xf32>
    %72 = arith.addf %64, %71 : vector<16x16x192xf32>
    %c2_59 = arith.constant 2 : index
    %c0_60 = arith.constant 0 : index
    %c0_61 = arith.constant 0 : index
    %73 = vector.load %arg9[%c2_59, %c0_60, %c0_61] : memref<18x24x192xbf16, #tpu.memory_space<vmem>>, vector<16x16x192xbf16>
    %74 = arith.extf %73 : vector<16x16x192xbf16> to vector<16x16x192xf32>
    %c6 = arith.constant 6 : index
    %c0_62 = arith.constant 0 : index
    %c0_63 = arith.constant 0 : index
    %75 = vector.load %arg4[%c6, %c0_62, %c0_63] : memref<9x1x192xf32, #tpu.memory_space<vmem>>, vector<1x1x192xf32>
    %76 = vector.shape_cast %75 : vector<1x1x192xf32> to vector<1x192xf32>
    %77 = vector.shape_cast %76 : vector<1x192xf32> to vector<1x1x192xf32>
    %78 = vector.broadcast %77 : vector<1x1x192xf32> to vector<16x16x192xf32>
    %79 = arith.mulf %74, %78 : vector<16x16x192xf32>
    %80 = arith.addf %72, %79 : vector<16x16x192xf32>
    %c2_64 = arith.constant 2 : index
    %c1_65 = arith.constant 1 : index
    %c0_66 = arith.constant 0 : index
    %81 = vector.load %arg9[%c2_64, %c1_65, %c0_66] : memref<18x24x192xbf16, #tpu.memory_space<vmem>>, vector<16x16x192xbf16>
    %82 = arith.extf %81 : vector<16x16x192xbf16> to vector<16x16x192xf32>
    %c7 = arith.constant 7 : index
    %c0_67 = arith.constant 0 : index
    %c0_68 = arith.constant 0 : index
    %83 = vector.load %arg4[%c7, %c0_67, %c0_68] : memref<9x1x192xf32, #tpu.memory_space<vmem>>, vector<1x1x192xf32>
    %84 = vector.shape_cast %83 : vector<1x1x192xf32> to vector<1x192xf32>
    %85 = vector.shape_cast %84 : vector<1x192xf32> to vector<1x1x192xf32>
    %86 = vector.broadcast %85 : vector<1x1x192xf32> to vector<16x16x192xf32>
    %87 = arith.mulf %82, %86 : vector<16x16x192xf32>
    %88 = arith.addf %80, %87 : vector<16x16x192xf32>
    %c2_69 = arith.constant 2 : index
    %c2_70 = arith.constant 2 : index
    %c0_71 = arith.constant 0 : index
    %89 = vector.load %arg9[%c2_69, %c2_70, %c0_71] : memref<18x24x192xbf16, #tpu.memory_space<vmem>>, vector<16x16x192xbf16>
    %90 = arith.extf %89 : vector<16x16x192xbf16> to vector<16x16x192xf32>
    %c8 = arith.constant 8 : index
    %c0_72 = arith.constant 0 : index
    %c0_73 = arith.constant 0 : index
    %91 = vector.load %arg4[%c8, %c0_72, %c0_73] : memref<9x1x192xf32, #tpu.memory_space<vmem>>, vector<1x1x192xf32>
    %92 = vector.shape_cast %91 : vector<1x1x192xf32> to vector<1x192xf32>
    %93 = vector.shape_cast %92 : vector<1x192xf32> to vector<1x1x192xf32>
    %94 = vector.broadcast %93 : vector<1x1x192xf32> to vector<16x16x192xf32>
    %95 = arith.mulf %90, %94 : vector<16x16x192xf32>
    %96 = arith.addf %88, %95 : vector<16x16x192xf32>
    %c0_74 = arith.constant 0 : index
    %c0_75 = arith.constant 0 : index
    %97 = vector.load %arg5[%c0_74, %c0_75] : memref<1x192xf32, #tpu.memory_space<vmem>>, vector<1x192xf32>
    %98 = vector.shape_cast %97 : vector<1x192xf32> to vector<1x1x192xf32>
    %99 = vector.broadcast %98 : vector<1x1x192xf32> to vector<16x16x192xf32>
    %100 = arith.addf %96, %99 : vector<16x16x192xf32>
    %cst_76 = arith.constant 0.000000e+00 : f32
    %cst_77 = arith.constant 6.000000e+00 : f32
    %101 = vector.broadcast %cst_76 : f32 to vector<16x16x192xf32>
    %102 = arith.maximumf %101, %100 : vector<16x16x192xf32>
    %103 = vector.broadcast %cst_77 : f32 to vector<16x16x192xf32>
    %104 = arith.minimumf %103, %102 : vector<16x16x192xf32>
    %105 = vector.shape_cast %104 : vector<16x16x192xf32> to vector<256x192xf32>
    %106 = arith.truncf %105 : vector<256x192xf32> to vector<256x192xbf16>
    %c0_78 = arith.constant 0 : index
    %c0_79 = arith.constant 0 : index
    %107 = vector.load %arg6[%c0_78, %c0_79] : memref<192x32xbf16, #tpu.memory_space<vmem>>, vector<192x32xbf16>
    %cst_80 = arith.constant dense<0.000000e+00> : vector<256x32xf32>
    %108 = tpu.matmul %106, %107, %cst_80 {dimension_numbers = #tpu.dot_dimension_numbers<[1], [0], [0], [1], [0, 0, 1, 1], [], []>} : vector<256x192xbf16>, vector<192x32xbf16>, vector<256x32xf32> -> vector<256x32xf32>
    %c0_81 = arith.constant 0 : index
    %c0_82 = arith.constant 0 : index
    %109 = vector.load %arg7[%c0_81, %c0_82] : memref<1x32xf32, #tpu.memory_space<vmem>>, vector<1x32xf32>
    %110 = vector.broadcast %109 : vector<1x32xf32> to vector<256x32xf32>
    %111 = arith.addf %108, %110 : vector<256x32xf32>
    %c0_83 = arith.constant 0 : index
    %c1_84 = arith.constant 1 : index
    %c1_85 = arith.constant 1 : index
    %c0_86 = arith.constant 0 : index
    %112 = vector.load %arg1[%c0_83, %c1_84, %c1_85, %c0_86] : memref<1x18x24x32xf32, #tpu.memory_space<vmem>>, vector<1x16x16x32xf32>
    %113 = vector.shape_cast %112 : vector<1x16x16x32xf32> to vector<16x16x32xf32>
    %114 = vector.shape_cast %113 : vector<16x16x32xf32> to vector<256x32xf32>
    %115 = arith.addf %111, %114 : vector<256x32xf32>
    %c0_87 = arith.constant 0 : index
    %c0_88 = arith.constant 0 : index
    %c0_89 = arith.constant 0 : index
    %116 = vector.load %arg8[%c0_87, %c0_88, %c0_89] : memref<1x256x32xf32, #tpu.memory_space<vmem>>, vector<1x256x32xf32>
    %117 = vector.shape_cast %116 : vector<1x256x32xf32> to vector<256x32xf32>
    %118 = vector.shape_cast %115 : vector<256x32xf32> to vector<1x256x32xf32>
    tpu.vector_store %arg8[%c0_87, %c0_88, %c0_89], %118 {strides = array<i32>} : memref<1x256x32xf32, #tpu.memory_space<vmem>>, vector<1x256x32xf32>,
    return
  }
  func.func @transform_0(%arg0: i32) -> (i32, i32, i32, i32) {
    %c0_i32 = arith.constant 0 : i32
    %c0_i32_0 = arith.constant 0 : i32
    %c0_i32_1 = arith.constant 0 : i32
    %c0_i32_2 = arith.constant 0 : i32
    return %arg0, %c0_i32, %c0_i32_0, %c0_i32_1 : i32, i32, i32, i32
  }
  func.func @transform_1(%arg0: i32) -> (i32, i32) {
    %c0_i32 = arith.constant 0 : i32
    %c0_i32_0 = arith.constant 0 : i32
    %c0_i32_1 = arith.constant 0 : i32
    return %c0_i32, %c0_i32_0 : i32, i32
  }
  func.func @transform_2(%arg0: i32) -> (i32, i32) {
    %c0_i32 = arith.constant 0 : i32
    %c0_i32_0 = arith.constant 0 : i32
    %c0_i32_1 = arith.constant 0 : i32
    return %c0_i32, %c0_i32_0 : i32, i32
  }
  func.func @transform_3(%arg0: i32) -> (i32, i32, i32) {
    %c0_i32 = arith.constant 0 : i32
    %c0_i32_0 = arith.constant 0 : i32
    %c0_i32_1 = arith.constant 0 : i32
    %c0_i32_2 = arith.constant 0 : i32
    return %c0_i32, %c0_i32_0, %c0_i32_1 : i32, i32, i32
  }
  func.func @transform_4(%arg0: i32) -> (i32, i32) {
    %c0_i32 = arith.constant 0 : i32
    %c0_i32_0 = arith.constant 0 : i32
    %c0_i32_1 = arith.constant 0 : i32
    return %c0_i32, %c0_i32_0 : i32, i32
  }
  func.func @transform_5(%arg0: i32) -> (i32, i32) {
    %c0_i32 = arith.constant 0 : i32
    %c0_i32_0 = arith.constant 0 : i32
    %c0_i32_1 = arith.constant 0 : i32
    return %c0_i32, %c0_i32_0 : i32, i32
  }
  func.func @transform_6(%arg0: i32) -> (i32, i32) {
    %c0_i32 = arith.constant 0 : i32
    %c0_i32_0 = arith.constant 0 : i32
    %c0_i32_1 = arith.constant 0 : i32
    return %c0_i32, %c0_i32_0 : i32, i32
  }
  func.func @transform_7(%arg0: i32) -> (i32, i32, i32) {
    %c0_i32 = arith.constant 0 : i32
    %c0_i32_0 = arith.constant 0 : i32
    %c0_i32_1 = arith.constant 0 : i32
    return %arg0, %c0_i32, %c0_i32_0 : i32, i32, i32
  }
}

</mosaic_0001>

<llo_original>
// kernel: inverted_residual.1
$region0: #{inverted_residual.1}
  #allocation0 [shape = 'u32[]', space=smem, size = 0x4, offset = 0x4, fixed_abs, tag = 'smem constant byte address 0x4 - core index']
  #allocation1 [shape = 'u32[144,128]{1,0:T(1,128)}', space=vmem, size = 0x12000, scoped, tag = 'internal scratch']
  #allocation2 [shape = 'bf16[18,24,192]{2,1,0:T(8,128)(2,1)}', space=vmem, size = 0x36000, scoped, tag = 'scratch operand']
  %s0 = inlined_call_operand.vmem [shape: f32[2,18,24,32], index: 0, kind: input, shape index: {}]
  %s1 = inlined_call_operand.vmem [shape: bf16[32,192], index: 1, kind: input, shape index: {}]
  %s2 = inlined_call_operand.vmem [shape: f32[1,192], index: 2, kind: input, shape index: {}]
  %s3 = inlined_call_operand.vmem [shape: f32[9,1,192], index: 3, kind: input, shape index: {}]
  %s4 = inlined_call_operand.vmem [shape: f32[1,192], index: 4, kind: input, shape index: {}]
  %s5 = inlined_call_operand.vmem [shape: bf16[192,32], index: 5, kind: input, shape index: {}]
  %s6 = inlined_call_operand.vmem [shape: f32[1,32], index: 6, kind: input, shape index: {}]
  %s7 = inlined_call_operand.hbm [shape: f32[2,256,32], index: 7, kind: output, shape index: {}]
  %s8 = sld [smem:[#allocation0]]
  $region61: #{inverted_residual.1} parent=0
    _
  %s10 = ssub.s32 1, %s8
  %s11 = scalar_select 0, %s10, %s8
  $region1: #{inverted_residual.1} parent=0
    #allocation3 [shape = 'u8[262144]{0}', space=vmem, size = 0x40000, scoped, tag = 'output window, operand 0']
    #allocation4 [shape = 's32[2]{0}', space=sflag, size = 0x8, scoped, tag = 'scoped memory for inverted_residual.1']
    %12 = vsyncpa [#allocation4], 0
    %s13 = scalar_lea.sflag [#allocation4], 1
    %14 = vsyncpa %s13, 0
    loop: start=0, step=1, limit=4
    $region2: #{inverted_residual.1} parent=1 // loop_pre_header
      _
    $region3: #{inverted_residual.1} parent=1 // loop_header
      %s16 = sphi 0, %s20
      %p17 = scmp.ge.s32.totalorder %s16, 4
      %s26 = sphi 0, %s28
      %s29 = sphi 0, %s26
      %s30 = sphi 0, %s29
      %s46 = sphi 0, %s30
      %s50 = sphi 0, %s50
      %s52 = sphi 0, %s50
      %s53 = sphi 0, %s52
      %s67 = sphi 0, %s53
      %s71 = sphi 0, %s71
      %s73 = sphi 0, %s71
      %s74 = sphi 0, %s73
      %s88 = sphi 0, %s74
      %s92 = sphi 0, %s92
      %s94 = sphi 0, %s92
      %s95 = sphi 0, %s94
      %s109 = sphi 0, %s95
      %s113 = sphi 0, %s113
      %s115 = sphi 0, %s113
      %s116 = sphi 0, %s115
      %s130 = sphi 0, %s116
      %s134 = sphi 0, %s134
      %s136 = sphi 0, %s134
      %s137 = sphi 0, %s136
      %s151 = sphi 0, %s137
      %s155 = sphi 0, %s155
      %s157 = sphi 0, %s155
      %s158 = sphi 0, %s157
      %s172 = sphi 0, %s158
      %s178 = sphi 0, %s180
      %s181 = sphi 0, %s178
      %s182 = sphi 0, %s181
      %s198 = sphi 0, %s182
    $region4: #{inverted_residual.1} parent=1 // loop_header_branch
      %19 = sbr.rel (%p17) target = $region8
    $region5: #{inverted_residual.1} parent=1 // loop_body
      %s21 = ssub.s32 %s16, 1
      %s22 = ssub.s32 %s16, 2
      %s23 = sadd.s32 %s16, 1
      %s24 = ssub.s32 %s16, %s23
      %p25 = scmp.eq.s32.totalorder %s24, 0
      %s27 = sadd.s32 %s26, 1
      %s28 = scalar_select %p25, %s26, %s27
      %p31 = pneg %p25
      %p32 = scmp.eq.s32.totalorder %s16, 1
      %p33 = por %p31, %p32
      %p34 = scmp.ne.s32.totalorder %s26, %s29
      %p35 = scmp.eq.s32.totalorder %s16, 0
      %p36 = por %p34, %p35
      %p37 = scmp.ne.s32.totalorder %s26, %s29
      %p38 = scmp.eq.s32.totalorder %s21, 1
      %p39 = por %p37, %p38
      %p40 = scmp.ne.s32.totalorder %s29, %s30
      %p41 = scmp.eq.s32.totalorder %s21, 0
      %p42 = por %p40, %p41
      %p43 = scmp.ne.s32.totalorder %s29, %s30
      %p44 = scmp.eq.s32.totalorder %s22, 1
      %p45 = por %p43, %p44
      %p47 = scmp.ne.s32.totalorder %s30, %s46
      %p48 = scmp.eq.s32.totalorder %s22, 0
      %p49 = por %p47, %p48
      %s51 = sadd.s32 %s50, 1
      %p54 = scmp.eq.s32.totalorder %s16, 1
      %p55 = scmp.ne.s32.totalorder %s50, %s52
      %p56 = scmp.eq.s32.totalorder %s16, 0
      %p57 = por %p55, %p56
      %p58 = scmp.ne.s32.totalorder %s50, %s52
      %p59 = scmp.eq.s32.totalorder %s21, 1
      %p60 = por %p58, %p59
      %p61 = scmp.ne.s32.totalorder %s52, %s53
      %p62 = scmp.eq.s32.totalorder %s21, 0
      %p63 = por %p61, %p62
      %p64 = scmp.ne.s32.totalorder %s52, %s53
      %p65 = scmp.eq.s32.totalorder %s22, 1
      %p66 = por %p64, %p65
      %p68 = scmp.ne.s32.totalorder %s53, %s67
      %p69 = scmp.eq.s32.totalorder %s22, 0
      %p70 = por %p68, %p69
      %s72 = sadd.s32 %s71, 1
      %p75 = scmp.eq.s32.totalorder %s16, 1
      %p76 = scmp.ne.s32.totalorder %s71, %s73
      %p77 = scmp.eq.s32.totalorder %s16, 0
      %p78 = por %p76, %p77
      %p79 = scmp.ne.s32.totalorder %s71, %s73
      %p80 = scmp.eq.s32.totalorder %s21, 1
      %p81 = por %p79, %p80
      %p82 = scmp.ne.s32.totalorder %s73, %s74
      %p83 = scmp.eq.s32.totalorder %s21, 0
      %p84 = por %p82, %p83
      %p85 = scmp.ne.s32.totalorder %s73, %s74
      %p86 = scmp.eq.s32.totalorder %s22, 1
      %p87 = por %p85, %p86
      %p89 = scmp.ne.s32.totalorder %s74, %s88
      %p90 = scmp.eq.s32.totalorder %s22, 0
      %p91 = por %p89, %p90
      %s93 = sadd.s32 %s92, 1
      %p96 = scmp.eq.s32.totalorder %s16, 1
      %p97 = scmp.ne.s32.totalorder %s92, %s94
      %p98 = scmp.eq.s32.totalorder %s16, 0
      %p99 = por %p97, %p98
      %p100 = scmp.ne.s32.totalorder %s92, %s94
      %p101 = scmp.eq.s32.totalorder %s21, 1
      %p102 = por %p100, %p101
      %p103 = scmp.ne.s32.totalorder %s94, %s95
      %p104 = scmp.eq.s32.totalorder %s21, 0
      %p105 = por %p103, %p104
      %p106 = scmp.ne.s32.totalorder %s94, %s95
      %p107 = scmp.eq.s32.totalorder %s22, 1
      %p108 = por %p106, %p107
      %p110 = scmp.ne.s32.totalorder %s95, %s109
      %p111 = scmp.eq.s32.totalorder %s22, 0
      %p112 = por %p110, %p111
      %s114 = sadd.s32 %s113, 1
      %p117 = scmp.eq.s32.totalorder %s16, 1
      %p118 = scmp.ne.s32.totalorder %s113, %s115
      %p119 = scmp.eq.s32.totalorder %s16, 0
      %p120 = por %p118, %p119
      %p121 = scmp.ne.s32.totalorder %s113, %s115
      %p122 = scmp.eq.s32.totalorder %s21, 1
      %p123 = por %p121, %p122
      %p124 = scmp.ne.s32.totalorder %s115, %s116
      %p125 = scmp.eq.s32.totalorder %s21, 0
      %p126 = por %p124, %p125
      %p127 = scmp.ne.s32.totalorder %s115, %s116
      %p128 = scmp.eq.s32.totalorder %s22, 1
      %p129 = por %p127, %p128
      %p131 = scmp.ne.s32.totalorder %s116, %s130
      %p132 = scmp.eq.s32.totalorder %s22, 0
      %p133 = por %p131, %p132
      %s135 = sadd.s32 %s134, 1
      %p138 = scmp.eq.s32.totalorder %s16, 1
      %p139 = scmp.ne.s32.totalorder %s134, %s136
      %p140 = scmp.eq.s32.totalorder %s16, 0
      %p141 = por %p139, %p140
      %p142 = scmp.ne.s32.totalorder %s134, %s136
      %p143 = scmp.eq.s32.totalorder %s21, 1
      %p144 = por %p142, %p143
      %p145 = scmp.ne.s32.totalorder %s136, %s137
      %p146 = scmp.eq.s32.totalorder %s21, 0
      %p147 = por %p145, %p146
      %p148 = scmp.ne.s32.totalorder %s136, %s137
      %p149 = scmp.eq.s32.totalorder %s22, 1
      %p150 = por %p148, %p149
      %p152 = scmp.ne.s32.totalorder %s137, %s151
      %p153 = scmp.eq.s32.totalorder %s22, 0
      %p154 = por %p152, %p153
      %s156 = sadd.s32 %s155, 1
      %p159 = scmp.eq.s32.totalorder %s16, 1
      %p160 = scmp.ne.s32.totalorder %s155, %s157
      %p161 = scmp.eq.s32.totalorder %s16, 0
      %p162 = por %p160, %p161
      %p163 = scmp.ne.s32.totalorder %s155, %s157
      %p164 = scmp.eq.s32.totalorder %s21, 1
      %p165 = por %p163, %p164
      %p166 = scmp.ne.s32.totalorder %s157, %s158
      %p167 = scmp.eq.s32.totalorder %s21, 0
      %p168 = por %p166, %p167
      %p169 = scmp.ne.s32.totalorder %s157, %s158
      %p170 = scmp.eq.s32.totalorder %s22, 1
      %p171 = por %p169, %p170
      %p173 = scmp.ne.s32.totalorder %s158, %s172
      %p174 = scmp.eq.s32.totalorder %s22, 0
      %p175 = por %p173, %p174
      %s176 = ssub.s32 %s16, %s23
      %p177 = scmp.eq.s32.totalorder %s176, 0
      %s179 = sadd.s32 %s178, 1
      %s180 = scalar_select %p177, %s178, %s179
      %p183 = pneg %p177
      %p184 = scmp.eq.s32.totalorder %s16, 1
      %p185 = por %p183, %p184
      %p186 = scmp.ne.s32.totalorder %s178, %s181
      %p187 = scmp.eq.s32.totalorder %s16, 0
      %p188 = por %p186, %p187
      %p189 = scmp.ne.s32.totalorder %s178, %s181
      %p190 = scmp.eq.s32.totalorder %s21, 1
      %p191 = por %p189, %p190
      %p192 = scmp.ne.s32.totalorder %s181, %s182
      %p193 = scmp.eq.s32.totalorder %s21, 0
      %p194 = por %p192, %p193
      %p195 = scmp.ne.s32.totalorder %s181, %s182
      %p196 = scmp.eq.s32.totalorder %s22, 1
      %p197 = por %p195, %p196
      %p199 = scmp.ne.s32.totalorder %s182, %s198
      %p200 = scmp.eq.s32.totalorder %s22, 0
      %p201 = por %p199, %p200
      %p202 = scmp.le.s32.totalorder 1, %s16
      %p203 = scmp.lt.s32.totalorder %s16, 3
      %p204 = pnand %p202, %p203
      %p205 = pneg %p204
      // Predicated region
      $region9: #{inverted_residual.1} parent=5 // pred_check
        _
      $region10: #{inverted_residual.1} parent=5 // pred_check_branch
        %207 = sbr.rel (%p204) target = $region12
      $region11: #{inverted_residual.1} parent=5 // pred_region
        %s208 = ssub.s32 %s16, 1
        // Predicated region
        $region13: #{inverted_residual.1} parent=11 // pred_check
          %p209 = pneg %p63
        $region14: #{inverted_residual.1} parent=11 // pred_check_branch
          %211 = sbr.rel (%p209) target = $region16
        $region15: #{inverted_residual.1} parent=11 // pred_region
          _
        $region16: #{inverted_residual.1} parent=11 // pred_fallthru
          _
        // Predicated region
        $region17: #{inverted_residual.1} parent=11 // pred_check
          %p212 = pneg %p84
        $region18: #{inverted_residual.1} parent=11 // pred_check_branch
          %214 = sbr.rel (%p212) target = $region20
        $region19: #{inverted_residual.1} parent=11 // pred_region
          _
        $region20: #{inverted_residual.1} parent=11 // pred_fallthru
          _
        // Predicated region
        $region21: #{inverted_residual.1} parent=11 // pred_check
          %p215 = pneg %p105
        $region22: #{inverted_residual.1} parent=11 // pred_check_branch
          %217 = sbr.rel (%p215) target = $region24
        $region23: #{inverted_residual.1} parent=11 // pred_region
          _
        $region24: #{inverted_residual.1} parent=11 // pred_fallthru
          _
        // Predicated region
        $region25: #{inverted_residual.1} parent=11 // pred_check
          %p218 = pneg %p126
        $region26: #{inverted_residual.1} parent=11 // pred_check_branch
          %220 = sbr.rel (%p218) target = $region28
        $region27: #{inverted_residual.1} parent=11 // pred_region
          _
        $region28: #{inverted_residual.1} parent=11 // pred_fallthru
          _
        // Predicated region
        $region29: #{inverted_residual.1} parent=11 // pred_check
          %p221 = pneg %p147
        $region30: #{inverted_residual.1} parent=11 // pred_check_branch
          %223 = sbr.rel (%p221) target = $region32
        $region31: #{inverted_residual.1} parent=11 // pred_region
          _
        $region32: #{inverted_residual.1} parent=11 // pred_fallthru
          _
        // Predicated region
        $region33: #{inverted_residual.1} parent=11 // pred_check
          %p224 = pneg %p168
        $region34: #{inverted_residual.1} parent=11 // pred_check_branch
          %226 = sbr.rel (%p224) target = $region36
        $region35: #{inverted_residual.1} parent=11 // pred_region
          _
        $region36: #{inverted_residual.1} parent=11 // pred_fallthru
          _
      $region12: #{inverted_residual.1} parent=5 // pred_fallthru
        _
      %p227 = scmp.lt.s32.totalorder %s16, 2
      // Predicated region
      $region37: #{inverted_residual.1} parent=5 // pred_check
        %p228 = pneg %p227
      $region38: #{inverted_residual.1} parent=5 // pred_check_branch
        %230 = sbr.rel (%p228) target = $region40
      $region39: #{inverted_residual.1} parent=5 // pred_region
        // Predicated region
        $region41: #{inverted_residual.1} parent=39 // pred_check
          %p231 = pneg %p36
        $region42: #{inverted_residual.1} parent=39 // pred_check_branch
          %233 = sbr.rel (%p231) target = $region44
        $region43: #{inverted_residual.1} parent=39 // pred_region
          %p234 = scmp.lt.s32.totalorder %s16, 1
          %s235 = scalar_select %p234, %s16, 1
          %s236 = smul.addr %s235, 54
          %s237 = smul.addr %s236, 8
          %s238 = scalar_lea.vmem %s0, %s237
        $region44: #{inverted_residual.1} parent=39 // pred_fallthru
          _
      $region40: #{inverted_residual.1} parent=5 // pred_fallthru
        _
      %p239 = scmp.le.s32.totalorder 1, %s16
      %p240 = scmp.lt.s32.totalorder %s16, 3
      %p241 = pnand %p239, %p240
      %p242 = pneg %p241
      // Predicated region
      $region45: #{inverted_residual.1} parent=5 // pred_check
        _
      $region46: #{inverted_residual.1} parent=5 // pred_check_branch
        %244 = sbr.rel (%p241) target = $region48
      $region47: #{inverted_residual.1} parent=5 // pred_region
        %s245 = ssub.s32 %s16, 1
        %p246 = scmp.lt.s32.totalorder %s21, 1
        %s247 = scalar_select %p246, %s21, 1
        %s248 = smul.addr %s247, 54
        %s249 = smul.addr %s248, 8
        %s250 = scalar_lea.vmem %s0, %s249
        %p251 = pneg %p42
        %p252 = pneg %p39
        %p253 = pneg %p63
        %p254 = pneg %p60
        %p255 = pneg %p84
        %p256 = pneg %p81
        %p257 = pneg %p105
        %p258 = pneg %p102
        %p259 = pneg %p126
        %p260 = pneg %p123
        %p261 = pneg %p147
        %p262 = pneg %p144
        %p263 = pneg %p168
        %p264 = pneg %p165
        %p265 = pneg %p194
        %p266 = pneg %p191
        %s267 = sand.u32 %s181, 1
        %s268 = scalar_lea.sflag [#allocation4], %s267
        %s269 = sand.u32 %s181, 1
        %s270 = smul.addr %s269, 256
        %s271 = scalar_lea.vmem [#allocation3], %s270
        %p272 = scmp.lt.s32.totalorder %s21, 1
        %s273 = scalar_select %p272, %s21, 1
        %s274 = smul.addr %s273, 54
        %s275 = smul.addr %s274, 8
        %s276 = scalar_lea.vmem %s0, %s275
        %v278 = vld [vmem:[%s276] sm:$0xff]
        %v279 = vld [vmem:[%s276 + $0x8] sm:$0xff]
        %v280 = vld [vmem:[%s276 + $0x10] sm:$0xff]
        %v281 = vld [vmem:[%s276 + $0x18] sm:$0xff]
        %v282 = vld [vmem:[%s276 + $0x20] sm:$0xff]
        %v283 = vld [vmem:[%s276 + $0x28] sm:$0xff]
        %v284 = vld [vmem:[%s276 + $0x30] sm:$0xff]
        %v285 = vld [vmem:[%s276 + $0x38] sm:$0xff]
        %v286 = vld [vmem:[%s276 + $0x40] sm:$0xff]
        %v287 = vld [vmem:[%s276 + $0x48] sm:$0xff]
        %v288 = vld [vmem:[%s276 + $0x50] sm:$0xff]
        %v289 = vld [vmem:[%s276 + $0x58] sm:$0xff]
        %v290 = vld [vmem:[%s276 + $0x60] sm:$0xff]
        %v291 = vld [vmem:[%s276 + $0x68] sm:$0xff]
        %v292 = vld [vmem:[%s276 + $0x70] sm:$0xff]
        %v293 = vld [vmem:[%s276 + $0x78] sm:$0xff]
        %v294 = vld [vmem:[%s276 + $0x80] sm:$0xff]
        %v295 = vld [vmem:[%s276 + $0x88] sm:$0xff]
        %v296 = vld [vmem:[%s276 + $0x90] sm:$0xff]
        %v297 = vld [vmem:[%s276 + $0x98] sm:$0xff]
        %v298 = vld [vmem:[%s276 + $0xa0] sm:$0xff]
        %v299 = vld [vmem:[%s276 + $0xa8] sm:$0xff]
        %v300 = vld [vmem:[%s276 + $0xb0] sm:$0xff]
        %v301 = vld [vmem:[%s276 + $0xb8] sm:$0xff]
        %v302 = vld [vmem:[%s276 + $0xc0] sm:$0xff]
        %v303 = vld [vmem:[%s276 + $0xc8] sm:$0xff]
        %v304 = vld [vmem:[%s276 + $0xd0] sm:$0xff]
        %v305 = vld [vmem:[%s276 + $0xd8] sm:$0xff]
        %v306 = vld [vmem:[%s276 + $0xe0] sm:$0xff]
        %v307 = vld [vmem:[%s276 + $0xe8] sm:$0xff]
        %v308 = vld [vmem:[%s276 + $0xf0] sm:$0xff]
        %v309 = vld [vmem:[%s276 + $0xf8] sm:$0xff]
        %v310 = vld [vmem:[%s276 + $0x100] sm:$0xff]
        %v311 = vld [vmem:[%s276 + $0x108] sm:$0xff]
        %v312 = vld [vmem:[%s276 + $0x110] sm:$0xff]
        %v313 = vld [vmem:[%s276 + $0x118] sm:$0xff]
        %v314 = vld [vmem:[%s276 + $0x120] sm:$0xff]
        %v315 = vld [vmem:[%s276 + $0x128] sm:$0xff]
        %v316 = vld [vmem:[%s276 + $0x130] sm:$0xff]
        %v317 = vld [vmem:[%s276 + $0x138] sm:$0xff]
        %v318 = vld [vmem:[%s276 + $0x140] sm:$0xff]
        %v319 = vld [vmem:[%s276 + $0x148] sm:$0xff]
        %v320 = vld [vmem:[%s276 + $0x150] sm:$0xff]
        %v321 = vld [vmem:[%s276 + $0x158] sm:$0xff]
        %v322 = vld [vmem:[%s276 + $0x160] sm:$0xff]
        %v323 = vld [vmem:[%s276 + $0x168] sm:$0xff]
        %v324 = vld [vmem:[%s276 + $0x170] sm:$0xff]
        %v325 = vld [vmem:[%s276 + $0x178] sm:$0xff]
        %v326 = vld [vmem:[%s276 + $0x180] sm:$0xff]
        %v327 = vld [vmem:[%s276 + $0x188] sm:$0xff]
        %v328 = vld [vmem:[%s276 + $0x190] sm:$0xff]
        %v329 = vld [vmem:[%s276 + $0x198] sm:$0xff]
        %v330 = vld [vmem:[%s276 + $0x1a0] sm:$0xff]
        %v331 = vld [vmem:[%s276 + $0x1a8] sm:$0xff]
        %v332 = vpack.c.bf16 %v279, %v278
        %v333 = vpack.c.bf16 %v281, %v280
        %v334 = vpack.c.bf16 %v283, %v282
        %v335 = vpack.c.bf16 %v285, %v284
        %v336 = vpack.c.bf16 %v287, %v286
        %v337 = vpack.c.bf16 %v289, %v288
        %v338 = vpack.c.bf16 %v291, %v290
        %v339 = vpack.c.bf16 %v293, %v292
        %v340 = vpack.c.bf16 %v295, %v294
        %v341 = vpack.c.bf16 %v297, %v296
        %v342 = vpack.c.bf16 %v299, %v298
        %v343 = vpack.c.bf16 %v301, %v300
        %v344 = vpack.c.bf16 %v303, %v302
        %v345 = vpack.c.bf16 %v305, %v304
        %v346 = vpack.c.bf16 %v307, %v306
        %v347 = vpack.c.bf16 %v309, %v308
        %v348 = vpack.c.bf16 %v311, %v310
        %v349 = vpack.c.bf16 %v313, %v312
        %v350 = vpack.c.bf16 %v315, %v314
        %v351 = vpack.c.bf16 %v317, %v316
        %v352 = vpack.c.bf16 %v319, %v318
        %v353 = vpack.c.bf16 %v321, %v320
        %v354 = vpack.c.bf16 %v323, %v322
        %v355 = vpack.c.bf16 %v325, %v324
        %v356 = vpack.c.bf16 %v327, %v326
        %v357 = vpack.c.bf16 %v329, %v328
        %v358 = vpack.c.bf16 %v331, %v330
        %v359 = vld [vmem:[%s1] sm:$0xff]
        %v360 = vld [vmem:[%s1 + $0x8] sm:$0xff]
        %v361 = vld [vmem:[%s1 + $0x10] sm:$0xff]
        %v362 = vld [vmem:[%s1 + $0x18] sm:$0xff]
        %v363 = vld [vmem:[%s2] sm:$0x3]
        %v365 = vlaneseq
        %v366 = vshrl.u32 %v365, 7
        %v367 = vsub.s32 0, %v366
        %v368 = vrot.slane %v363, %v367
        %v369 = vlaneseq
        %v370 = vshrl.u32 %v369, 7
        %v371 = vsub.s32 1, %v370
        %v372 = vrot.slane %v363, %v371
        %v379 = vunpack.c.l.b16 %v359
        %v380 = vunpack.c.h.b16 %v359
        %v381 = vunpack.c.l.b16 %v360
        %v382 = vunpack.c.h.b16 %v360
        %v383 = vunpack.c.l.b16 %v361
        %v384 = vunpack.c.h.b16 %v361
        %v385 = vunpack.c.l.b16 %v362
        %v386 = vunpack.c.h.b16 %v362
        %v387 = vpack.c.b16 %v381, %v379
        %v388 = vpack.c.b16 %v382, %v380
        %v389 = vpack.c.b16 %v385, %v383
        %v390 = vpack.c.b16 %v386, %v384
        %vm395 = vcmask 261120
        %v397 = vsel %vm395, %v332, 0
        %v400 = vsel %vm395, %v333, 0
        %v403 = vsel %vm395, %v334, 0
        %v406 = vsel %vm395, %v335, 0
        %v409 = vsel %vm395, %v336, 0
        %v412 = vsel %vm395, %v337, 0
        %v415 = vsel %vm395, %v338, 0
        %v418 = vsel %vm395, %v339, 0
        %v421 = vsel %vm395, %v340, 0
        %v424 = vsel %vm395, %v341, 0
        %v427 = vsel %vm395, %v342, 0
        %v430 = vsel %vm395, %v343, 0
        %v433 = vsel %vm395, %v344, 0
        %v436 = vsel %vm395, %v345, 0
        %v439 = vsel %vm395, %v346, 0
        %v442 = vsel %vm395, %v347, 0
        %v445 = vsel %vm395, %v348, 0
        %v448 = vsel %vm395, %v349, 0
        %v451 = vsel %vm395, %v350, 0
        %v454 = vsel %vm395, %v351, 0
        %v457 = vsel %vm395, %v352, 0
        %v460 = vsel %vm395, %v353, 0
        %v463 = vsel %vm395, %v354, 0
        %v466 = vsel %vm395, %v355, 0
        %v469 = vsel %vm395, %v356, 0
        %v472 = vsel %vm395, %v357, 0
        %v475 = vsel %vm395, %v358, 0
        %477 = vmatprep.subr.bf16.mxu0 %v388
        %478 = vmatpush1.bf16.msra.mxu0 %v387
        %479 = vmatprep.subr.bf16.mxu0 %v390
        %480 = vmatpush1.bf16.msra.mxu0 %v389
        %481 = vmatprep.subr.bf16.mxu0 0
        %482 = vmatpush1.bf16.msra.mxu0 0
        %483 = vmatprep.subr.bf16.mxu0 0
        %484 = vmatpush1.bf16.msra.mxu0 0
        %485 = vmatprep.subr.bf16.mxu0 0
        %486 = vmatpush1.bf16.msra.mxu0 0
        %487 = vmatprep.subr.bf16.mxu0 0
        %488 = vmatpush1.bf16.msra.mxu0 0
        %489 = vmatprep.subr.bf16.mxu0 0
        %490 = vmatpush1.bf16.msra.mxu0 0
        %491 = vmatprep.subr.bf16.mxu0 0
        %492 = vmatpush1.bf16.msra.mxu0 0
        %493 = vmatprep.subr.bf16.mxu0 0
        %494 = vmatpush1.bf16.msra.mxu0 0
        %495 = vmatprep.subr.bf16.mxu0 0
        %496 = vmatpush1.bf16.msra.mxu0 0
        %497 = vmatprep.subr.bf16.mxu0 0
        %498 = vmatpush1.bf16.msra.mxu0 0
        %499 = vmatprep.subr.bf16.mxu0 0
        %500 = vmatpush1.bf16.msra.mxu0 0
        %501 = vmatprep.subr.bf16.mxu0 0
        %502 = vmatpush1.bf16.msra.mxu0 0
        %503 = vmatprep.subr.bf16.mxu0 0
        %504 = vmatpush1.bf16.msra.mxu0 0
        %505 = vmatprep.subr.bf16.mxu0 0
        %506 = vmatpush1.bf16.msra.mxu0 0
        %507 = vmatprep.subr.bf16.mxu0 0
        %508 = vmatpush1.bf16.msra.mxu0 0
        %509 = vmatprep.mubr.bf16.mxu0 0
        %510 = vmatmul.mubr.bf16.gmra.mrb[0].mxu0 %v397
        %v511 = vpop.f32.mrb[0].mxu0
        %v512 = vadd.f32 %v368, %v511
        %v513 = vpop.f32.mrb[0].mxu0
        %v514 = vadd.f32 %v372, %v513
        %v515 = vpop.f32.mrb[0].mxu0
        %v516 = vadd.f32 %v368, %v515
        %v517 = vpop.f32.mrb[0].mxu0
        %v518 = vadd.f32 %v372, %v517
        %519 = vmatprep.mubr.bf16.mxu0 0
        %520 = vmatmul.mubr.bf16.gmra.mrb[0].mxu0 %v400
        %v521 = vpop.f32.mrb[0].mxu0
        %v522 = vadd.f32 %v368, %v521
        %v523 = vpop.f32.mrb[0].mxu0
        %v524 = vadd.f32 %v372, %v523
        %v525 = vpop.f32.mrb[0].mxu0
        %v526 = vadd.f32 %v368, %v525
        %v527 = vpop.f32.mrb[0].mxu0
        %v528 = vadd.f32 %v372, %v527
        %529 = vmatprep.mubr.bf16.mxu0 0
        %530 = vmatmul.mubr.bf16.gmra.mrb[0].mxu0 %v403
        %v531 = vpop.f32.mrb[0].mxu0
        %v532 = vadd.f32 %v368, %v531
        %v533 = vpop.f32.mrb[0].mxu0
        %v534 = vadd.f32 %v372, %v533
        %v535 = vpop.f32.mrb[0].mxu0
        %v536 = vadd.f32 %v368, %v535
        %v537 = vpop.f32.mrb[0].mxu0
        %v538 = vadd.f32 %v372, %v537
        %539 = vmatprep.mubr.bf16.mxu0 0
        %540 = vmatmul.mubr.bf16.gmra.mrb[0].mxu0 %v406
        %v541 = vpop.f32.mrb[0].mxu0
        %v542 = vadd.f32 %v368, %v541
        %v543 = vpop.f32.mrb[0].mxu0
        %v544 = vadd.f32 %v372, %v543
        %v545 = vpop.f32.mrb[0].mxu0
        %v546 = vadd.f32 %v368, %v545
        %v547 = vpop.f32.mrb[0].mxu0
        %v548 = vadd.f32 %v372, %v547
        %549 = vmatprep.mubr.bf16.mxu0 0
        %550 = vmatmul.mubr.bf16.gmra.mrb[0].mxu0 %v409
        %v551 = vpop.f32.mrb[0].mxu0
        %v552 = vadd.f32 %v368, %v551
        %v553 = vpop.f32.mrb[0].mxu0
        %v554 = vadd.f32 %v372, %v553
        %v555 = vpop.f32.mrb[0].mxu0
        %v556 = vadd.f32 %v368, %v555
        %v557 = vpop.f32.mrb[0].mxu0
        %v558 = vadd.f32 %v372, %v557
        %559 = vmatprep.mubr.bf16.mxu0 0
        %560 = vmatmul.mubr.bf16.gmra.mrb[0].mxu0 %v412
        %v561 = vpop.f32.mrb[0].mxu0
        %v562 = vadd.f32 %v368, %v561
        %v563 = vpop.f32.mrb[0].mxu0
        %v564 = vadd.f32 %v372, %v563
        %v565 = vpop.f32.mrb[0].mxu0
        %v566 = vadd.f32 %v368, %v565
        %v567 = vpop.f32.mrb[0].mxu0
        %v568 = vadd.f32 %v372, %v567
        %569 = vmatprep.mubr.bf16.mxu0 0
        %570 = vmatmul.mubr.bf16.gmra.mrb[0].mxu0 %v415
        %v571 = vpop.f32.mrb[0].mxu0
        %v572 = vadd.f32 %v368, %v571
        %v573 = vpop.f32.mrb[0].mxu0
        %v574 = vadd.f32 %v372, %v573
        %v575 = vpop.f32.mrb[0].mxu0
        %v576 = vadd.f32 %v368, %v575
        %v577 = vpop.f32.mrb[0].mxu0
        %v578 = vadd.f32 %v372, %v577
        %579 = vmatprep.mubr.bf16.mxu0 0
        %580 = vmatmul.mubr.bf16.gmra.mrb[0].mxu0 %v418
        %v581 = vpop.f32.mrb[0].mxu0
        %v582 = vadd.f32 %v368, %v581
        %v583 = vpop.f32.mrb[0].mxu0
        %v584 = vadd.f32 %v372, %v583
        %v585 = vpop.f32.mrb[0].mxu0
        %v586 = vadd.f32 %v368, %v585
        %v587 = vpop.f32.mrb[0].mxu0
        %v588 = vadd.f32 %v372, %v587
        %589 = vmatprep.mubr.bf16.mxu0 0
        %590 = vmatmul.mubr.bf16.gmra.mrb[0].mxu0 %v421
        %v591 = vpop.f32.mrb[0].mxu0
        %v592 = vadd.f32 %v368, %v591
        %v593 = vpop.f32.mrb[0].mxu0
        %v594 = vadd.f32 %v372, %v593
        %v595 = vpop.f32.mrb[0].mxu0
        %v596 = vadd.f32 %v368, %v595
        %v597 = vpop.f32.mrb[0].mxu0
        %v598 = vadd.f32 %v372, %v597
        %599 = vmatprep.mubr.bf16.mxu0 0
        %600 = vmatmul.mubr.bf16.gmra.mrb[0].mxu0 %v424
        %v601 = vpop.f32.mrb[0].mxu0
        %v602 = vadd.f32 %v368, %v601
        %v603 = vpop.f32.mrb[0].mxu0
        %v604 = vadd.f32 %v372, %v603
        %v605 = vpop.f32.mrb[0].mxu0
        %v606 = vadd.f32 %v368, %v605
        %v607 = vpop.f32.mrb[0].mxu0
        %v608 = vadd.f32 %v372, %v607
        %609 = vmatprep.mubr.bf16.mxu0 0
        %610 = vmatmul.mubr.bf16.gmra.mrb[0].mxu0 %v427
        %v611 = vpop.f32.mrb[0].mxu0
        %v612 = vadd.f32 %v368, %v611
        %v613 = vpop.f32.mrb[0].mxu0
        %v614 = vadd.f32 %v372, %v613
        %v615 = vpop.f32.mrb[0].mxu0
        %v616 = vadd.f32 %v368, %v615
        %v617 = vpop.f32.mrb[0].mxu0
        %v618 = vadd.f32 %v372, %v617
        %619 = vmatprep.mubr.bf16.mxu0 0
        %620 = vmatmul.mubr.bf16.gmra.mrb[0].mxu0 %v430
        %v621 = vpop.f32.mrb[0].mxu0
        %v622 = vadd.f32 %v368, %v621
        %v623 = vpop.f32.mrb[0].mxu0
        %v624 = vadd.f32 %v372, %v623
        %v625 = vpop.f32.mrb[0].mxu0
        %v626 = vadd.f32 %v368, %v625
        %v627 = vpop.f32.mrb[0].mxu0
        %v628 = vadd.f32 %v372, %v627
        %629 = vmatprep.mubr.bf16.mxu0 0
        %630 = vmatmul.mubr.bf16.gmra.mrb[0].mxu0 %v433
        %v631 = vpop.f32.mrb[0].mxu0
        %v632 = vadd.f32 %v368, %v631
        %v633 = vpop.f32.mrb[0].mxu0
        %v634 = vadd.f32 %v372, %v633
        %v635 = vpop.f32.mrb[0].mxu0
        %v636 = vadd.f32 %v368, %v635
        %v637 = vpop.f32.mrb[0].mxu0
        %v638 = vadd.f32 %v372, %v637
        %639 = vmatprep.mubr.bf16.mxu0 0
        %640 = vmatmul.mubr.bf16.gmra.mrb[0].mxu0 %v436
        %v641 = vpop.f32.mrb[0].mxu0
        %v642 = vadd.f32 %v368, %v641
        %v643 = vpop.f32.mrb[0].mxu0
        %v644 = vadd.f32 %v372, %v643
        %v645 = vpop.f32.mrb[0].mxu0
        %v646 = vadd.f32 %v368, %v645
        %v647 = vpop.f32.mrb[0].mxu0
        %v648 = vadd.f32 %v372, %v647
        %649 = vmatprep.mubr.bf16.mxu0 0
        %650 = vmatmul.mubr.bf16.gmra.mrb[0].mxu0 %v439
        %v651 = vpop.f32.mrb[0].mxu0
        %v652 = vadd.f32 %v368, %v651
        %v653 = vpop.f32.mrb[0].mxu0
        %v654 = vadd.f32 %v372, %v653
        %v655 = vpop.f32.mrb[0].mxu0
        %v656 = vadd.f32 %v368, %v655
        %v657 = vpop.f32.mrb[0].mxu0
        %v658 = vadd.f32 %v372, %v657
        %659 = vmatprep.mubr.bf16.mxu0 0
        %660 = vmatmul.mubr.bf16.gmra.mrb[0].mxu0 %v442
        %v661 = vpop.f32.mrb[0].mxu0
        %v662 = vadd.f32 %v368, %v661
        %v663 = vpop.f32.mrb[0].mxu0
        %v664 = vadd.f32 %v372, %v663
        %v665 = vpop.f32.mrb[0].mxu0
        %v666 = vadd.f32 %v368, %v665
        %v667 = vpop.f32.mrb[0].mxu0
        %v668 = vadd.f32 %v372, %v667
        %669 = vmatprep.mubr.bf16.mxu0 0
        %670 = vmatmul.mubr.bf16.gmra.mrb[0].mxu0 %v445
        %v671 = vpop.f32.mrb[0].mxu0
        %v672 = vadd.f32 %v368, %v671
        %v673 = vpop.f32.mrb[0].mxu0
        %v674 = vadd.f32 %v372, %v673
        %v675 = vpop.f32.mrb[0].mxu0
        %v676 = vadd.f32 %v368, %v675
        %v677 = vpop.f32.mrb[0].mxu0
        %v678 = vadd.f32 %v372, %v677
        %679 = vmatprep.mubr.bf16.mxu0 0
        %680 = vmatmul.mubr.bf16.gmra.mrb[0].mxu0 %v448
        %v681 = vpop.f32.mrb[0].mxu0
        %v682 = vadd.f32 %v368, %v681
        %v683 = vpop.f32.mrb[0].mxu0
        %v684 = vadd.f32 %v372, %v683
        %v685 = vpop.f32.mrb[0].mxu0
        %v686 = vadd.f32 %v368, %v685
        %v687 = vpop.f32.mrb[0].mxu0
        %v688 = vadd.f32 %v372, %v687
        %689 = vmatprep.mubr.bf16.mxu0 0
        %690 = vmatmul.mubr.bf16.gmra.mrb[0].mxu0 %v451
        %v691 = vpop.f32.mrb[0].mxu0
        %v692 = vadd.f32 %v368, %v691
        %v693 = vpop.f32.mrb[0].mxu0
        %v694 = vadd.f32 %v372, %v693
        %v695 = vpop.f32.mrb[0].mxu0
        %v696 = vadd.f32 %v368, %v695
        %v697 = vpop.f32.mrb[0].mxu0
        %v698 = vadd.f32 %v372, %v697
        %699 = vmatprep.mubr.bf16.mxu0 0
        %700 = vmatmul.mubr.bf16.gmra.mrb[0].mxu0 %v454
        %v701 = vpop.f32.mrb[0].mxu0
        %v702 = vadd.f32 %v368, %v701
        %v703 = vpop.f32.mrb[0].mxu0
        %v704 = vadd.f32 %v372, %v703
        %v705 = vpop.f32.mrb[0].mxu0
        %v706 = vadd.f32 %v368, %v705
        %v707 = vpop.f32.mrb[0].mxu0
        %v708 = vadd.f32 %v372, %v707
        %709 = vmatprep.mubr.bf16.mxu0 0
        %710 = vmatmul.mubr.bf16.gmra.mrb[0].mxu0 %v457
        %v711 = vpop.f32.mrb[0].mxu0
        %v712 = vadd.f32 %v368, %v711
        %v713 = vpop.f32.mrb[0].mxu0
        %v714 = vadd.f32 %v372, %v713
        %v715 = vpop.f32.mrb[0].mxu0
        %v716 = vadd.f32 %v368, %v715
        %v717 = vpop.f32.mrb[0].mxu0
        %v718 = vadd.f32 %v372, %v717
        %719 = vmatprep.mubr.bf16.mxu0 0
        %720 = vmatmul.mubr.bf16.gmra.mrb[0].mxu0 %v460
        %v721 = vpop.f32.mrb[0].mxu0
        %v722 = vadd.f32 %v368, %v721
        %v723 = vpop.f32.mrb[0].mxu0
        %v724 = vadd.f32 %v372, %v723
        %v725 = vpop.f32.mrb[0].mxu0
        %v726 = vadd.f32 %v368, %v725
        %v727 = vpop.f32.mrb[0].mxu0
        %v728 = vadd.f32 %v372, %v727
        %729 = vmatprep.mubr.bf16.mxu0 0
        %730 = vmatmul.mubr.bf16.gmra.mrb[0].mxu0 %v463
        %v731 = vpop.f32.mrb[0].mxu0
        %v732 = vadd.f32 %v368, %v731
        %v733 = vpop.f32.mrb[0].mxu0
        %v734 = vadd.f32 %v372, %v733
        %v735 = vpop.f32.mrb[0].mxu0
        %v736 = vadd.f32 %v368, %v735
        %v737 = vpop.f32.mrb[0].mxu0
        %v738 = vadd.f32 %v372, %v737
        %739 = vmatprep.mubr.bf16.mxu0 0
        %740 = vmatmul.mubr.bf16.gmra.mrb[0].mxu0 %v466
        %v741 = vpop.f32.mrb[0].mxu0
        %v742 = vadd.f32 %v368, %v741
        %v743 = vpop.f32.mrb[0].mxu0
        %v744 = vadd.f32 %v372, %v743
        %v745 = vpop.f32.mrb[0].mxu0
        %v746 = vadd.f32 %v368, %v745
        %v747 = vpop.f32.mrb[0].mxu0
        %v748 = vadd.f32 %v372, %v747
        %749 = vmatprep.mubr.bf16.mxu0 0
        %750 = vmatmul.mubr.bf16.gmra.mrb[0].mxu0 %v469
        %v751 = vpop.f32.mrb[0].mxu0
        %v752 = vadd.f32 %v368, %v751
        %v753 = vpop.f32.mrb[0].mxu0
        %v754 = vadd.f32 %v372, %v753
        %v755 = vpop.f32.mrb[0].mxu0
        %v756 = vadd.f32 %v368, %v755
        %v757 = vpop.f32.mrb[0].mxu0
        %v758 = vadd.f32 %v372, %v757
        %759 = vmatprep.mubr.bf16.mxu0 0
        %760 = vmatmul.mubr.bf16.gmra.mrb[0].mxu0 %v472
        %v761 = vpop.f32.mrb[0].mxu0
        %v762 = vadd.f32 %v368, %v761
        %v763 = vpop.f32.mrb[0].mxu0
        %v764 = vadd.f32 %v372, %v763
        %v765 = vpop.f32.mrb[0].mxu0
        %v766 = vadd.f32 %v368, %v765
        %v767 = vpop.f32.mrb[0].mxu0
        %v768 = vadd.f32 %v372, %v767
        %769 = vmatprep.mubr.bf16.mxu0 0
        %770 = vmatmul.mubr.bf16.gmra.mrb[0].mxu0 %v475
        %v771 = vpop.f32.mrb[0].mxu0
        %v772 = vadd.f32 %v368, %v771
        %v773 = vpop.f32.mrb[0].mxu0
        %v774 = vadd.f32 %v372, %v773
        %v775 = vpop.f32.mrb[0].mxu0
        %v776 = vadd.f32 %v368, %v775
        %v777 = vpop.f32.mrb[0].mxu0
        %v778 = vadd.f32 %v372, %v777
        %779 = vdwg.mxu0
        %v780 = vmax.f32 %v512, 0.0
        %v781 = vmax.f32 %v514, 0.0
        %v782 = vmax.f32 %v516, 0.0
        %v783 = vmax.f32 %v518, 0.0
        %v784 = vmax.f32 %v522, 0.0
        %v785 = vmax.f32 %v524, 0.0
        %v786 = vmax.f32 %v526, 0.0
        %v787 = vmax.f32 %v528, 0.0
        %v788 = vmax.f32 %v532, 0.0
        %v789 = vmax.f32 %v534, 0.0
        %v790 = vmax.f32 %v536, 0.0
        %v791 = vmax.f32 %v538, 0.0
        %v792 = vmax.f32 %v542, 0.0
        %v793 = vmax.f32 %v544, 0.0
        %v794 = vmax.f32 %v546, 0.0
        %v795 = vmax.f32 %v548, 0.0
        %v796 = vmax.f32 %v552, 0.0
        %v797 = vmax.f32 %v554, 0.0
        %v798 = vmax.f32 %v556, 0.0
        %v799 = vmax.f32 %v558, 0.0
        %v800 = vmax.f32 %v562, 0.0
        %v801 = vmax.f32 %v564, 0.0
        %v802 = vmax.f32 %v566, 0.0
        %v803 = vmax.f32 %v568, 0.0
        %v804 = vmax.f32 %v572, 0.0
        %v805 = vmax.f32 %v574, 0.0
        %v806 = vmax.f32 %v576, 0.0
        %v807 = vmax.f32 %v578, 0.0
        %v808 = vmax.f32 %v582, 0.0
        %v809 = vmax.f32 %v584, 0.0
        %v810 = vmax.f32 %v586, 0.0
        %v811 = vmax.f32 %v588, 0.0
        %v812 = vmax.f32 %v592, 0.0
        %v813 = vmax.f32 %v594, 0.0
        %v814 = vmax.f32 %v596, 0.0
        %v815 = vmax.f32 %v598, 0.0
        %v816 = vmax.f32 %v602, 0.0
        %v817 = vmax.f32 %v604, 0.0
        %v818 = vmax.f32 %v606, 0.0
        %v819 = vmax.f32 %v608, 0.0
        %v820 = vmax.f32 %v612, 0.0
        %v821 = vmax.f32 %v614, 0.0
        %v822 = vmax.f32 %v616, 0.0
        %v823 = vmax.f32 %v618, 0.0
        %v824 = vmax.f32 %v622, 0.0
        %v825 = vmax.f32 %v624, 0.0
        %v826 = vmax.f32 %v626, 0.0
        %v827 = vmax.f32 %v628, 0.0
        %v828 = vmax.f32 %v632, 0.0
        %v829 = vmax.f32 %v634, 0.0
        %v830 = vmax.f32 %v636, 0.0
        %v831 = vmax.f32 %v638, 0.0
        %v832 = vmax.f32 %v642, 0.0
        %v833 = vmax.f32 %v644, 0.0
        %v834 = vmax.f32 %v646, 0.0
        %v835 = vmax.f32 %v648, 0.0
        %v836 = vmax.f32 %v652, 0.0
        %v837 = vmax.f32 %v654, 0.0
        %v838 = vmax.f32 %v656, 0.0
        %v839 = vmax.f32 %v658, 0.0
        %v840 = vmax.f32 %v662, 0.0
        %v841 = vmax.f32 %v664, 0.0
        %v842 = vmax.f32 %v666, 0.0
        %v843 = vmax.f32 %v668, 0.0
        %v844 = vmax.f32 %v672, 0.0
        %v845 = vmax.f32 %v674, 0.0
        %v846 = vmax.f32 %v676, 0.0
        %v847 = vmax.f32 %v678, 0.0
        %v848 = vmax.f32 %v682, 0.0
        %v849 = vmax.f32 %v684, 0.0
        %v850 = vmax.f32 %v686, 0.0
        %v851 = vmax.f32 %v688, 0.0
        %v852 = vmax.f32 %v692, 0.0
        %v853 = vmax.f32 %v694, 0.0
        %v854 = vmax.f32 %v696, 0.0
        %v855 = vmax.f32 %v698, 0.0
        %v856 = vmax.f32 %v702, 0.0
        %v857 = vmax.f32 %v704, 0.0
        %v858 = vmax.f32 %v706, 0.0
        %v859 = vmax.f32 %v708, 0.0
        %v860 = vmax.f32 %v712, 0.0
        %v861 = vmax.f32 %v714, 0.0
        %v862 = vmax.f32 %v716, 0.0
        %v863 = vmax.f32 %v718, 0.0
        %v864 = vmax.f32 %v722, 0.0
        %v865 = vmax.f32 %v724, 0.0
        %v866 = vmax.f32 %v726, 0.0
        %v867 = vmax.f32 %v728, 0.0
        %v868 = vmax.f32 %v732, 0.0
        %v869 = vmax.f32 %v734, 0.0
        %v870 = vmax.f32 %v736, 0.0
        %v871 = vmax.f32 %v738, 0.0
        %v872 = vmax.f32 %v742, 0.0
        %v873 = vmax.f32 %v744, 0.0
        %v874 = vmax.f32 %v746, 0.0
        %v875 = vmax.f32 %v748, 0.0
        %v876 = vmax.f32 %v752, 0.0
        %v877 = vmax.f32 %v754, 0.0
        %v878 = vmax.f32 %v756, 0.0
        %v879 = vmax.f32 %v758, 0.0
        %v880 = vmax.f32 %v762, 0.0
        %v881 = vmax.f32 %v764, 0.0
        %v882 = vmax.f32 %v766, 0.0
        %v883 = vmax.f32 %v768, 0.0
        %v884 = vmax.f32 %v772, 0.0
        %v885 = vmax.f32 %v774, 0.0
        %v886 = vmax.f32 %v776, 0.0
        %v887 = vmax.f32 %v778, 0.0
        %v888 = vmin.f32 %v780, 6.0
        %v889 = vmin.f32 %v781, 6.0
        %v890 = vmin.f32 %v782, 6.0
        %v891 = vmin.f32 %v783, 6.0
        %v892 = vmin.f32 %v784, 6.0
        %v893 = vmin.f32 %v785, 6.0
        %v894 = vmin.f32 %v786, 6.0
        %v895 = vmin.f32 %v787, 6.0
        %v896 = vmin.f32 %v788, 6.0
        %v897 = vmin.f32 %v789, 6.0
        %v898 = vmin.f32 %v790, 6.0
        %v899 = vmin.f32 %v791, 6.0
        %v900 = vmin.f32 %v792, 6.0
        %v901 = vmin.f32 %v793, 6.0
        %v902 = vmin.f32 %v794, 6.0
        %v903 = vmin.f32 %v795, 6.0
        %v904 = vmin.f32 %v796, 6.0
        %v905 = vmin.f32 %v797, 6.0
        %v906 = vmin.f32 %v798, 6.0
        %v907 = vmin.f32 %v799, 6.0
        %v908 = vmin.f32 %v800, 6.0
        %v909 = vmin.f32 %v801, 6.0
        %v910 = vmin.f32 %v802, 6.0
        %v911 = vmin.f32 %v803, 6.0
        %v912 = vmin.f32 %v804, 6.0
        %v913 = vmin.f32 %v805, 6.0
        %v914 = vmin.f32 %v806, 6.0
        %v915 = vmin.f32 %v807, 6.0
        %v916 = vmin.f32 %v808, 6.0
        %v917 = vmin.f32 %v809, 6.0
        %v918 = vmin.f32 %v810, 6.0
        %v919 = vmin.f32 %v811, 6.0
        %v920 = vmin.f32 %v812, 6.0
        %v921 = vmin.f32 %v813, 6.0
        %v922 = vmin.f32 %v814, 6.0
        %v923 = vmin.f32 %v815, 6.0
        %v924 = vmin.f32 %v816, 6.0
        %v925 = vmin.f32 %v817, 6.0
        %v926 = vmin.f32 %v818, 6.0
        %v927 = vmin.f32 %v819, 6.0
        %v928 = vmin.f32 %v820, 6.0
        %v929 = vmin.f32 %v821, 6.0
        %v930 = vmin.f32 %v822, 6.0
        %v931 = vmin.f32 %v823, 6.0
        %v932 = vmin.f32 %v824, 6.0
        %v933 = vmin.f32 %v825, 6.0
        %v934 = vmin.f32 %v826, 6.0
        %v935 = vmin.f32 %v827, 6.0
        %v936 = vmin.f32 %v828, 6.0
        %v937 = vmin.f32 %v829, 6.0
        %v938 = vmin.f32 %v830, 6.0
        %v939 = vmin.f32 %v831, 6.0
        %v940 = vmin.f32 %v832, 6.0
        %v941 = vmin.f32 %v833, 6.0
        %v942 = vmin.f32 %v834, 6.0
        %v943 = vmin.f32 %v835, 6.0
        %v944 = vmin.f32 %v836, 6.0
        %v945 = vmin.f32 %v837, 6.0
        %v946 = vmin.f32 %v838, 6.0
        %v947 = vmin.f32 %v839, 6.0
        %v948 = vmin.f32 %v840, 6.0
        %v949 = vmin.f32 %v841, 6.0
        %v950 = vmin.f32 %v842, 6.0
        %v951 = vmin.f32 %v843, 6.0
        %v952 = vmin.f32 %v844, 6.0
        %v953 = vmin.f32 %v845, 6.0
        %v954 = vmin.f32 %v846, 6.0
        %v955 = vmin.f32 %v847, 6.0
        %v956 = vmin.f32 %v848, 6.0
        %v957 = vmin.f32 %v849, 6.0
        %v958 = vmin.f32 %v850, 6.0
        %v959 = vmin.f32 %v851, 6.0
        %v960 = vmin.f32 %v852, 6.0
        %v961 = vmin.f32 %v853, 6.0
        %v962 = vmin.f32 %v854, 6.0
        %v963 = vmin.f32 %v855, 6.0
        %v964 = vmin.f32 %v856, 6.0
        %v965 = vmin.f32 %v857, 6.0
        %v966 = vmin.f32 %v858, 6.0
        %v967 = vmin.f32 %v859, 6.0
        %v968 = vmin.f32 %v860, 6.0
        %v969 = vmin.f32 %v861, 6.0
        %v970 = vmin.f32 %v862, 6.0
        %v971 = vmin.f32 %v863, 6.0
        %v972 = vmin.f32 %v864, 6.0
        %v973 = vmin.f32 %v865, 6.0
        %v974 = vmin.f32 %v866, 6.0
        %v975 = vmin.f32 %v867, 6.0
        %v976 = vmin.f32 %v868, 6.0
        %v977 = vmin.f32 %v869, 6.0
        %v978 = vmin.f32 %v870, 6.0
        %v979 = vmin.f32 %v871, 6.0
        %v980 = vmin.f32 %v872, 6.0
        %v981 = vmin.f32 %v873, 6.0
        %v982 = vmin.f32 %v874, 6.0
        %v983 = vmin.f32 %v875, 6.0
        %v984 = vmin.f32 %v876, 6.0
        %v985 = vmin.f32 %v877, 6.0
        %v986 = vmin.f32 %v878, 6.0
        %v987 = vmin.f32 %v879, 6.0
        %v988 = vmin.f32 %v880, 6.0
        %v989 = vmin.f32 %v881, 6.0
        %v990 = vmin.f32 %v882, 6.0
        %v991 = vmin.f32 %v883, 6.0
        %v992 = vmin.f32 %v884, 6.0
        %v993 = vmin.f32 %v885, 6.0
        %v994 = vmin.f32 %v886, 6.0
        %v995 = vmin.f32 %v887, 6.0
        %v996 = vpack.c.bf16 %v890, %v888
        %v997 = vpack.c.bf16 %v891, %v889
        %v998 = vpack.c.bf16 %v892, %v892
        %v999 = vpack.c.bf16 %v893, %v893
        %v1000 = vpack.c.bf16 %v896, %v894
        %v1001 = vpack.c.bf16 %v897, %v895
        %v1002 = vpack.c.bf16 %v898, %v898
        %v1003 = vpack.c.bf16 %v899, %v899
        %v1004 = vpack.c.bf16 %v902, %v900
        %v1005 = vpack.c.bf16 %v903, %v901
        %v1006 = vpack.c.bf16 %v904, %v904
        %v1007 = vpack.c.bf16 %v905, %v905
        %v1008 = vpack.c.bf16 %v908, %v906
        %v1009 = vpack.c.bf16 %v909, %v907
        %v1010 = vpack.c.bf16 %v910, %v910
        %v1011 = vpack.c.bf16 %v911, %v911
        %v1012 = vpack.c.bf16 %v914, %v912
        %v1013 = vpack.c.bf16 %v915, %v913
        %v1014 = vpack.c.bf16 %v916, %v916
        %v1015 = vpack.c.bf16 %v917, %v917
        %v1016 = vpack.c.bf16 %v920, %v918
        %v1017 = vpack.c.bf16 %v921, %v919
        %v1018 = vpack.c.bf16 %v922, %v922
        %v1019 = vpack.c.bf16 %v923, %v923
        %v1020 = vpack.c.bf16 %v926, %v924
        %v1021 = vpack.c.bf16 %v927, %v925
        %v1022 = vpack.c.bf16 %v928, %v928
        %v1023 = vpack.c.bf16 %v929, %v929
        %v1024 = vpack.c.bf16 %v932, %v930
        %v1025 = vpack.c.bf16 %v933, %v931
        %v1026 = vpack.c.bf16 %v934, %v934
        %v1027 = vpack.c.bf16 %v935, %v935
        %v1028 = vpack.c.bf16 %v938, %v936
        %v1029 = vpack.c.bf16 %v939, %v937
        %v1030 = vpack.c.bf16 %v940, %v940
        %v1031 = vpack.c.bf16 %v941, %v941
        %v1032 = vpack.c.bf16 %v944, %v942
        %v1033 = vpack.c.bf16 %v945, %v943
        %v1034 = vpack.c.bf16 %v946, %v946
        %v1035 = vpack.c.bf16 %v947, %v947
        %v1036 = vpack.c.bf16 %v950, %v948
        %v1037 = vpack.c.bf16 %v951, %v949
        %v1038 = vpack.c.bf16 %v952, %v952
        %v1039 = vpack.c.bf16 %v953, %v953
        %v1040 = vpack.c.bf16 %v956, %v954
        %v1041 = vpack.c.bf16 %v957, %v955
        %v1042 = vpack.c.bf16 %v958, %v958
        %v1043 = vpack.c.bf16 %v959, %v959
        %v1044 = vpack.c.bf16 %v962, %v960
        %v1045 = vpack.c.bf16 %v963, %v961
        %v1046 = vpack.c.bf16 %v964, %v964
        %v1047 = vpack.c.bf16 %v965, %v965
        %v1048 = vpack.c.bf16 %v968, %v966
        %v1049 = vpack.c.bf16 %v969, %v967
        %v1050 = vpack.c.bf16 %v970, %v970
        %v1051 = vpack.c.bf16 %v971, %v971
        %v1052 = vpack.c.bf16 %v974, %v972
        %v1053 = vpack.c.bf16 %v975, %v973
        %v1054 = vpack.c.bf16 %v976, %v976
        %v1055 = vpack.c.bf16 %v977, %v977
        %v1056 = vpack.c.bf16 %v980, %v978
        %v1057 = vpack.c.bf16 %v981, %v979
        %v1058 = vpack.c.bf16 %v982, %v982
        %v1059 = vpack.c.bf16 %v983, %v983
        %v1060 = vpack.c.bf16 %v986, %v984
        %v1061 = vpack.c.bf16 %v987, %v985
        %v1062 = vpack.c.bf16 %v988, %v988
        %v1063 = vpack.c.bf16 %v989, %v989
        %v1064 = vpack.c.bf16 %v992, %v990
        %v1065 = vpack.c.bf16 %v993, %v991
        %v1066 = vpack.c.bf16 %v994, %v994
        %v1067 = vpack.c.bf16 %v995, %v995
        %v1140 = vunpack.c.l.b16 %v996
        %v1141 = vunpack.c.l.b16 %v997
        %v1142 = vunpack.c.h.b16 %v996
        %v1143 = vunpack.c.h.b16 %v997
        %v1144 = vunpack.c.l.b16 %v998
        %v1145 = vunpack.c.l.b16 %v999
        %v1146 = vunpack.c.l.b16 %v1000
        %v1147 = vunpack.c.l.b16 %v1001
        %v1148 = vunpack.c.h.b16 %v1000
        %v1149 = vunpack.c.h.b16 %v1001
        %v1150 = vunpack.c.l.b16 %v1002
        %v1151 = vunpack.c.l.b16 %v1003
        %v1152 = vunpack.c.l.b16 %v1004
        %v1153 = vunpack.c.l.b16 %v1005
        %v1154 = vunpack.c.h.b16 %v1004
        %v1155 = vunpack.c.h.b16 %v1005
        %v1156 = vunpack.c.l.b16 %v1006
        %v1157 = vunpack.c.l.b16 %v1007
        %v1158 = vunpack.c.l.b16 %v1008
        %v1159 = vunpack.c.l.b16 %v1009
        %v1160 = vunpack.c.h.b16 %v1008
        %v1161 = vunpack.c.h.b16 %v1009
        %v1162 = vunpack.c.l.b16 %v1010
        %v1163 = vunpack.c.l.b16 %v1011
        %v1164 = vunpack.c.l.b16 %v1012
        %v1165 = vunpack.c.l.b16 %v1013
        %v1166 = vunpack.c.h.b16 %v1012
        %v1167 = vunpack.c.h.b16 %v1013
        %v1168 = vunpack.c.l.b16 %v1014
        %v1169 = vunpack.c.l.b16 %v1015
        %v1170 = vunpack.c.l.b16 %v1016
        %v1171 = vunpack.c.l.b16 %v1017
        %v1172 = vunpack.c.h.b16 %v1016
        %v1173 = vunpack.c.h.b16 %v1017
        %v1174 = vunpack.c.l.b16 %v1018
        %v1175 = vunpack.c.l.b16 %v1019
        %v1176 = vunpack.c.l.b16 %v1020
        %v1177 = vunpack.c.l.b16 %v1021
        %v1178 = vunpack.c.h.b16 %v1020
        %v1179 = vunpack.c.h.b16 %v1021
        %v1180 = vunpack.c.l.b16 %v1022
        %v1181 = vunpack.c.l.b16 %v1023
        %v1182 = vunpack.c.l.b16 %v1024
        %v1183 = vunpack.c.l.b16 %v1025
        %v1184 = vunpack.c.h.b16 %v1024
        %v1185 = vunpack.c.h.b16 %v1025
        %v1186 = vunpack.c.l.b16 %v1026
        %v1187 = vunpack.c.l.b16 %v1027
        %v1188 = vunpack.c.l.b16 %v1028
        %v1189 = vunpack.c.l.b16 %v1029
        %v1190 = vunpack.c.h.b16 %v1028
        %v1191 = vunpack.c.h.b16 %v1029
        %v1192 = vunpack.c.l.b16 %v1030
        %v1193 = vunpack.c.l.b16 %v1031
        %v1194 = vunpack.c.l.b16 %v1032
        %v1195 = vunpack.c.l.b16 %v1033
        %v1196 = vunpack.c.h.b16 %v1032
        %v1197 = vunpack.c.h.b16 %v1033
        %v1198 = vunpack.c.l.b16 %v1034
        %v1199 = vunpack.c.l.b16 %v1035
        %v1200 = vunpack.c.l.b16 %v1036
        %v1201 = vunpack.c.l.b16 %v1037
        %v1202 = vunpack.c.h.b16 %v1036
        %v1203 = vunpack.c.h.b16 %v1037
        %v1204 = vunpack.c.l.b16 %v1038
        %v1205 = vunpack.c.l.b16 %v1039
        %v1206 = vunpack.c.l.b16 %v1040
        %v1207 = vunpack.c.l.b16 %v1041
        %v1208 = vunpack.c.h.b16 %v1040
        %v1209 = vunpack.c.h.b16 %v1041
        %v1210 = vunpack.c.l.b16 %v1042
        %v1211 = vunpack.c.l.b16 %v1043
        %v1212 = vunpack.c.l.b16 %v1044
        %v1213 = vunpack.c.l.b16 %v1045
        %v1214 = vunpack.c.h.b16 %v1044
        %v1215 = vunpack.c.h.b16 %v1045
        %v1216 = vunpack.c.l.b16 %v1046
        %v1217 = vunpack.c.l.b16 %v1047
        %v1218 = vunpack.c.l.b16 %v1048
        %v1219 = vunpack.c.l.b16 %v1049
        %v1220 = vunpack.c.h.b16 %v1048
        %v1221 = vunpack.c.h.b16 %v1049
        %v1222 = vunpack.c.l.b16 %v1050
        %v1223 = vunpack.c.l.b16 %v1051
        %v1224 = vunpack.c.l.b16 %v1052
        %v1225 = vunpack.c.l.b16 %v1053
        %v1226 = vunpack.c.h.b16 %v1052
        %v1227 = vunpack.c.h.b16 %v1053
        %v1228 = vunpack.c.l.b16 %v1054
        %v1229 = vunpack.c.l.b16 %v1055
        %v1230 = vunpack.c.l.b16 %v1056
        %v1231 = vunpack.c.l.b16 %v1057
        %v1232 = vunpack.c.h.b16 %v1056
        %v1233 = vunpack.c.h.b16 %v1057
        %v1234 = vunpack.c.l.b16 %v1058
        %v1235 = vunpack.c.l.b16 %v1059
        %v1236 = vunpack.c.l.b16 %v1060
        %v1237 = vunpack.c.l.b16 %v1061
        %v1238 = vunpack.c.h.b16 %v1060
        %v1239 = vunpack.c.h.b16 %v1061
        %v1240 = vunpack.c.l.b16 %v1062
        %v1241 = vunpack.c.l.b16 %v1063
        %v1242 = vunpack.c.l.b16 %v1064
        %v1243 = vunpack.c.l.b16 %v1065
        %v1244 = vunpack.c.h.b16 %v1064
        %v1245 = vunpack.c.h.b16 %v1065
        %v1246 = vunpack.c.l.b16 %v1066
        %v1247 = vunpack.c.l.b16 %v1067
        %v1248 = vpack.c.b16 %v1141, %v1140
        %v1249 = vpack.c.b16 %v1143, %v1142
        %v1250 = vpack.c.b16 %v1145, %v1144
        %v1251 = vpack.c.b16 %v1147, %v1146
        %v1252 = vpack.c.b16 %v1149, %v1148
        %v1253 = vpack.c.b16 %v1151, %v1150
        %v1254 = vpack.c.b16 %v1153, %v1152
        %v1255 = vpack.c.b16 %v1155, %v1154
        %v1256 = vpack.c.b16 %v1157, %v1156
        %v1257 = vpack.c.b16 %v1159, %v1158
        %v1258 = vpack.c.b16 %v1161, %v1160
        %v1259 = vpack.c.b16 %v1163, %v1162
        %v1260 = vpack.c.b16 %v1165, %v1164
        %v1261 = vpack.c.b16 %v1167, %v1166
        %v1262 = vpack.c.b16 %v1169, %v1168
        %v1263 = vpack.c.b16 %v1171, %v1170
        %v1264 = vpack.c.b16 %v1173, %v1172
        %v1265 = vpack.c.b16 %v1175, %v1174
        %v1266 = vpack.c.b16 %v1177, %v1176
        %v1267 = vpack.c.b16 %v1179, %v1178
        %v1268 = vpack.c.b16 %v1181, %v1180
        %v1269 = vpack.c.b16 %v1183, %v1182
        %v1270 = vpack.c.b16 %v1185, %v1184
        %v1271 = vpack.c.b16 %v1187, %v1186
        %v1272 = vpack.c.b16 %v1189, %v1188
        %v1273 = vpack.c.b16 %v1191, %v1190
        %v1274 = vpack.c.b16 %v1193, %v1192
        %v1275 = vpack.c.b16 %v1195, %v1194
        %v1276 = vpack.c.b16 %v1197, %v1196
        %v1277 = vpack.c.b16 %v1199, %v1198
        %v1278 = vpack.c.b16 %v1201, %v1200
        %v1279 = vpack.c.b16 %v1203, %v1202
        %v1280 = vpack.c.b16 %v1205, %v1204
        %v1281 = vpack.c.b16 %v1207, %v1206
        %v1282 = vpack.c.b16 %v1209, %v1208
        %v1283 = vpack.c.b16 %v1211, %v1210
        %v1284 = vpack.c.b16 %v1213, %v1212
        %v1285 = vpack.c.b16 %v1215, %v1214
        %v1286 = vpack.c.b16 %v1217, %v1216
        %v1287 = vpack.c.b16 %v1219, %v1218
        %v1288 = vpack.c.b16 %v1221, %v1220
        %v1289 = vpack.c.b16 %v1223, %v1222
        %v1290 = vpack.c.b16 %v1225, %v1224
        %v1291 = vpack.c.b16 %v1227, %v1226
        %v1292 = vpack.c.b16 %v1229, %v1228
        %v1293 = vpack.c.b16 %v1231, %v1230
        %v1294 = vpack.c.b16 %v1233, %v1232
        %v1295 = vpack.c.b16 %v1235, %v1234
        %v1296 = vpack.c.b16 %v1237, %v1236
        %v1297 = vpack.c.b16 %v1239, %v1238
        %v1298 = vpack.c.b16 %v1241, %v1240
        %v1299 = vpack.c.b16 %v1243, %v1242
        %v1300 = vpack.c.b16 %v1245, %v1244
        %v1301 = vpack.c.b16 %v1247, %v1246
        %vm1356 = vcmask 1043456
        %vm1357 = vcmask 523268
        %vm1358 = vmor %vm1357, %vm1356
        %1359 = vst.msk [vmem:[#allocation2] sm:$0xff] %vm1358, %v1248
        %1360 = vst.msk [vmem:[#allocation2 + $0x8] sm:$0xff] %vm1358, %v1249
        %1361 = vst.msk [vmem:[#allocation2 + $0x10] sm:$0xff] %vm1358, %v1250
        %1362 = vst.msk [vmem:[#allocation2 + $0x18] sm:$0xff] %vm1358, %v1251
        %1363 = vst.msk [vmem:[#allocation2 + $0x20] sm:$0xff] %vm1358, %v1252
        %1364 = vst.msk [vmem:[#allocation2 + $0x28] sm:$0xff] %vm1358, %v1253
        %1365 = vst.msk [vmem:[#allocation2 + $0x30] sm:$0xff] %vm1358, %v1254
        %1366 = vst.msk [vmem:[#allocation2 + $0x38] sm:$0xff] %vm1358, %v1255
        %1367 = vst.msk [vmem:[#allocation2 + $0x40] sm:$0xff] %vm1358, %v1256
        %1368 = vst.msk [vmem:[#allocation2 + $0x48] sm:$0xff] %vm1358, %v1257
        %1369 = vst.msk [vmem:[#allocation2 + $0x50] sm:$0xff] %vm1358, %v1258
        %1370 = vst.msk [vmem:[#allocation2 + $0x58] sm:$0xff] %vm1358, %v1259
        %1371 = vst.msk [vmem:[#allocation2 + $0x60] sm:$0xff] %vm1358, %v1260
        %1372 = vst.msk [vmem:[#allocation2 + $0x68] sm:$0xff] %vm1358, %v1261
        %1373 = vst.msk [vmem:[#allocation2 + $0x70] sm:$0xff] %vm1358, %v1262
        %1374 = vst.msk [vmem:[#allocation2 + $0x78] sm:$0xff] %vm1358, %v1263
        %1375 = vst.msk [vmem:[#allocation2 + $0x80] sm:$0xff] %vm1358, %v1264
        %1376 = vst.msk [vmem:[#allocation2 + $0x88] sm:$0xff] %vm1358, %v1265
        %1377 = vst.msk [vmem:[#allocation2 + $0x90] sm:$0xff] %vm1358, %v1266
        %1378 = vst.msk [vmem:[#allocation2 + $0x98] sm:$0xff] %vm1358, %v1267
        %1379 = vst.msk [vmem:[#allocation2 + $0xa0] sm:$0xff] %vm1358, %v1268
        %1380 = vst.msk [vmem:[#allocation2 + $0xa8] sm:$0xff] %vm1358, %v1269
        %1381 = vst.msk [vmem:[#allocation2 + $0xb0] sm:$0xff] %vm1358, %v1270
        %1382 = vst.msk [vmem:[#allocation2 + $0xb8] sm:$0xff] %vm1358, %v1271
        %1383 = vst.msk [vmem:[#allocation2 + $0xc0] sm:$0xff] %vm1358, %v1272
        %1384 = vst.msk [vmem:[#allocation2 + $0xc8] sm:$0xff] %vm1358, %v1273
        %1385 = vst.msk [vmem:[#allocation2 + $0xd0] sm:$0xff] %vm1358, %v1274
        %1386 = vst.msk [vmem:[#allocation2 + $0xd8] sm:$0xff] %vm1358, %v1275
        %1387 = vst.msk [vmem:[#allocation2 + $0xe0] sm:$0xff] %vm1358, %v1276
        %1388 = vst.msk [vmem:[#allocation2 + $0xe8] sm:$0xff] %vm1358, %v1277
        %1389 = vst.msk [vmem:[#allocation2 + $0xf0] sm:$0xff] %vm1358, %v1278
        %1390 = vst.msk [vmem:[#allocation2 + $0xf8] sm:$0xff] %vm1358, %v1279
        %1391 = vst.msk [vmem:[#allocation2 + $0x100] sm:$0xff] %vm1358, %v1280
        %1392 = vst.msk [vmem:[#allocation2 + $0x108] sm:$0xff] %vm1358, %v1281
        %1393 = vst.msk [vmem:[#allocation2 + $0x110] sm:$0xff] %vm1358, %v1282
        %1394 = vst.msk [vmem:[#allocation2 + $0x118] sm:$0xff] %vm1358, %v1283
        %1395 = vst.msk [vmem:[#allocation2 + $0x120] sm:$0xff] %vm1358, %v1284
        %1396 = vst.msk [vmem:[#allocation2 + $0x128] sm:$0xff] %vm1358, %v1285
        %1397 = vst.msk [vmem:[#allocation2 + $0x130] sm:$0xff] %vm1358, %v1286
        %1398 = vst.msk [vmem:[#allocation2 + $0x138] sm:$0xff] %vm1358, %v1287
        %1399 = vst.msk [vmem:[#allocation2 + $0x140] sm:$0xff] %vm1358, %v1288
        %1400 = vst.msk [vmem:[#allocation2 + $0x148] sm:$0xff] %vm1358, %v1289
        %1401 = vst.msk [vmem:[#allocation2 + $0x150] sm:$0xff] %vm1358, %v1290
        %1402 = vst.msk [vmem:[#allocation2 + $0x158] sm:$0xff] %vm1358, %v1291
        %1403 = vst.msk [vmem:[#allocation2 + $0x160] sm:$0xff] %vm1358, %v1292
        %1404 = vst.msk [vmem:[#allocation2 + $0x168] sm:$0xff] %vm1358, %v1293
        %1405 = vst.msk [vmem:[#allocation2 + $0x170] sm:$0xff] %vm1358, %v1294
        %1406 = vst.msk [vmem:[#allocation2 + $0x178] sm:$0xff] %vm1358, %v1295
        %1407 = vst.msk [vmem:[#allocation2 + $0x180] sm:$0xff] %vm1358, %v1296
        %1408 = vst.msk [vmem:[#allocation2 + $0x188] sm:$0xff] %vm1358, %v1297
        %1409 = vst.msk [vmem:[#allocation2 + $0x190] sm:$0xff] %vm1358, %v1298
        %1410 = vst.msk [vmem:[#allocation2 + $0x198] sm:$0xff] %vm1358, %v1299
        %1411 = vst.msk [vmem:[#allocation2 + $0x1a0] sm:$0xff] %vm1358, %v1300
        %1412 = vst.msk [vmem:[#allocation2 + $0x1a8] sm:$0xff] %vm1358, %v1301
        %vm1413 = vcmask 1040384
        %vm1414 = vsmask.f32 256
        %vm1415 = vmand %vm1413, %vm1414
        %vm1416 = vcmask 520196
        %vm1417 = vsmask.f32 4352
        %vm1418 = vmand %vm1416, %vm1417
        %vm1419 = vmor %vm1418, %vm1415
        %v1420 = vld [vmem:[#allocation2] sm:$0x11]
        %v1421 = vsel %vm1419, 0, %v1420
        %1422 = vst [vmem:[#allocation2] sm:$0x11] %v1421
        %v1423 = vld [vmem:[#allocation2 + $0x18] sm:$0x11]
        %v1424 = vsel %vm1419, 0, %v1423
        %1425 = vst [vmem:[#allocation2 + $0x18] sm:$0x11] %v1424
        %v1426 = vld [vmem:[#allocation2 + $0x30] sm:$0x11]
        %v1427 = vsel %vm1419, 0, %v1426
        %1428 = vst [vmem:[#allocation2 + $0x30] sm:$0x11] %v1427
        %v1429 = vld [vmem:[#allocation2 + $0x48] sm:$0x11]
        %v1430 = vsel %vm1419, 0, %v1429
        %1431 = vst [vmem:[#allocation2 + $0x48] sm:$0x11] %v1430
        %v1432 = vld [vmem:[#allocation2 + $0x60] sm:$0x11]
        %v1433 = vsel %vm1419, 0, %v1432
        %1434 = vst [vmem:[#allocation2 + $0x60] sm:$0x11] %v1433
        %v1435 = vld [vmem:[#allocation2 + $0x78] sm:$0x11]
        %v1436 = vsel %vm1419, 0, %v1435
        %1437 = vst [vmem:[#allocation2 + $0x78] sm:$0x11] %v1436
        %v1438 = vld [vmem:[#allocation2 + $0x90] sm:$0x11]
        %v1439 = vsel %vm1419, 0, %v1438
        %1440 = vst [vmem:[#allocation2 + $0x90] sm:$0x11] %v1439
        %v1441 = vld [vmem:[#allocation2 + $0xa8] sm:$0x11]
        %v1442 = vsel %vm1419, 0, %v1441
        %1443 = vst [vmem:[#allocation2 + $0xa8] sm:$0x11] %v1442
        %v1444 = vld [vmem:[#allocation2 + $0xc0] sm:$0x11]
        %v1445 = vsel %vm1419, 0, %v1444
        %1446 = vst [vmem:[#allocation2 + $0xc0] sm:$0x11] %v1445
        %v1447 = vld [vmem:[#allocation2 + $0xd8] sm:$0x11]
        %v1448 = vsel %vm1419, 0, %v1447
        %1449 = vst [vmem:[#allocation2 + $0xd8] sm:$0x11] %v1448
        %v1450 = vld [vmem:[#allocation2 + $0xf0] sm:$0x11]
        %v1451 = vsel %vm1419, 0, %v1450
        %1452 = vst [vmem:[#allocation2 + $0xf0] sm:$0x11] %v1451
        %v1453 = vld [vmem:[#allocation2 + $0x108] sm:$0x11]
        %v1454 = vsel %vm1419, 0, %v1453
        %1455 = vst [vmem:[#allocation2 + $0x108] sm:$0x11] %v1454
        %v1456 = vld [vmem:[#allocation2 + $0x120] sm:$0x11]
        %v1457 = vsel %vm1419, 0, %v1456
        %1458 = vst [vmem:[#allocation2 + $0x120] sm:$0x11] %v1457
        %v1459 = vld [vmem:[#allocation2 + $0x138] sm:$0x11]
        %v1460 = vsel %vm1419, 0, %v1459
        %1461 = vst [vmem:[#allocation2 + $0x138] sm:$0x11] %v1460
        %v1462 = vld [vmem:[#allocation2 + $0x150] sm:$0x11]
        %v1463 = vsel %vm1419, 0, %v1462
        %1464 = vst [vmem:[#allocation2 + $0x150] sm:$0x11] %v1463
        %v1465 = vld [vmem:[#allocation2 + $0x168] sm:$0x11]
        %v1466 = vsel %vm1419, 0, %v1465
        %1467 = vst [vmem:[#allocation2 + $0x168] sm:$0x11] %v1466
        %v1468 = vld [vmem:[#allocation2 + $0x180] sm:$0x11]
        %v1469 = vsel %vm1419, 0, %v1468
        %1470 = vst [vmem:[#allocation2 + $0x180] sm:$0x11] %v1469
        %v1471 = vld [vmem:[#allocation2 + $0x198] sm:$0x11]
        %v1472 = vsel %vm1419, 0, %v1471
        %1473 = vst [vmem:[#allocation2 + $0x198] sm:$0x11] %v1472
        %vm1474 = vcmask 1043456
        %vm1475 = vsmask.f32 7938
        %vm1476 = vmand %vm1474, %vm1475
        %vm1477 = vcmask 523268
        %vm1478 = vsmask.f32 7954
        %vm1479 = vmand %vm1477, %vm1478
        %vm1480 = vmor %vm1479, %vm1476
        %v1481 = vld [vmem:[#allocation2 + $0x10] sm:$0xff]
        %v1482 = vsel %vm1480, 0, %v1481
        %1483 = vst [vmem:[#allocation2 + $0x10] sm:$0xff] %v1482
        %v1484 = vld [vmem:[#allocation2 + $0x28] sm:$0xff]
        %v1485 = vsel %vm1480, 0, %v1484
        %1486 = vst [vmem:[#allocation2 + $0x28] sm:$0xff] %v1485
        %v1487 = vld [vmem:[#allocation2 + $0x40] sm:$0xff]
        %v1488 = vsel %vm1480, 0, %v1487
        %1489 = vst [vmem:[#allocation2 + $0x40] sm:$0xff] %v1488
        %v1490 = vld [vmem:[#allocation2 + $0x58] sm:$0xff]
        %v1491 = vsel %vm1480, 0, %v1490
        %1492 = vst [vmem:[#allocation2 + $0x58] sm:$0xff] %v1491
        %v1493 = vld [vmem:[#allocation2 + $0x70] sm:$0xff]
        %v1494 = vsel %vm1480, 0, %v1493
        %1495 = vst [vmem:[#allocation2 + $0x70] sm:$0xff] %v1494
        %v1496 = vld [vmem:[#allocation2 + $0x88] sm:$0xff]
        %v1497 = vsel %vm1480, 0, %v1496
        %1498 = vst [vmem:[#allocation2 + $0x88] sm:$0xff] %v1497
        %v1499 = vld [vmem:[#allocation2 + $0xa0] sm:$0xff]
        %v1500 = vsel %vm1480, 0, %v1499
        %1501 = vst [vmem:[#allocation2 + $0xa0] sm:$0xff] %v1500
        %v1502 = vld [vmem:[#allocation2 + $0xb8] sm:$0xff]
        %v1503 = vsel %vm1480, 0, %v1502
        %1504 = vst [vmem:[#allocation2 + $0xb8] sm:$0xff] %v1503
        %v1505 = vld [vmem:[#allocation2 + $0xd0] sm:$0xff]
        %v1506 = vsel %vm1480, 0, %v1505
        %1507 = vst [vmem:[#allocation2 + $0xd0] sm:$0xff] %v1506
        %v1508 = vld [vmem:[#allocation2 + $0xe8] sm:$0xff]
        %v1509 = vsel %vm1480, 0, %v1508
        %1510 = vst [vmem:[#allocation2 + $0xe8] sm:$0xff] %v1509
        %v1511 = vld [vmem:[#allocation2 + $0x100] sm:$0xff]
        %v1512 = vsel %vm1480, 0, %v1511
        %1513 = vst [vmem:[#allocation2 + $0x100] sm:$0xff] %v1512
        %v1514 = vld [vmem:[#allocation2 + $0x118] sm:$0xff]
        %v1515 = vsel %vm1480, 0, %v1514
        %1516 = vst [vmem:[#allocation2 + $0x118] sm:$0xff] %v1515
        %v1517 = vld [vmem:[#allocation2 + $0x130] sm:$0xff]
        %v1518 = vsel %vm1480, 0, %v1517
        %1519 = vst [vmem:[#allocation2 + $0x130] sm:$0xff] %v1518
        %v1520 = vld [vmem:[#allocation2 + $0x148] sm:$0xff]
        %v1521 = vsel %vm1480, 0, %v1520
        %1522 = vst [vmem:[#allocation2 + $0x148] sm:$0xff] %v1521
        %v1523 = vld [vmem:[#allocation2 + $0x160] sm:$0xff]
        %v1524 = vsel %vm1480, 0, %v1523
        %1525 = vst [vmem:[#allocation2 + $0x160] sm:$0xff] %v1524
        %v1526 = vld [vmem:[#allocation2 + $0x178] sm:$0xff]
        %v1527 = vsel %vm1480, 0, %v1526
        %1528 = vst [vmem:[#allocation2 + $0x178] sm:$0xff] %v1527
        %v1529 = vld [vmem:[#allocation2 + $0x190] sm:$0xff]
        %v1530 = vsel %vm1480, 0, %v1529
        %1531 = vst [vmem:[#allocation2 + $0x190] sm:$0xff] %v1530
        %v1532 = vld [vmem:[#allocation2 + $0x1a8] sm:$0xff]
        %v1533 = vsel %vm1480, 0, %v1532
        %1534 = vst [vmem:[#allocation2 + $0x1a8] sm:$0xff] %v1533
        %1535 = vst.msk [vmem:[#allocation2] sm:$0xff] %vm1358, 0
        %1536 = vst.msk [vmem:[#allocation2 + $0x8] sm:$0xff] %vm1358, 0
        %1537 = vst.msk [vmem:[#allocation2 + $0x10] sm:$0xff] %vm1358, 0
        %s1538 = scalar_lea.vmem [#allocation2], 408
        %1539 = vst.msk [vmem:[%s1538] sm:$0xff] %vm1358, 0
        %1540 = vst.msk [vmem:[%s1538 + $0x8] sm:$0xff] %vm1358, 0
        %1541 = vst.msk [vmem:[%s1538 + $0x10] sm:$0xff] %vm1358, 0
        %v1542 = vld [vmem:[#allocation2] sm:$0xff]
        %v1543 = vld [vmem:[#allocation2 + $0x8] sm:$0xff]
        %v1544 = vld [vmem:[#allocation2 + $0x18] sm:$0xff]
        %v1545 = vld [vmem:[#allocation2 + $0x20] sm:$0xff]
        %v1546 = vld [vmem:[#allocation2 + $0x30] sm:$0xff]
        %v1547 = vld [vmem:[#allocation2 + $0x38] sm:$0xff]
        %v1548 = vld [vmem:[#allocation2 + $0x48] sm:$0xff]
        %v1549 = vld [vmem:[#allocation2 + $0x50] sm:$0xff]
        %v1550 = vld [vmem:[#allocation2 + $0x60] sm:$0xff]
        %v1551 = vld [vmem:[#allocation2 + $0x68] sm:$0xff]
        %v1552 = vld [vmem:[#allocation2 + $0x78] sm:$0xff]
        %v1553 = vld [vmem:[#allocation2 + $0x80] sm:$0xff]
        %v1554 = vld [vmem:[#allocation2 + $0x90] sm:$0xff]
        %v1555 = vld [vmem:[#allocation2 + $0x98] sm:$0xff]
        %v1556 = vld [vmem:[#allocation2 + $0xa8] sm:$0xff]
        %v1557 = vld [vmem:[#allocation2 + $0xb0] sm:$0xff]
        %v1558 = vld [vmem:[#allocation2 + $0xc0] sm:$0xff]
        %v1559 = vld [vmem:[#allocation2 + $0xc8] sm:$0xff]
        %v1560 = vld [vmem:[#allocation2 + $0xd8] sm:$0xff]
        %v1561 = vld [vmem:[#allocation2 + $0xe0] sm:$0xff]
        %v1562 = vld [vmem:[#allocation2 + $0xf0] sm:$0xff]
        %v1563 = vld [vmem:[#allocation2 + $0xf8] sm:$0xff]
        %v1564 = vld [vmem:[#allocation2 + $0x108] sm:$0xff]
        %v1565 = vld [vmem:[#allocation2 + $0x110] sm:$0xff]
        %v1566 = vld [vmem:[#allocation2 + $0x120] sm:$0xff]
        %v1567 = vld [vmem:[#allocation2 + $0x128] sm:$0xff]
        %v1568 = vld [vmem:[#allocation2 + $0x138] sm:$0xff]
        %v1569 = vld [vmem:[#allocation2 + $0x140] sm:$0xff]
        %v1570 = vld [vmem:[#allocation2 + $0x150] sm:$0xff]
        %v1571 = vld [vmem:[#allocation2 + $0x158] sm:$0xff]
        %v1572 = vld [vmem:[#allocation2 + $0x168] sm:$0xff]
        %v1573 = vld [vmem:[#allocation2 + $0x170] sm:$0xff]
        %v1574 = vunpack.c.l.bf16 %v1542
        %v1575 = vunpack.c.h.bf16 %v1542
        %v1576 = vunpack.c.l.bf16 %v1543
        %v1577 = vunpack.c.h.bf16 %v1543
        %v1578 = vunpack.c.l.bf16 %v1544
        %v1579 = vunpack.c.h.bf16 %v1544
        %v1580 = vunpack.c.l.bf16 %v1545
        %v1581 = vunpack.c.h.bf16 %v1545
        %v1582 = vunpack.c.l.bf16 %v1546
        %v1583 = vunpack.c.h.bf16 %v1546
        %v1584 = vunpack.c.l.bf16 %v1547
        %v1585 = vunpack.c.h.bf16 %v1547
        %v1586 = vunpack.c.l.bf16 %v1548
        %v1587 = vunpack.c.h.bf16 %v1548
        %v1588 = vunpack.c.l.bf16 %v1549
        %v1589 = vunpack.c.h.bf16 %v1549
        %v1590 = vunpack.c.l.bf16 %v1550
        %v1591 = vunpack.c.h.bf16 %v1550
        %v1592 = vunpack.c.l.bf16 %v1551
        %v1593 = vunpack.c.h.bf16 %v1551
        %v1594 = vunpack.c.l.bf16 %v1552
        %v1595 = vunpack.c.h.bf16 %v1552
        %v1596 = vunpack.c.l.bf16 %v1553
        %v1597 = vunpack.c.h.bf16 %v1553
        %v1598 = vunpack.c.l.bf16 %v1554
        %v1599 = vunpack.c.h.bf16 %v1554
        %v1600 = vunpack.c.l.bf16 %v1555
        %v1601 = vunpack.c.h.bf16 %v1555
        %v1602 = vunpack.c.l.bf16 %v1556
        %v1603 = vunpack.c.h.bf16 %v1556
        %v1604 = vunpack.c.l.bf16 %v1557
        %v1605 = vunpack.c.h.bf16 %v1557
        %v1606 = vunpack.c.l.bf16 %v1558
        %v1607 = vunpack.c.h.bf16 %v1558
        %v1608 = vunpack.c.l.bf16 %v1559
        %v1609 = vunpack.c.h.bf16 %v1559
        %v1610 = vunpack.c.l.bf16 %v1560
        %v1611 = vunpack.c.h.bf16 %v1560
        %v1612 = vunpack.c.l.bf16 %v1561
        %v1613 = vunpack.c.h.bf16 %v1561
        %v1614 = vunpack.c.l.bf16 %v1562
        %v1615 = vunpack.c.h.bf16 %v1562
        %v1616 = vunpack.c.l.bf16 %v1563
        %v1617 = vunpack.c.h.bf16 %v1563
        %v1618 = vunpack.c.l.bf16 %v1564
        %v1619 = vunpack.c.h.bf16 %v1564
        %v1620 = vunpack.c.l.bf16 %v1565
        %v1621 = vunpack.c.h.bf16 %v1565
        %v1622 = vunpack.c.l.bf16 %v1566
        %v1623 = vunpack.c.h.bf16 %v1566
        %v1624 = vunpack.c.l.bf16 %v1567
        %v1625 = vunpack.c.h.bf16 %v1567
        %v1626 = vunpack.c.l.bf16 %v1568
        %v1627 = vunpack.c.h.bf16 %v1568
        %v1628 = vunpack.c.l.bf16 %v1569
        %v1629 = vunpack.c.h.bf16 %v1569
        %v1630 = vunpack.c.l.bf16 %v1570
        %v1631 = vunpack.c.h.bf16 %v1570
        %v1632 = vunpack.c.l.bf16 %v1571
        %v1633 = vunpack.c.h.bf16 %v1571
        %v1634 = vunpack.c.l.bf16 %v1572
        %v1635 = vunpack.c.h.bf16 %v1572
        %v1636 = vunpack.c.l.bf16 %v1573
        %v1637 = vunpack.c.h.bf16 %v1573
        %v1638 = vld [vmem:[%s3] sm:$0x3]
        %v1640 = vlaneseq
        %v1641 = vshrl.u32 %v1640, 7
        %v1642 = vsub.s32 0, %v1641
        %v1643 = vrot.slane %v1638, %v1642
        %v1644 = vlaneseq
        %v1645 = vshrl.u32 %v1644, 7
        %v1646 = vsub.s32 1, %v1645
        %v1647 = vrot.slane %v1638, %v1646
        %v1650 = vmul.f32 %v1574, %v1643
        %v1651 = vmul.f32 %v1575, %v1647
        %v1652 = vmul.f32 %v1576, %v1643
        %v1653 = vmul.f32 %v1577, %v1647
        %v1654 = vmul.f32 %v1578, %v1643
        %v1655 = vmul.f32 %v1579, %v1647
        %v1656 = vmul.f32 %v1580, %v1643
        %v1657 = vmul.f32 %v1581, %v1647
        %v1658 = vmul.f32 %v1582, %v1643
        %v1659 = vmul.f32 %v1583, %v1647
        %v1660 = vmul.f32 %v1584, %v1643
        %v1661 = vmul.f32 %v1585, %v1647
        %v1662 = vmul.f32 %v1586, %v1643
        %v1663 = vmul.f32 %v1587, %v1647
        %v1664 = vmul.f32 %v1588, %v1643
        %v1665 = vmul.f32 %v1589, %v1647
        %v1666 = vmul.f32 %v1590, %v1643
        %v1667 = vmul.f32 %v1591, %v1647
        %v1668 = vmul.f32 %v1592, %v1643
        %v1669 = vmul.f32 %v1593, %v1647
        %v1670 = vmul.f32 %v1594, %v1643
        %v1671 = vmul.f32 %v1595, %v1647
        %v1672 = vmul.f32 %v1596, %v1643
        %v1673 = vmul.f32 %v1597, %v1647
        %v1674 = vmul.f32 %v1598, %v1643
        %v1675 = vmul.f32 %v1599, %v1647
        %v1676 = vmul.f32 %v1600, %v1643
        %v1677 = vmul.f32 %v1601, %v1647
        %v1678 = vmul.f32 %v1602, %v1643
        %v1679 = vmul.f32 %v1603, %v1647
        %v1680 = vmul.f32 %v1604, %v1643
        %v1681 = vmul.f32 %v1605, %v1647
        %v1682 = vmul.f32 %v1606, %v1643
        %v1683 = vmul.f32 %v1607, %v1647
        %v1684 = vmul.f32 %v1608, %v1643
        %v1685 = vmul.f32 %v1609, %v1647
        %v1686 = vmul.f32 %v1610, %v1643
        %v1687 = vmul.f32 %v1611, %v1647
        %v1688 = vmul.f32 %v1612, %v1643
        %v1689 = vmul.f32 %v1613, %v1647
        %v1690 = vmul.f32 %v1614, %v1643
        %v1691 = vmul.f32 %v1615, %v1647
        %v1692 = vmul.f32 %v1616, %v1643
        %v1693 = vmul.f32 %v1617, %v1647
        %v1694 = vmul.f32 %v1618, %v1643
        %v1695 = vmul.f32 %v1619, %v1647
        %v1696 = vmul.f32 %v1620, %v1643
        %v1697 = vmul.f32 %v1621, %v1647
        %v1698 = vmul.f32 %v1622, %v1643
        %v1699 = vmul.f32 %v1623, %v1647
        %v1700 = vmul.f32 %v1624, %v1643
        %v1701 = vmul.f32 %v1625, %v1647
        %v1702 = vmul.f32 %v1626, %v1643
        %v1703 = vmul.f32 %v1627, %v1647
        %v1704 = vmul.f32 %v1628, %v1643
        %v1705 = vmul.f32 %v1629, %v1647
        %v1706 = vmul.f32 %v1630, %v1643
        %v1707 = vmul.f32 %v1631, %v1647
        %v1708 = vmul.f32 %v1632, %v1643
        %v1709 = vmul.f32 %v1633, %v1647
        %v1710 = vmul.f32 %v1634, %v1643
        %v1711 = vmul.f32 %v1635, %v1647
        %v1712 = vmul.f32 %v1636, %v1643
        %v1713 = vmul.f32 %v1637, %v1647
        %v1714 = vadd.f32 %v1650, 0.0
        %v1715 = vadd.f32 %v1651, 0.0
        %v1716 = vadd.f32 %v1652, 0.0
        %v1717 = vadd.f32 %v1653, 0.0
        %v1718 = vadd.f32 %v1654, 0.0
        %v1719 = vadd.f32 %v1655, 0.0
        %v1720 = vadd.f32 %v1656, 0.0
        %v1721 = vadd.f32 %v1657, 0.0
        %v1722 = vadd.f32 %v1658, 0.0
        %v1723 = vadd.f32 %v1659, 0.0
        %v1724 = vadd.f32 %v1660, 0.0
        %v1725 = vadd.f32 %v1661, 0.0
        %v1726 = vadd.f32 %v1662, 0.0
        %v1727 = vadd.f32 %v1663, 0.0
        %v1728 = vadd.f32 %v1664, 0.0
        %v1729 = vadd.f32 %v1665, 0.0
        %v1730 = vadd.f32 %v1666, 0.0
        %v1731 = vadd.f32 %v1667, 0.0
        %v1732 = vadd.f32 %v1668, 0.0
        %v1733 = vadd.f32 %v1669, 0.0
        %v1734 = vadd.f32 %v1670, 0.0
        %v1735 = vadd.f32 %v1671, 0.0
        %v1736 = vadd.f32 %v1672, 0.0
        %v1737 = vadd.f32 %v1673, 0.0
        %v1738 = vadd.f32 %v1674, 0.0
        %v1739 = vadd.f32 %v1675, 0.0
        %v1740 = vadd.f32 %v1676, 0.0
        %v1741 = vadd.f32 %v1677, 0.0
        %v1742 = vadd.f32 %v1678, 0.0
        %v1743 = vadd.f32 %v1679, 0.0
        %v1744 = vadd.f32 %v1680, 0.0
        %v1745 = vadd.f32 %v1681, 0.0
        %v1746 = vadd.f32 %v1682, 0.0
        %v1747 = vadd.f32 %v1683, 0.0
        %v1748 = vadd.f32 %v1684, 0.0
        %v1749 = vadd.f32 %v1685, 0.0
        %v1750 = vadd.f32 %v1686, 0.0
        %v1751 = vadd.f32 %v1687, 0.0
        %v1752 = vadd.f32 %v1688, 0.0
        %v1753 = vadd.f32 %v1689, 0.0
        %v1754 = vadd.f32 %v1690, 0.0
        %v1755 = vadd.f32 %v1691, 0.0
        %v1756 = vadd.f32 %v1692, 0.0
        %v1757 = vadd.f32 %v1693, 0.0
        %v1758 = vadd.f32 %v1694, 0.0
        %v1759 = vadd.f32 %v1695, 0.0
        %v1760 = vadd.f32 %v1696, 0.0
        %v1761 = vadd.f32 %v1697, 0.0
        %v1762 = vadd.f32 %v1698, 0.0
        %v1763 = vadd.f32 %v1699, 0.0
        %v1764 = vadd.f32 %v1700, 0.0
        %v1765 = vadd.f32 %v1701, 0.0
        %v1766 = vadd.f32 %v1702, 0.0
        %v1767 = vadd.f32 %v1703, 0.0
        %v1768 = vadd.f32 %v1704, 0.0
        %v1769 = vadd.f32 %v1705, 0.0
        %v1770 = vadd.f32 %v1706, 0.0
        %v1771 = vadd.f32 %v1707, 0.0
        %v1772 = vadd.f32 %v1708, 0.0
        %v1773 = vadd.f32 %v1709, 0.0
        %v1774 = vadd.f32 %v1710, 0.0
        %v1775 = vadd.f32 %v1711, 0.0
        %v1776 = vadd.f32 %v1712, 0.0
        %v1777 = vadd.f32 %v1713, 0.0
        %v1778 = vld [vmem:[#allocation2 + $0x10] sm:$0x11]
        %v1779 = vld [vmem:[#allocation2 + $0x28] sm:$0x11]
        %v1780 = vld [vmem:[#allocation2 + $0x40] sm:$0x11]
        %v1781 = vld [vmem:[#allocation2 + $0x58] sm:$0x11]
        %v1782 = vld [vmem:[#allocation2 + $0x70] sm:$0x11]
        %v1783 = vld [vmem:[#allocation2 + $0x88] sm:$0x11]
        %v1784 = vld [vmem:[#allocation2 + $0xa0] sm:$0x11]
        %v1785 = vld [vmem:[#allocation2 + $0xb8] sm:$0x11]
        %v1786 = vld [vmem:[#allocation2 + $0xd0] sm:$0x11]
        %v1787 = vld [vmem:[#allocation2 + $0xe8] sm:$0x11]
        %v1788 = vld [vmem:[#allocation2 + $0x100] sm:$0x11]
        %v1789 = vld [vmem:[#allocation2 + $0x118] sm:$0x11]
        %v1790 = vld [vmem:[#allocation2 + $0x130] sm:$0x11]
        %v1791 = vld [vmem:[#allocation2 + $0x148] sm:$0x11]
        %v1792 = vld [vmem:[#allocation2 + $0x160] sm:$0x11]
        %v1793 = vld [vmem:[#allocation2 + $0x178] sm:$0x11]
        %v1794 = vunpack.c.l.bf16 %v1778
        %v1795 = vunpack.c.h.bf16 %v1778
        %v1796 = vunpack.c.l.bf16 %v1779
        %v1797 = vunpack.c.h.bf16 %v1779
        %v1798 = vunpack.c.l.bf16 %v1780
        %v1799 = vunpack.c.h.bf16 %v1780
        %v1800 = vunpack.c.l.bf16 %v1781
        %v1801 = vunpack.c.h.bf16 %v1781
        %v1802 = vunpack.c.l.bf16 %v1782
        %v1803 = vunpack.c.h.bf16 %v1782
        %v1804 = vunpack.c.l.bf16 %v1783
        %v1805 = vunpack.c.h.bf16 %v1783
        %v1806 = vunpack.c.l.bf16 %v1784
        %v1807 = vunpack.c.h.bf16 %v1784
        %v1808 = vunpack.c.l.bf16 %v1785
        %v1809 = vunpack.c.h.bf16 %v1785
        %v1810 = vunpack.c.l.bf16 %v1786
        %v1811 = vunpack.c.h.bf16 %v1786
        %v1812 = vunpack.c.l.bf16 %v1787
        %v1813 = vunpack.c.h.bf16 %v1787
        %v1814 = vunpack.c.l.bf16 %v1788
        %v1815 = vunpack.c.h.bf16 %v1788
        %v1816 = vunpack.c.l.bf16 %v1789
        %v1817 = vunpack.c.h.bf16 %v1789
        %v1818 = vunpack.c.l.bf16 %v1790
        %v1819 = vunpack.c.h.bf16 %v1790
        %v1820 = vunpack.c.l.bf16 %v1791
        %v1821 = vunpack.c.h.bf16 %v1791
        %v1822 = vunpack.c.l.bf16 %v1792
        %v1823 = vunpack.c.h.bf16 %v1792
        %v1824 = vunpack.c.l.bf16 %v1793
        %v1825 = vunpack.c.h.bf16 %v1793
        %s1826 = scalar_lea.vmem %s3, 2
        %v1827 = vld [vmem:[%s1826] sm:$0x3]
        %v1829 = vlaneseq
        %v1830 = vshrl.u32 %v1829, 7
        %v1831 = vsub.s32 0, %v1830
        %v1832 = vrot.slane %v1827, %v1831
        %v1833 = vlaneseq
        %v1834 = vshrl.u32 %v1833, 7
        %v1835 = vsub.s32 1, %v1834
        %v1836 = vrot.slane %v1827, %v1835
        %v1839 = vmul.f32 %v1574, %v1832
        %v1840 = vmul.f32 %v1575, %v1836
        %v1841 = vmul.f32 %v1576, %v1832
        %v1842 = vmul.f32 %v1577, %v1836
        %v1843 = vmul.f32 %v1794, %v1832
        %v1844 = vmul.f32 %v1795, %v1836
        %v1845 = vmul.f32 %v1578, %v1832
        %v1846 = vmul.f32 %v1579, %v1836
        %v1847 = vmul.f32 %v1580, %v1832
        %v1848 = vmul.f32 %v1581, %v1836
        %v1849 = vmul.f32 %v1796, %v1832
        %v1850 = vmul.f32 %v1797, %v1836
        %v1851 = vmul.f32 %v1582, %v1832
        %v1852 = vmul.f32 %v1583, %v1836
        %v1853 = vmul.f32 %v1584, %v1832
        %v1854 = vmul.f32 %v1585, %v1836
        %v1855 = vmul.f32 %v1798, %v1832
        %v1856 = vmul.f32 %v1799, %v1836
        %v1857 = vmul.f32 %v1586, %v1832
        %v1858 = vmul.f32 %v1587, %v1836
        %v1859 = vmul.f32 %v1588, %v1832
        %v1860 = vmul.f32 %v1589, %v1836
        %v1861 = vmul.f32 %v1800, %v1832
        %v1862 = vmul.f32 %v1801, %v1836
        %v1863 = vmul.f32 %v1590, %v1832
        %v1864 = vmul.f32 %v1591, %v1836
        %v1865 = vmul.f32 %v1592, %v1832
        %v1866 = vmul.f32 %v1593, %v1836
        %v1867 = vmul.f32 %v1802, %v1832
        %v1868 = vmul.f32 %v1803, %v1836
        %v1869 = vmul.f32 %v1594, %v1832
        %v1870 = vmul.f32 %v1595, %v1836
        %v1871 = vmul.f32 %v1596, %v1832
        %v1872 = vmul.f32 %v1597, %v1836
        %v1873 = vmul.f32 %v1804, %v1832
        %v1874 = vmul.f32 %v1805, %v1836
        %v1875 = vmul.f32 %v1598, %v1832
        %v1876 = vmul.f32 %v1599, %v1836
        %v1877 = vmul.f32 %v1600, %v1832
        %v1878 = vmul.f32 %v1601, %v1836
        %v1879 = vmul.f32 %v1806, %v1832
        %v1880 = vmul.f32 %v1807, %v1836
        %v1881 = vmul.f32 %v1602, %v1832
        %v1882 = vmul.f32 %v1603, %v1836
        %v1883 = vmul.f32 %v1604, %v1832
        %v1884 = vmul.f32 %v1605, %v1836
        %v1885 = vmul.f32 %v1808, %v1832
        %v1886 = vmul.f32 %v1809, %v1836
        %v1887 = vmul.f32 %v1606, %v1832
        %v1888 = vmul.f32 %v1607, %v1836
        %v1889 = vmul.f32 %v1608, %v1832
        %v1890 = vmul.f32 %v1609, %v1836
        %v1891 = vmul.f32 %v1810, %v1832
        %v1892 = vmul.f32 %v1811, %v1836
        %v1893 = vmul.f32 %v1610, %v1832
        %v1894 = vmul.f32 %v1611, %v1836
        %v1895 = vmul.f32 %v1612, %v1832
        %v1896 = vmul.f32 %v1613, %v1836
        %v1897 = vmul.f32 %v1812, %v1832
        %v1898 = vmul.f32 %v1813, %v1836
        %v1899 = vmul.f32 %v1614, %v1832
        %v1900 = vmul.f32 %v1615, %v1836
        %v1901 = vmul.f32 %v1616, %v1832
        %v1902 = vmul.f32 %v1617, %v1836
        %v1903 = vmul.f32 %v1814, %v1832
        %v1904 = vmul.f32 %v1815, %v1836
        %v1905 = vmul.f32 %v1618, %v1832
        %v1906 = vmul.f32 %v1619, %v1836
        %v1907 = vmul.f32 %v1620, %v1832
        %v1908 = vmul.f32 %v1621, %v1836
        %v1909 = vmul.f32 %v1816, %v1832
        %v1910 = vmul.f32 %v1817, %v1836
        %v1911 = vmul.f32 %v1622, %v1832
        %v1912 = vmul.f32 %v1623, %v1836
        %v1913 = vmul.f32 %v1624, %v1832
        %v1914 = vmul.f32 %v1625, %v1836
        %v1915 = vmul.f32 %v1818, %v1832
        %v1916 = vmul.f32 %v1819, %v1836
        %v1917 = vmul.f32 %v1626, %v1832
        %v1918 = vmul.f32 %v1627, %v1836
        %v1919 = vmul.f32 %v1628, %v1832
        %v1920 = vmul.f32 %v1629, %v1836
        %v1921 = vmul.f32 %v1820, %v1832
        %v1922 = vmul.f32 %v1821, %v1836
        %v1923 = vmul.f32 %v1630, %v1832
        %v1924 = vmul.f32 %v1631, %v1836
        %v1925 = vmul.f32 %v1632, %v1832
        %v1926 = vmul.f32 %v1633, %v1836
        %v1927 = vmul.f32 %v1822, %v1832
        %v1928 = vmul.f32 %v1823, %v1836
        %v1929 = vmul.f32 %v1634, %v1832
        %v1930 = vmul.f32 %v1635, %v1836
        %v1931 = vmul.f32 %v1636, %v1832
        %v1932 = vmul.f32 %v1637, %v1836
        %v1933 = vmul.f32 %v1824, %v1832
        %v1934 = vmul.f32 %v1825, %v1836
        %vm2031 = vcmask 1046528
        %v2032 = vrot.slane %v1839, 1
        %v2033 = vrot.slane %v1841, 1
        %v2034 = vsel %vm2031, %v2032, %v2033
        %v2035 = vrot.slane %v1840, 1
        %v2036 = vrot.slane %v1842, 1
        %v2037 = vsel %vm2031, %v2035, %v2036
        %v2038 = vrot.slane %v1843, 1
        %v2039 = vsel %vm2031, %v2033, %v2038
        %v2040 = vrot.slane %v1844, 1
        %v2041 = vsel %vm2031, %v2036, %v2040
        %v2042 = vrot.slane %v1845, 1
        %v2043 = vrot.slane %v1847, 1
        %v2044 = vsel %vm2031, %v2042, %v2043
        %v2045 = vrot.slane %v1846, 1
        %v2046 = vrot.slane %v1848, 1
        %v2047 = vsel %vm2031, %v2045, %v2046
        %v2048 = vrot.slane %v1849, 1
        %v2049 = vsel %vm2031, %v2043, %v2048
        %v2050 = vrot.slane %v1850, 1
        %v2051 = vsel %vm2031, %v2046, %v2050
        %v2052 = vrot.slane %v1851, 1
        %v2053 = vrot.slane %v1853, 1
        %v2054 = vsel %vm2031, %v2052, %v2053
        %v2055 = vrot.slane %v1852, 1
        %v2056 = vrot.slane %v1854, 1
        %v2057 = vsel %vm2031, %v2055, %v2056
        %v2058 = vrot.slane %v1855, 1
        %v2059 = vsel %vm2031, %v2053, %v2058
        %v2060 = vrot.slane %v1856, 1
        %v2061 = vsel %vm2031, %v2056, %v2060
        %v2062 = vrot.slane %v1857, 1
        %v2063 = vrot.slane %v1859, 1
        %v2064 = vsel %vm2031, %v2062, %v2063
        %v2065 = vrot.slane %v1858, 1
        %v2066 = vrot.slane %v1860, 1
        %v2067 = vsel %vm2031, %v2065, %v2066
        %v2068 = vrot.slane %v1861, 1
        %v2069 = vsel %vm2031, %v2063, %v2068
        %v2070 = vrot.slane %v1862, 1
        %v2071 = vsel %vm2031, %v2066, %v2070
        %v2072 = vrot.slane %v1863, 1
        %v2073 = vrot.slane %v1865, 1
        %v2074 = vsel %vm2031, %v2072, %v2073
        %v2075 = vrot.slane %v1864, 1
        %v2076 = vrot.slane %v1866, 1
        %v2077 = vsel %vm2031, %v2075, %v2076
        %v2078 = vrot.slane %v1867, 1
        %v2079 = vsel %vm2031, %v2073, %v2078
        %v2080 = vrot.slane %v1868, 1
        %v2081 = vsel %vm2031, %v2076, %v2080
        %v2082 = vrot.slane %v1869, 1
        %v2083 = vrot.slane %v1871, 1
        %v2084 = vsel %vm2031, %v2082, %v2083
        %v2085 = vrot.slane %v1870, 1
        %v2086 = vrot.slane %v1872, 1
        %v2087 = vsel %vm2031, %v2085, %v2086
        %v2088 = vrot.slane %v1873, 1
        %v2089 = vsel %vm2031, %v2083, %v2088
        %v2090 = vrot.slane %v1874, 1
        %v2091 = vsel %vm2031, %v2086, %v2090
        %v2092 = vrot.slane %v1875, 1
        %v2093 = vrot.slane %v1877, 1
        %v2094 = vsel %vm2031, %v2092, %v2093
        %v2095 = vrot.slane %v1876, 1
        %v2096 = vrot.slane %v1878, 1
        %v2097 = vsel %vm2031, %v2095, %v2096
        %v2098 = vrot.slane %v1879, 1
        %v2099 = vsel %vm2031, %v2093, %v2098
        %v2100 = vrot.slane %v1880, 1
        %v2101 = vsel %vm2031, %v2096, %v2100
        %v2102 = vrot.slane %v1881, 1
        %v2103 = vrot.slane %v1883, 1
        %v2104 = vsel %vm2031, %v2102, %v2103
        %v2105 = vrot.slane %v1882, 1
        %v2106 = vrot.slane %v1884, 1
        %v2107 = vsel %vm2031, %v2105, %v2106
        %v2108 = vrot.slane %v1885, 1
        %v2109 = vsel %vm2031, %v2103, %v2108
        %v2110 = vrot.slane %v1886, 1
        %v2111 = vsel %vm2031, %v2106, %v2110
        %v2112 = vrot.slane %v1887, 1
        %v2113 = vrot.slane %v1889, 1
        %v2114 = vsel %vm2031, %v2112, %v2113
        %v2115 = vrot.slane %v1888, 1
        %v2116 = vrot.slane %v1890, 1
        %v2117 = vsel %vm2031, %v2115, %v2116
        %v2118 = vrot.slane %v1891, 1
        %v2119 = vsel %vm2031, %v2113, %v2118
        %v2120 = vrot.slane %v1892, 1
        %v2121 = vsel %vm2031, %v2116, %v2120
        %v2122 = vrot.slane %v1893, 1
        %v2123 = vrot.slane %v1895, 1
        %v2124 = vsel %vm2031, %v2122, %v2123
        %v2125 = vrot.slane %v1894, 1
        %v2126 = vrot.slane %v1896, 1
        %v2127 = vsel %vm2031, %v2125, %v2126
        %v2128 = vrot.slane %v1897, 1
        %v2129 = vsel %vm2031, %v2123, %v2128
        %v2130 = vrot.slane %v1898, 1
        %v2131 = vsel %vm2031, %v2126, %v2130
        %v2132 = vrot.slane %v1899, 1
        %v2133 = vrot.slane %v1901, 1
        %v2134 = vsel %vm2031, %v2132, %v2133
        %v2135 = vrot.slane %v1900, 1
        %v2136 = vrot.slane %v1902, 1
        %v2137 = vsel %vm2031, %v2135, %v2136
        %v2138 = vrot.slane %v1903, 1
        %v2139 = vsel %vm2031, %v2133, %v2138
        %v2140 = vrot.slane %v1904, 1
        %v2141 = vsel %vm2031, %v2136, %v2140
        %v2142 = vrot.slane %v1905, 1
        %v2143 = vrot.slane %v1907, 1
        %v2144 = vsel %vm2031, %v2142, %v2143
        %v2145 = vrot.slane %v1906, 1
        %v2146 = vrot.slane %v1908, 1
        %v2147 = vsel %vm2031, %v2145, %v2146
        %v2148 = vrot.slane %v1909, 1
        %v2149 = vsel %vm2031, %v2143, %v2148
        %v2150 = vrot.slane %v1910, 1
        %v2151 = vsel %vm2031, %v2146, %v2150
        %v2152 = vrot.slane %v1911, 1
        %v2153 = vrot.slane %v1913, 1
        %v2154 = vsel %vm2031, %v2152, %v2153
        %v2155 = vrot.slane %v1912, 1
        %v2156 = vrot.slane %v1914, 1
        %v2157 = vsel %vm2031, %v2155, %v2156
        %v2158 = vrot.slane %v1915, 1
        %v2159 = vsel %vm2031, %v2153, %v2158
        %v2160 = vrot.slane %v1916, 1
        %v2161 = vsel %vm2031, %v2156, %v2160
        %v2162 = vrot.slane %v1917, 1
        %v2163 = vrot.slane %v1919, 1
        %v2164 = vsel %vm2031, %v2162, %v2163
        %v2165 = vrot.slane %v1918, 1
        %v2166 = vrot.slane %v1920, 1
        %v2167 = vsel %vm2031, %v2165, %v2166
        %v2168 = vrot.slane %v1921, 1
        %v2169 = vsel %vm2031, %v2163, %v2168
        %v2170 = vrot.slane %v1922, 1
        %v2171 = vsel %vm2031, %v2166, %v2170
        %v2172 = vrot.slane %v1923, 1
        %v2173 = vrot.slane %v1925, 1
        %v2174 = vsel %vm2031, %v2172, %v2173
        %v2175 = vrot.slane %v1924, 1
        %v2176 = vrot.slane %v1926, 1
        %v2177 = vsel %vm2031, %v2175, %v2176
        %v2178 = vrot.slane %v1927, 1
        %v2179 = vsel %vm2031, %v2173, %v2178
        %v2180 = vrot.slane %v1928, 1
        %v2181 = vsel %vm2031, %v2176, %v2180
        %v2182 = vrot.slane %v1929, 1
        %v2183 = vrot.slane %v1931, 1
        %v2184 = vsel %vm2031, %v2182, %v2183
        %v2185 = vrot.slane %v1930, 1
        %v2186 = vrot.slane %v1932, 1
        %v2187 = vsel %vm2031, %v2185, %v2186
        %v2188 = vrot.slane %v1933, 1
        %v2189 = vsel %vm2031, %v2183, %v2188
        %v2190 = vrot.slane %v1934, 1
        %v2191 = vsel %vm2031, %v2186, %v2190
        %v2256 = vadd.f32 %v1714, %v2034
        %v2257 = vadd.f32 %v1715, %v2037
        %v2258 = vadd.f32 %v1716, %v2039
        %v2259 = vadd.f32 %v1717, %v2041
        %v2260 = vadd.f32 %v1718, %v2044
        %v2261 = vadd.f32 %v1719, %v2047
        %v2262 = vadd.f32 %v1720, %v2049
        %v2263 = vadd.f32 %v1721, %v2051
        %v2264 = vadd.f32 %v1722, %v2054
        %v2265 = vadd.f32 %v1723, %v2057
        %v2266 = vadd.f32 %v1724, %v2059
        %v2267 = vadd.f32 %v1725, %v2061
        %v2268 = vadd.f32 %v1726, %v2064
        %v2269 = vadd.f32 %v1727, %v2067
        %v2270 = vadd.f32 %v1728, %v2069
        %v2271 = vadd.f32 %v1729, %v2071
        %v2272 = vadd.f32 %v1730, %v2074
        %v2273 = vadd.f32 %v1731, %v2077
        %v2274 = vadd.f32 %v1732, %v2079
        %v2275 = vadd.f32 %v1733, %v2081
        %v2276 = vadd.f32 %v1734, %v2084
        %v2277 = vadd.f32 %v1735, %v2087
        %v2278 = vadd.f32 %v1736, %v2089
        %v2279 = vadd.f32 %v1737, %v2091
        %v2280 = vadd.f32 %v1738, %v2094
        %v2281 = vadd.f32 %v1739, %v2097
        %v2282 = vadd.f32 %v1740, %v2099
        %v2283 = vadd.f32 %v1741, %v2101
        %v2284 = vadd.f32 %v1742, %v2104
        %v2285 = vadd.f32 %v1743, %v2107
        %v2286 = vadd.f32 %v1744, %v2109
        %v2287 = vadd.f32 %v1745, %v2111
        %v2288 = vadd.f32 %v1746, %v2114
        %v2289 = vadd.f32 %v1747, %v2117
        %v2290 = vadd.f32 %v1748, %v2119
        %v2291 = vadd.f32 %v1749, %v2121
        %v2292 = vadd.f32 %v1750, %v2124
        %v2293 = vadd.f32 %v1751, %v2127
        %v2294 = vadd.f32 %v1752, %v2129
        %v2295 = vadd.f32 %v1753, %v2131
        %v2296 = vadd.f32 %v1754, %v2134
        %v2297 = vadd.f32 %v1755, %v2137
        %v2298 = vadd.f32 %v1756, %v2139
        %v2299 = vadd.f32 %v1757, %v2141
        %v2300 = vadd.f32 %v1758, %v2144
        %v2301 = vadd.f32 %v1759, %v2147
        %v2302 = vadd.f32 %v1760, %v2149
        %v2303 = vadd.f32 %v1761, %v2151
        %v2304 = vadd.f32 %v1762, %v2154
        %v2305 = vadd.f32 %v1763, %v2157
        %v2306 = vadd.f32 %v1764, %v2159
        %v2307 = vadd.f32 %v1765, %v2161
        %v2308 = vadd.f32 %v1766, %v2164
        %v2309 = vadd.f32 %v1767, %v2167
        %v2310 = vadd.f32 %v1768, %v2169
        %v2311 = vadd.f32 %v1769, %v2171
        %v2312 = vadd.f32 %v1770, %v2174
        %v2313 = vadd.f32 %v1771, %v2177
        %v2314 = vadd.f32 %v1772, %v2179
        %v2315 = vadd.f32 %v1773, %v2181
        %v2316 = vadd.f32 %v1774, %v2184
        %v2317 = vadd.f32 %v1775, %v2187
        %v2318 = vadd.f32 %v1776, %v2189
        %v2319 = vadd.f32 %v1777, %v2191
        %v2320 = vld [vmem:[#allocation2] sm:$0xee]
        %v2321 = vld [vmem:[#allocation2 + $0x18] sm:$0xee]
        %v2322 = vld [vmem:[#allocation2 + $0x30] sm:$0xee]
        %v2323 = vld [vmem:[#allocation2 + $0x48] sm:$0xee]
        %v2324 = vld [vmem:[#allocation2 + $0x60] sm:$0xee]
        %v2325 = vld [vmem:[#allocation2 + $0x78] sm:$0xee]
        %v2326 = vld [vmem:[#allocation2 + $0x90] sm:$0xee]
        %v2327 = vld [vmem:[#allocation2 + $0xa8] sm:$0xee]
        %v2328 = vld [vmem:[#allocation2 + $0xc0] sm:$0xee]
        %v2329 = vld [vmem:[#allocation2 + $0xd8] sm:$0xee]
        %v2330 = vld [vmem:[#allocation2 + $0xf0] sm:$0xee]
        %v2331 = vld [vmem:[#allocation2 + $0x108] sm:$0xee]
        %v2332 = vld [vmem:[#allocation2 + $0x120] sm:$0xee]
        %v2333 = vld [vmem:[#allocation2 + $0x138] sm:$0xee]
        %v2334 = vld [vmem:[#allocation2 + $0x150] sm:$0xee]
        %v2335 = vld [vmem:[#allocation2 + $0x168] sm:$0xee]
        %v2336 = vunpack.c.l.bf16 %v2320
        %v2337 = vunpack.c.h.bf16 %v2320
        %v2338 = vunpack.c.l.bf16 %v2321
        %v2339 = vunpack.c.h.bf16 %v2321
        %v2340 = vunpack.c.l.bf16 %v2322
        %v2341 = vunpack.c.h.bf16 %v2322
        %v2342 = vunpack.c.l.bf16 %v2323
        %v2343 = vunpack.c.h.bf16 %v2323
        %v2344 = vunpack.c.l.bf16 %v2324
        %v2345 = vunpack.c.h.bf16 %v2324
        %v2346 = vunpack.c.l.bf16 %v2325
        %v2347 = vunpack.c.h.bf16 %v2325
        %v2348 = vunpack.c.l.bf16 %v2326
        %v2349 = vunpack.c.h.bf16 %v2326
        %v2350 = vunpack.c.l.bf16 %v2327
        %v2351 = vunpack.c.h.bf16 %v2327
        %v2352 = vunpack.c.l.bf16 %v2328
        %v2353 = vunpack.c.h.bf16 %v2328
        %v2354 = vunpack.c.l.bf16 %v2329
        %v2355 = vunpack.c.h.bf16 %v2329
        %v2356 = vunpack.c.l.bf16 %v2330
        %v2357 = vunpack.c.h.bf16 %v2330
        %v2358 = vunpack.c.l.bf16 %v2331
        %v2359 = vunpack.c.h.bf16 %v2331
        %v2360 = vunpack.c.l.bf16 %v2332
        %v2361 = vunpack.c.h.bf16 %v2332
        %v2362 = vunpack.c.l.bf16 %v2333
        %v2363 = vunpack.c.h.bf16 %v2333
        %v2364 = vunpack.c.l.bf16 %v2334
        %v2365 = vunpack.c.h.bf16 %v2334
        %v2366 = vunpack.c.l.bf16 %v2335
        %v2367 = vunpack.c.h.bf16 %v2335
        %s2368 = scalar_lea.vmem %s3, 4
        %v2369 = vld [vmem:[%s2368] sm:$0x3]
        %v2371 = vlaneseq
        %v2372 = vshrl.u32 %v2371, 7
        %v2373 = vsub.s32 0, %v2372
        %v2374 = vrot.slane %v2369, %v2373
        %v2375 = vlaneseq
        %v2376 = vshrl.u32 %v2375, 7
        %v2377 = vsub.s32 1, %v2376
        %v2378 = vrot.slane %v2369, %v2377
        %v2381 = vmul.f32 %v2336, %v2374
        %v2382 = vmul.f32 %v2337, %v2378
        %v2383 = vmul.f32 %v1576, %v2374
        %v2384 = vmul.f32 %v1577, %v2378
        %v2385 = vmul.f32 %v1794, %v2374
        %v2386 = vmul.f32 %v1795, %v2378
        %v2387 = vmul.f32 %v2338, %v2374
        %v2388 = vmul.f32 %v2339, %v2378
        %v2389 = vmul.f32 %v1580, %v2374
        %v2390 = vmul.f32 %v1581, %v2378
        %v2391 = vmul.f32 %v1796, %v2374
        %v2392 = vmul.f32 %v1797, %v2378
        %v2393 = vmul.f32 %v2340, %v2374
        %v2394 = vmul.f32 %v2341, %v2378
        %v2395 = vmul.f32 %v1584, %v2374
        %v2396 = vmul.f32 %v1585, %v2378
        %v2397 = vmul.f32 %v1798, %v2374
        %v2398 = vmul.f32 %v1799, %v2378
        %v2399 = vmul.f32 %v2342, %v2374
        %v2400 = vmul.f32 %v2343, %v2378
        %v2401 = vmul.f32 %v1588, %v2374
        %v2402 = vmul.f32 %v1589, %v2378
        %v2403 = vmul.f32 %v1800, %v2374
        %v2404 = vmul.f32 %v1801, %v2378
        %v2405 = vmul.f32 %v2344, %v2374
        %v2406 = vmul.f32 %v2345, %v2378
        %v2407 = vmul.f32 %v1592, %v2374
        %v2408 = vmul.f32 %v1593, %v2378
        %v2409 = vmul.f32 %v1802, %v2374
        %v2410 = vmul.f32 %v1803, %v2378
        %v2411 = vmul.f32 %v2346, %v2374
        %v2412 = vmul.f32 %v2347, %v2378
        %v2413 = vmul.f32 %v1596, %v2374
        %v2414 = vmul.f32 %v1597, %v2378
        %v2415 = vmul.f32 %v1804, %v2374
        %v2416 = vmul.f32 %v1805, %v2378
        %v2417 = vmul.f32 %v2348, %v2374
        %v2418 = vmul.f32 %v2349, %v2378
        %v2419 = vmul.f32 %v1600, %v2374
        %v2420 = vmul.f32 %v1601, %v2378
        %v2421 = vmul.f32 %v1806, %v2374
        %v2422 = vmul.f32 %v1807, %v2378
        %v2423 = vmul.f32 %v2350, %v2374
        %v2424 = vmul.f32 %v2351, %v2378
        %v2425 = vmul.f32 %v1604, %v2374
        %v2426 = vmul.f32 %v1605, %v2378
        %v2427 = vmul.f32 %v1808, %v2374
        %v2428 = vmul.f32 %v1809, %v2378
        %v2429 = vmul.f32 %v2352, %v2374
        %v2430 = vmul.f32 %v2353, %v2378
        %v2431 = vmul.f32 %v1608, %v2374
        %v2432 = vmul.f32 %v1609, %v2378
        %v2433 = vmul.f32 %v1810, %v2374
        %v2434 = vmul.f32 %v1811, %v2378
        %v2435 = vmul.f32 %v2354, %v2374
        %v2436 = vmul.f32 %v2355, %v2378
        %v2437 = vmul.f32 %v1612, %v2374
        %v2438 = vmul.f32 %v1613, %v2378
        %v2439 = vmul.f32 %v1812, %v2374
        %v2440 = vmul.f32 %v1813, %v2378
        %v2441 = vmul.f32 %v2356, %v2374
        %v2442 = vmul.f32 %v2357, %v2378
        %v2443 = vmul.f32 %v1616, %v2374
        %v2444 = vmul.f32 %v1617, %v2378
        %v2445 = vmul.f32 %v1814, %v2374
        %v2446 = vmul.f32 %v1815, %v2378
        %v2447 = vmul.f32 %v2358, %v2374
        %v2448 = vmul.f32 %v2359, %v2378
        %v2449 = vmul.f32 %v1620, %v2374
        %v2450 = vmul.f32 %v1621, %v2378
        %v2451 = vmul.f32 %v1816, %v2374
        %v2452 = vmul.f32 %v1817, %v2378
        %v2453 = vmul.f32 %v2360, %v2374
        %v2454 = vmul.f32 %v2361, %v2378
        %v2455 = vmul.f32 %v1624, %v2374
        %v2456 = vmul.f32 %v1625, %v2378
        %v2457 = vmul.f32 %v1818, %v2374
        %v2458 = vmul.f32 %v1819, %v2378
        %v2459 = vmul.f32 %v2362, %v2374
        %v2460 = vmul.f32 %v2363, %v2378
        %v2461 = vmul.f32 %v1628, %v2374
        %v2462 = vmul.f32 %v1629, %v2378
        %v2463 = vmul.f32 %v1820, %v2374
        %v2464 = vmul.f32 %v1821, %v2378
        %v2465 = vmul.f32 %v2364, %v2374
        %v2466 = vmul.f32 %v2365, %v2378
        %v2467 = vmul.f32 %v1632, %v2374
        %v2468 = vmul.f32 %v1633, %v2378
        %v2469 = vmul.f32 %v1822, %v2374
        %v2470 = vmul.f32 %v1823, %v2378
        %v2471 = vmul.f32 %v2366, %v2374
        %v2472 = vmul.f32 %v2367, %v2378
        %v2473 = vmul.f32 %v1636, %v2374
        %v2474 = vmul.f32 %v1637, %v2378
        %v2475 = vmul.f32 %v1824, %v2374
        %v2476 = vmul.f32 %v1825, %v2378
        %vm2573 = vcmask 1045504
        %v2574 = vrot.slane %v2381, 2
        %v2575 = vrot.slane %v2383, 2
        %v2576 = vsel %vm2573, %v2574, %v2575
        %v2577 = vrot.slane %v2382, 2
        %v2578 = vrot.slane %v2384, 2
        %v2579 = vsel %vm2573, %v2577, %v2578
        %v2580 = vrot.slane %v2385, 2
        %v2581 = vsel %vm2573, %v2575, %v2580
        %v2582 = vrot.slane %v2386, 2
        %v2583 = vsel %vm2573, %v2578, %v2582
        %v2584 = vrot.slane %v2387, 2
        %v2585 = vrot.slane %v2389, 2
        %v2586 = vsel %vm2573, %v2584, %v2585
        %v2587 = vrot.slane %v2388, 2
        %v2588 = vrot.slane %v2390, 2
        %v2589 = vsel %vm2573, %v2587, %v2588
        %v2590 = vrot.slane %v2391, 2
        %v2591 = vsel %vm2573, %v2585, %v2590
        %v2592 = vrot.slane %v2392, 2
        %v2593 = vsel %vm2573, %v2588, %v2592
        %v2594 = vrot.slane %v2393, 2
        %v2595 = vrot.slane %v2395, 2
        %v2596 = vsel %vm2573, %v2594, %v2595
        %v2597 = vrot.slane %v2394, 2
        %v2598 = vrot.slane %v2396, 2
        %v2599 = vsel %vm2573, %v2597, %v2598
        %v2600 = vrot.slane %v2397, 2
        %v2601 = vsel %vm2573, %v2595, %v2600
        %v2602 = vrot.slane %v2398, 2
        %v2603 = vsel %vm2573, %v2598, %v2602
        %v2604 = vrot.slane %v2399, 2
        %v2605 = vrot.slane %v2401, 2
        %v2606 = vsel %vm2573, %v2604, %v2605
        %v2607 = vrot.slane %v2400, 2
        %v2608 = vrot.slane %v2402, 2
        %v2609 = vsel %vm2573, %v2607, %v2608
        %v2610 = vrot.slane %v2403, 2
        %v2611 = vsel %vm2573, %v2605, %v2610
        %v2612 = vrot.slane %v2404, 2
        %v2613 = vsel %vm2573, %v2608, %v2612
        %v2614 = vrot.slane %v2405, 2
        %v2615 = vrot.slane %v2407, 2
        %v2616 = vsel %vm2573, %v2614, %v2615
        %v2617 = vrot.slane %v2406, 2
        %v2618 = vrot.slane %v2408, 2
        %v2619 = vsel %vm2573, %v2617, %v2618
        %v2620 = vrot.slane %v2409, 2
        %v2621 = vsel %vm2573, %v2615, %v2620
        %v2622 = vrot.slane %v2410, 2
        %v2623 = vsel %vm2573, %v2618, %v2622
        %v2624 = vrot.slane %v2411, 2
        %v2625 = vrot.slane %v2413, 2
        %v2626 = vsel %vm2573, %v2624, %v2625
        %v2627 = vrot.slane %v2412, 2
        %v2628 = vrot.slane %v2414, 2
        %v2629 = vsel %vm2573, %v2627, %v2628
        %v2630 = vrot.slane %v2415, 2
        %v2631 = vsel %vm2573, %v2625, %v2630
        %v2632 = vrot.slane %v2416, 2
        %v2633 = vsel %vm2573, %v2628, %v2632
        %v2634 = vrot.slane %v2417, 2
        %v2635 = vrot.slane %v2419, 2
        %v2636 = vsel %vm2573, %v2634, %v2635
        %v2637 = vrot.slane %v2418, 2
        %v2638 = vrot.slane %v2420, 2
        %v2639 = vsel %vm2573, %v2637, %v2638
        %v2640 = vrot.slane %v2421, 2
        %v2641 = vsel %vm2573, %v2635, %v2640
        %v2642 = vrot.slane %v2422, 2
        %v2643 = vsel %vm2573, %v2638, %v2642
        %v2644 = vrot.slane %v2423, 2
        %v2645 = vrot.slane %v2425, 2
        %v2646 = vsel %vm2573, %v2644, %v2645
        %v2647 = vrot.slane %v2424, 2
        %v2648 = vrot.slane %v2426, 2
        %v2649 = vsel %vm2573, %v2647, %v2648
        %v2650 = vrot.slane %v2427, 2
        %v2651 = vsel %vm2573, %v2645, %v2650
        %v2652 = vrot.slane %v2428, 2
        %v2653 = vsel %vm2573, %v2648, %v2652
        %v2654 = vrot.slane %v2429, 2
        %v2655 = vrot.slane %v2431, 2
        %v2656 = vsel %vm2573, %v2654, %v2655
        %v2657 = vrot.slane %v2430, 2
        %v2658 = vrot.slane %v2432, 2
        %v2659 = vsel %vm2573, %v2657, %v2658
        %v2660 = vrot.slane %v2433, 2
        %v2661 = vsel %vm2573, %v2655, %v2660
        %v2662 = vrot.slane %v2434, 2
        %v2663 = vsel %vm2573, %v2658, %v2662
        %v2664 = vrot.slane %v2435, 2
        %v2665 = vrot.slane %v2437, 2
        %v2666 = vsel %vm2573, %v2664, %v2665
        %v2667 = vrot.slane %v2436, 2
        %v2668 = vrot.slane %v2438, 2
        %v2669 = vsel %vm2573, %v2667, %v2668
        %v2670 = vrot.slane %v2439, 2
        %v2671 = vsel %vm2573, %v2665, %v2670
        %v2672 = vrot.slane %v2440, 2
        %v2673 = vsel %vm2573, %v2668, %v2672
        %v2674 = vrot.slane %v2441, 2
        %v2675 = vrot.slane %v2443, 2
        %v2676 = vsel %vm2573, %v2674, %v2675
        %v2677 = vrot.slane %v2442, 2
        %v2678 = vrot.slane %v2444, 2
        %v2679 = vsel %vm2573, %v2677, %v2678
        %v2680 = vrot.slane %v2445, 2
        %v2681 = vsel %vm2573, %v2675, %v2680
        %v2682 = vrot.slane %v2446, 2
        %v2683 = vsel %vm2573, %v2678, %v2682
        %v2684 = vrot.slane %v2447, 2
        %v2685 = vrot.slane %v2449, 2
        %v2686 = vsel %vm2573, %v2684, %v2685
        %v2687 = vrot.slane %v2448, 2
        %v2688 = vrot.slane %v2450, 2
        %v2689 = vsel %vm2573, %v2687, %v2688
        %v2690 = vrot.slane %v2451, 2
        %v2691 = vsel %vm2573, %v2685, %v2690
        %v2692 = vrot.slane %v2452, 2
        %v2693 = vsel %vm2573, %v2688, %v2692
        %v2694 = vrot.slane %v2453, 2
        %v2695 = vrot.slane %v2455, 2
        %v2696 = vsel %vm2573, %v2694, %v2695
        %v2697 = vrot.slane %v2454, 2
        %v2698 = vrot.slane %v2456, 2
        %v2699 = vsel %vm2573, %v2697, %v2698
        %v2700 = vrot.slane %v2457, 2
        %v2701 = vsel %vm2573, %v2695, %v2700
        %v2702 = vrot.slane %v2458, 2
        %v2703 = vsel %vm2573, %v2698, %v2702
        %v2704 = vrot.slane %v2459, 2
        %v2705 = vrot.slane %v2461, 2
        %v2706 = vsel %vm2573, %v2704, %v2705
        %v2707 = vrot.slane %v2460, 2
        %v2708 = vrot.slane %v2462, 2
        %v2709 = vsel %vm2573, %v2707, %v2708
        %v2710 = vrot.slane %v2463, 2
        %v2711 = vsel %vm2573, %v2705, %v2710
        %v2712 = vrot.slane %v2464, 2
        %v2713 = vsel %vm2573, %v2708, %v2712
        %v2714 = vrot.slane %v2465, 2
        %v2715 = vrot.slane %v2467, 2
        %v2716 = vsel %vm2573, %v2714, %v2715
        %v2717 = vrot.slane %v2466, 2
        %v2718 = vrot.slane %v2468, 2
        %v2719 = vsel %vm2573, %v2717, %v2718
        %v2720 = vrot.slane %v2469, 2
        %v2721 = vsel %vm2573, %v2715, %v2720
        %v2722 = vrot.slane %v2470, 2
        %v2723 = vsel %vm2573, %v2718, %v2722
        %v2724 = vrot.slane %v2471, 2
        %v2725 = vrot.slane %v2473, 2
        %v2726 = vsel %vm2573, %v2724, %v2725
        %v2727 = vrot.slane %v2472, 2
        %v2728 = vrot.slane %v2474, 2
        %v2729 = vsel %vm2573, %v2727, %v2728
        %v2730 = vrot.slane %v2475, 2
        %v2731 = vsel %vm2573, %v2725, %v2730
        %v2732 = vrot.slane %v2476, 2
        %v2733 = vsel %vm2573, %v2728, %v2732
        %v2798 = vadd.f32 %v2256, %v2576
        %v2799 = vadd.f32 %v2257, %v2579
        %v2800 = vadd.f32 %v2258, %v2581
        %v2801 = vadd.f32 %v2259, %v2583
        %v2802 = vadd.f32 %v2260, %v2586
        %v2803 = vadd.f32 %v2261, %v2589
        %v2804 = vadd.f32 %v2262, %v2591
        %v2805 = vadd.f32 %v2263, %v2593
        %v2806 = vadd.f32 %v2264, %v2596
        %v2807 = vadd.f32 %v2265, %v2599
        %v2808 = vadd.f32 %v2266, %v2601
        %v2809 = vadd.f32 %v2267, %v2603
        %v2810 = vadd.f32 %v2268, %v2606
        %v2811 = vadd.f32 %v2269, %v2609
        %v2812 = vadd.f32 %v2270, %v2611
        %v2813 = vadd.f32 %v2271, %v2613
        %v2814 = vadd.f32 %v2272, %v2616
        %v2815 = vadd.f32 %v2273, %v2619
        %v2816 = vadd.f32 %v2274, %v2621
        %v2817 = vadd.f32 %v2275, %v2623
        %v2818 = vadd.f32 %v2276, %v2626
        %v2819 = vadd.f32 %v2277, %v2629
        %v2820 = vadd.f32 %v2278, %v2631
        %v2821 = vadd.f32 %v2279, %v2633
        %v2822 = vadd.f32 %v2280, %v2636
        %v2823 = vadd.f32 %v2281, %v2639
        %v2824 = vadd.f32 %v2282, %v2641
        %v2825 = vadd.f32 %v2283, %v2643
        %v2826 = vadd.f32 %v2284, %v2646
        %v2827 = vadd.f32 %v2285, %v2649
        %v2828 = vadd.f32 %v2286, %v2651
        %v2829 = vadd.f32 %v2287, %v2653
        %v2830 = vadd.f32 %v2288, %v2656
        %v2831 = vadd.f32 %v2289, %v2659
        %v2832 = vadd.f32 %v2290, %v2661
        %v2833 = vadd.f32 %v2291, %v2663
        %v2834 = vadd.f32 %v2292, %v2666
        %v2835 = vadd.f32 %v2293, %v2669
        %v2836 = vadd.f32 %v2294, %v2671
        %v2837 = vadd.f32 %v2295, %v2673
        %v2838 = vadd.f32 %v2296, %v2676
        %v2839 = vadd.f32 %v2297, %v2679
        %v2840 = vadd.f32 %v2298, %v2681
        %v2841 = vadd.f32 %v2299, %v2683
        %v2842 = vadd.f32 %v2300, %v2686
        %v2843 = vadd.f32 %v2301, %v2689
        %v2844 = vadd.f32 %v2302, %v2691
        %v2845 = vadd.f32 %v2303, %v2693
        %v2846 = vadd.f32 %v2304, %v2696
        %v2847 = vadd.f32 %v2305, %v2699
        %v2848 = vadd.f32 %v2306, %v2701
        %v2849 = vadd.f32 %v2307, %v2703
        %v2850 = vadd.f32 %v2308, %v2706
        %v2851 = vadd.f32 %v2309, %v2709
        %v2852 = vadd.f32 %v2310, %v2711
        %v2853 = vadd.f32 %v2311, %v2713
        %v2854 = vadd.f32 %v2312, %v2716
        %v2855 = vadd.f32 %v2313, %v2719
        %v2856 = vadd.f32 %v2314, %v2721
        %v2857 = vadd.f32 %v2315, %v2723
        %v2858 = vadd.f32 %v2316, %v2726
        %v2859 = vadd.f32 %v2317, %v2729
        %v2860 = vadd.f32 %v2318, %v2731
        %v2861 = vadd.f32 %v2319, %v2733
        %s2862 = scalar_lea.vmem [#allocation2], 24
        %v2863 = vld [vmem:[%s2862] sm:$0xff]
        %v2864 = vld [vmem:[%s2862 + $0x8] sm:$0xff]
        %v2865 = vld [vmem:[%s2862 + $0x18] sm:$0xff]
        %v2866 = vld [vmem:[%s2862 + $0x20] sm:$0xff]
        %v2867 = vld [vmem:[%s2862 + $0x30] sm:$0xff]
        %v2868 = vld [vmem:[%s2862 + $0x38] sm:$0xff]
        %v2869 = vld [vmem:[%s2862 + $0x48] sm:$0xff]
        %v2870 = vld [vmem:[%s2862 + $0x50] sm:$0xff]
        %v2871 = vld [vmem:[%s2862 + $0x60] sm:$0xff]
        %v2872 = vld [vmem:[%s2862 + $0x68] sm:$0xff]
        %v2873 = vld [vmem:[%s2862 + $0x78] sm:$0xff]
        %v2874 = vld [vmem:[%s2862 + $0x80] sm:$0xff]
        %v2875 = vld [vmem:[%s2862 + $0x90] sm:$0xff]
        %v2876 = vld [vmem:[%s2862 + $0x98] sm:$0xff]
        %v2877 = vld [vmem:[%s2862 + $0xa8] sm:$0xff]
        %v2878 = vld [vmem:[%s2862 + $0xb0] sm:$0xff]
        %v2879 = vld [vmem:[%s2862 + $0xc0] sm:$0xff]
        %v2880 = vld [vmem:[%s2862 + $0xc8] sm:$0xff]
        %v2881 = vld [vmem:[%s2862 + $0xd8] sm:$0xff]
        %v2882 = vld [vmem:[%s2862 + $0xe0] sm:$0xff]
        %v2883 = vld [vmem:[%s2862 + $0xf0] sm:$0xff]
        %v2884 = vld [vmem:[%s2862 + $0xf8] sm:$0xff]
        %v2885 = vld [vmem:[%s2862 + $0x108] sm:$0xff]
        %v2886 = vld [vmem:[%s2862 + $0x110] sm:$0xff]
        %v2887 = vld [vmem:[%s2862 + $0x120] sm:$0xff]
        %v2888 = vld [vmem:[%s2862 + $0x128] sm:$0xff]
        %v2889 = vld [vmem:[%s2862 + $0x138] sm:$0xff]
        %v2890 = vld [vmem:[%s2862 + $0x140] sm:$0xff]
        %v2891 = vld [vmem:[%s2862 + $0x150] sm:$0xff]
        %v2892 = vld [vmem:[%s2862 + $0x158] sm:$0xff]
        %v2893 = vld [vmem:[%s2862 + $0x168] sm:$0xff]
        %v2894 = vld [vmem:[%s2862 + $0x170] sm:$0xff]
        %v2895 = vunpack.c.l.bf16 %v2863
        %v2896 = vunpack.c.h.bf16 %v2863
        %v2897 = vunpack.c.l.bf16 %v2864
        %v2898 = vunpack.c.h.bf16 %v2864
        %v2899 = vunpack.c.l.bf16 %v2865
        %v2900 = vunpack.c.h.bf16 %v2865
        %v2901 = vunpack.c.l.bf16 %v2866
        %v2902 = vunpack.c.h.bf16 %v2866
        %v2903 = vunpack.c.l.bf16 %v2867
        %v2904 = vunpack.c.h.bf16 %v2867
        %v2905 = vunpack.c.l.bf16 %v2868
        %v2906 = vunpack.c.h.bf16 %v2868
        %v2907 = vunpack.c.l.bf16 %v2869
        %v2908 = vunpack.c.h.bf16 %v2869
        %v2909 = vunpack.c.l.bf16 %v2870
        %v2910 = vunpack.c.h.bf16 %v2870
        %v2911 = vunpack.c.l.bf16 %v2871
        %v2912 = vunpack.c.h.bf16 %v2871
        %v2913 = vunpack.c.l.bf16 %v2872
        %v2914 = vunpack.c.h.bf16 %v2872
        %v2915 = vunpack.c.l.bf16 %v2873
        %v2916 = vunpack.c.h.bf16 %v2873
        %v2917 = vunpack.c.l.bf16 %v2874
        %v2918 = vunpack.c.h.bf16 %v2874
        %v2919 = vunpack.c.l.bf16 %v2875
        %v2920 = vunpack.c.h.bf16 %v2875
        %v2921 = vunpack.c.l.bf16 %v2876
        %v2922 = vunpack.c.h.bf16 %v2876
        %v2923 = vunpack.c.l.bf16 %v2877
        %v2924 = vunpack.c.h.bf16 %v2877
        %v2925 = vunpack.c.l.bf16 %v2878
        %v2926 = vunpack.c.h.bf16 %v2878
        %v2927 = vunpack.c.l.bf16 %v2879
        %v2928 = vunpack.c.h.bf16 %v2879
        %v2929 = vunpack.c.l.bf16 %v2880
        %v2930 = vunpack.c.h.bf16 %v2880
        %v2931 = vunpack.c.l.bf16 %v2881
        %v2932 = vunpack.c.h.bf16 %v2881
        %v2933 = vunpack.c.l.bf16 %v2882
        %v2934 = vunpack.c.h.bf16 %v2882
        %v2935 = vunpack.c.l.bf16 %v2883
        %v2936 = vunpack.c.h.bf16 %v2883
        %v2937 = vunpack.c.l.bf16 %v2884
        %v2938 = vunpack.c.h.bf16 %v2884
        %v2939 = vunpack.c.l.bf16 %v2885
        %v2940 = vunpack.c.h.bf16 %v2885
        %v2941 = vunpack.c.l.bf16 %v2886
        %v2942 = vunpack.c.h.bf16 %v2886
        %v2943 = vunpack.c.l.bf16 %v2887
        %v2944 = vunpack.c.h.bf16 %v2887
        %v2945 = vunpack.c.l.bf16 %v2888
        %v2946 = vunpack.c.h.bf16 %v2888
        %v2947 = vunpack.c.l.bf16 %v2889
        %v2948 = vunpack.c.h.bf16 %v2889
        %v2949 = vunpack.c.l.bf16 %v2890
        %v2950 = vunpack.c.h.bf16 %v2890
        %v2951 = vunpack.c.l.bf16 %v2891
        %v2952 = vunpack.c.h.bf16 %v2891
        %v2953 = vunpack.c.l.bf16 %v2892
        %v2954 = vunpack.c.h.bf16 %v2892
        %v2955 = vunpack.c.l.bf16 %v2893
        %v2956 = vunpack.c.h.bf16 %v2893
        %v2957 = vunpack.c.l.bf16 %v2894
        %v2958 = vunpack.c.h.bf16 %v2894
        %s2959 = scalar_lea.vmem %s3, 6
        %v2960 = vld [vmem:[%s2959] sm:$0x3]
        %v2962 = vlaneseq
        %v2963 = vshrl.u32 %v2962, 7
        %v2964 = vsub.s32 0, %v2963
        %v2965 = vrot.slane %v2960, %v2964
        %v2966 = vlaneseq
        %v2967 = vshrl.u32 %v2966, 7
        %v2968 = vsub.s32 1, %v2967
        %v2969 = vrot.slane %v2960, %v2968
        %v2972 = vmul.f32 %v2895, %v2965
        %v2973 = vmul.f32 %v2896, %v2969
        %v2974 = vmul.f32 %v2897, %v2965
        %v2975 = vmul.f32 %v2898, %v2969
        %v2976 = vmul.f32 %v2899, %v2965
        %v2977 = vmul.f32 %v2900, %v2969
        %v2978 = vmul.f32 %v2901, %v2965
        %v2979 = vmul.f32 %v2902, %v2969
        %v2980 = vmul.f32 %v2903, %v2965
        %v2981 = vmul.f32 %v2904, %v2969
        %v2982 = vmul.f32 %v2905, %v2965
        %v2983 = vmul.f32 %v2906, %v2969
        %v2984 = vmul.f32 %v2907, %v2965
        %v2985 = vmul.f32 %v2908, %v2969
        %v2986 = vmul.f32 %v2909, %v2965
        %v2987 = vmul.f32 %v2910, %v2969
        %v2988 = vmul.f32 %v2911, %v2965
        %v2989 = vmul.f32 %v2912, %v2969
        %v2990 = vmul.f32 %v2913, %v2965
        %v2991 = vmul.f32 %v2914, %v2969
        %v2992 = vmul.f32 %v2915, %v2965
        %v2993 = vmul.f32 %v2916, %v2969
        %v2994 = vmul.f32 %v2917, %v2965
        %v2995 = vmul.f32 %v2918, %v2969
        %v2996 = vmul.f32 %v2919, %v2965
        %v2997 = vmul.f32 %v2920, %v2969
        %v2998 = vmul.f32 %v2921, %v2965
        %v2999 = vmul.f32 %v2922, %v2969
        %v3000 = vmul.f32 %v2923, %v2965
        %v3001 = vmul.f32 %v2924, %v2969
        %v3002 = vmul.f32 %v2925, %v2965
        %v3003 = vmul.f32 %v2926, %v2969
        %v3004 = vmul.f32 %v2927, %v2965
        %v3005 = vmul.f32 %v2928, %v2969
        %v3006 = vmul.f32 %v2929, %v2965
        %v3007 = vmul.f32 %v2930, %v2969
        %v3008 = vmul.f32 %v2931, %v2965
        %v3009 = vmul.f32 %v2932, %v2969
        %v3010 = vmul.f32 %v2933, %v2965
        %v3011 = vmul.f32 %v2934, %v2969
        %v3012 = vmul.f32 %v2935, %v2965
        %v3013 = vmul.f32 %v2936, %v2969
        %v3014 = vmul.f32 %v2937, %v2965
        %v3015 = vmul.f32 %v2938, %v2969
        %v3016 = vmul.f32 %v2939, %v2965
        %v3017 = vmul.f32 %v2940, %v2969
        %v3018 = vmul.f32 %v2941, %v2965
        %v3019 = vmul.f32 %v2942, %v2969
        %v3020 = vmul.f32 %v2943, %v2965
        %v3021 = vmul.f32 %v2944, %v2969
        %v3022 = vmul.f32 %v2945, %v2965
        %v3023 = vmul.f32 %v2946, %v2969
        %v3024 = vmul.f32 %v2947, %v2965
        %v3025 = vmul.f32 %v2948, %v2969
        %v3026 = vmul.f32 %v2949, %v2965
        %v3027 = vmul.f32 %v2950, %v2969
        %v3028 = vmul.f32 %v2951, %v2965
        %v3029 = vmul.f32 %v2952, %v2969
        %v3030 = vmul.f32 %v2953, %v2965
        %v3031 = vmul.f32 %v2954, %v2969
        %v3032 = vmul.f32 %v2955, %v2965
        %v3033 = vmul.f32 %v2956, %v2969
        %v3034 = vmul.f32 %v2957, %v2965
        %v3035 = vmul.f32 %v2958, %v2969
        %v3036 = vadd.f32 %v2798, %v2972
        %v3037 = vadd.f32 %v2799, %v2973
        %v3038 = vadd.f32 %v2800, %v2974
        %v3039 = vadd.f32 %v2801, %v2975
        %v3040 = vadd.f32 %v2802, %v2976
        %v3041 = vadd.f32 %v2803, %v2977
        %v3042 = vadd.f32 %v2804, %v2978
        %v3043 = vadd.f32 %v2805, %v2979
        %v3044 = vadd.f32 %v2806, %v2980
        %v3045 = vadd.f32 %v2807, %v2981
        %v3046 = vadd.f32 %v2808, %v2982
        %v3047 = vadd.f32 %v2809, %v2983
        %v3048 = vadd.f32 %v2810, %v2984
        %v3049 = vadd.f32 %v2811, %v2985
        %v3050 = vadd.f32 %v2812, %v2986
        %v3051 = vadd.f32 %v2813, %v2987
        %v3052 = vadd.f32 %v2814, %v2988
        %v3053 = vadd.f32 %v2815, %v2989
        %v3054 = vadd.f32 %v2816, %v2990
        %v3055 = vadd.f32 %v2817, %v2991
        %v3056 = vadd.f32 %v2818, %v2992
        %v3057 = vadd.f32 %v2819, %v2993
        %v3058 = vadd.f32 %v2820, %v2994
        %v3059 = vadd.f32 %v2821, %v2995
        %v3060 = vadd.f32 %v2822, %v2996
        %v3061 = vadd.f32 %v2823, %v2997
        %v3062 = vadd.f32 %v2824, %v2998
        %v3063 = vadd.f32 %v2825, %v2999
        %v3064 = vadd.f32 %v2826, %v3000
        %v3065 = vadd.f32 %v2827, %v3001
        %v3066 = vadd.f32 %v2828, %v3002
        %v3067 = vadd.f32 %v2829, %v3003
        %v3068 = vadd.f32 %v2830, %v3004
        %v3069 = vadd.f32 %v2831, %v3005
        %v3070 = vadd.f32 %v2832, %v3006
        %v3071 = vadd.f32 %v2833, %v3007
        %v3072 = vadd.f32 %v2834, %v3008
        %v3073 = vadd.f32 %v2835, %v3009
        %v3074 = vadd.f32 %v2836, %v3010
        %v3075 = vadd.f32 %v2837, %v3011
        %v3076 = vadd.f32 %v2838, %v3012
        %v3077 = vadd.f32 %v2839, %v3013
        %v3078 = vadd.f32 %v2840, %v3014
        %v3079 = vadd.f32 %v2841, %v3015
        %v3080 = vadd.f32 %v2842, %v3016
        %v3081 = vadd.f32 %v2843, %v3017
        %v3082 = vadd.f32 %v2844, %v3018
        %v3083 = vadd.f32 %v2845, %v3019
        %v3084 = vadd.f32 %v2846, %v3020
        %v3085 = vadd.f32 %v2847, %v3021
        %v3086 = vadd.f32 %v2848, %v3022
        %v3087 = vadd.f32 %v2849, %v3023
        %v3088 = vadd.f32 %v2850, %v3024
        %v3089 = vadd.f32 %v2851, %v3025
        %v3090 = vadd.f32 %v2852, %v3026
        %v3091 = vadd.f32 %v2853, %v3027
        %v3092 = vadd.f32 %v2854, %v3028
        %v3093 = vadd.f32 %v2855, %v3029
        %v3094 = vadd.f32 %v2856, %v3030
        %v3095 = vadd.f32 %v2857, %v3031
        %v3096 = vadd.f32 %v2858, %v3032
        %v3097 = vadd.f32 %v2859, %v3033
        %v3098 = vadd.f32 %v2860, %v3034
        %v3099 = vadd.f32 %v2861, %v3035
        %v3100 = vld [vmem:[%s2862 + $0x10] sm:$0x11]
        %v3101 = vld [vmem:[%s2862 + $0x28] sm:$0x11]
        %v3102 = vld [vmem:[%s2862 + $0x40] sm:$0x11]
        %v3103 = vld [vmem:[%s2862 + $0x58] sm:$0x11]
        %v3104 = vld [vmem:[%s2862 + $0x70] sm:$0x11]
        %v3105 = vld [vmem:[%s2862 + $0x88] sm:$0x11]
        %v3106 = vld [vmem:[%s2862 + $0xa0] sm:$0x11]
        %v3107 = vld [vmem:[%s2862 + $0xb8] sm:$0x11]
        %v3108 = vld [vmem:[%s2862 + $0xd0] sm:$0x11]
        %v3109 = vld [vmem:[%s2862 + $0xe8] sm:$0x11]
        %v3110 = vld [vmem:[%s2862 + $0x100] sm:$0x11]
        %v3111 = vld [vmem:[%s2862 + $0x118] sm:$0x11]
        %v3112 = vld [vmem:[%s2862 + $0x130] sm:$0x11]
        %v3113 = vld [vmem:[%s2862 + $0x148] sm:$0x11]
        %v3114 = vld [vmem:[%s2862 + $0x160] sm:$0x11]
        %v3115 = vld [vmem:[%s2862 + $0x178] sm:$0x11]
        %v3116 = vunpack.c.l.bf16 %v3100
        %v3117 = vunpack.c.h.bf16 %v3100
        %v3118 = vunpack.c.l.bf16 %v3101
        %v3119 = vunpack.c.h.bf16 %v3101
        %v3120 = vunpack.c.l.bf16 %v3102
        %v3121 = vunpack.c.h.bf16 %v3102
        %v3122 = vunpack.c.l.bf16 %v3103
        %v3123 = vunpack.c.h.bf16 %v3103
        %v3124 = vunpack.c.l.bf16 %v3104
        %v3125 = vunpack.c.h.bf16 %v3104
        %v3126 = vunpack.c.l.bf16 %v3105
        %v3127 = vunpack.c.h.bf16 %v3105
        %v3128 = vunpack.c.l.bf16 %v3106
        %v3129 = vunpack.c.h.bf16 %v3106
        %v3130 = vunpack.c.l.bf16 %v3107
        %v3131 = vunpack.c.h.bf16 %v3107
        %v3132 = vunpack.c.l.bf16 %v3108
        %v3133 = vunpack.c.h.bf16 %v3108
        %v3134 = vunpack.c.l.bf16 %v3109
        %v3135 = vunpack.c.h.bf16 %v3109
        %v3136 = vunpack.c.l.bf16 %v3110
        %v3137 = vunpack.c.h.bf16 %v3110
        %v3138 = vunpack.c.l.bf16 %v3111
        %v3139 = vunpack.c.h.bf16 %v3111
        %v3140 = vunpack.c.l.bf16 %v3112
        %v3141 = vunpack.c.h.bf16 %v3112
        %v3142 = vunpack.c.l.bf16 %v3113
        %v3143 = vunpack.c.h.bf16 %v3113
        %v3144 = vunpack.c.l.bf16 %v3114
        %v3145 = vunpack.c.h.bf16 %v3114
        %v3146 = vunpack.c.l.bf16 %v3115
        %v3147 = vunpack.c.h.bf16 %v3115
        %s3148 = scalar_lea.vmem %s3, 8
        %v3149 = vld [vmem:[%s3148] sm:$0x3]
        %v3151 = vlaneseq
        %v3152 = vshrl.u32 %v3151, 7
        %v3153 = vsub.s32 0, %v3152
        %v3154 = vrot.slane %v3149, %v3153
        %v3155 = vlaneseq
        %v3156 = vshrl.u32 %v3155, 7
        %v3157 = vsub.s32 1, %v3156
        %v3158 = vrot.slane %v3149, %v3157
        %v3161 = vmul.f32 %v2895, %v3154
        %v3162 = vmul.f32 %v2896, %v3158
        %v3163 = vmul.f32 %v2897, %v3154
        %v3164 = vmul.f32 %v2898, %v3158
        %v3165 = vmul.f32 %v3116, %v3154
        %v3166 = vmul.f32 %v3117, %v3158
        %v3167 = vmul.f32 %v2899, %v3154
        %v3168 = vmul.f32 %v2900, %v3158
        %v3169 = vmul.f32 %v2901, %v3154
        %v3170 = vmul.f32 %v2902, %v3158
        %v3171 = vmul.f32 %v3118, %v3154
        %v3172 = vmul.f32 %v3119, %v3158
        %v3173 = vmul.f32 %v2903, %v3154
        %v3174 = vmul.f32 %v2904, %v3158
        %v3175 = vmul.f32 %v2905, %v3154
        %v3176 = vmul.f32 %v2906, %v3158
        %v3177 = vmul.f32 %v3120, %v3154
        %v3178 = vmul.f32 %v3121, %v3158
        %v3179 = vmul.f32 %v2907, %v3154
        %v3180 = vmul.f32 %v2908, %v3158
        %v3181 = vmul.f32 %v2909, %v3154
        %v3182 = vmul.f32 %v2910, %v3158
        %v3183 = vmul.f32 %v3122, %v3154
        %v3184 = vmul.f32 %v3123, %v3158
        %v3185 = vmul.f32 %v2911, %v3154
        %v3186 = vmul.f32 %v2912, %v3158
        %v3187 = vmul.f32 %v2913, %v3154
        %v3188 = vmul.f32 %v2914, %v3158
        %v3189 = vmul.f32 %v3124, %v3154
        %v3190 = vmul.f32 %v3125, %v3158
        %v3191 = vmul.f32 %v2915, %v3154
        %v3192 = vmul.f32 %v2916, %v3158
        %v3193 = vmul.f32 %v2917, %v3154
        %v3194 = vmul.f32 %v2918, %v3158
        %v3195 = vmul.f32 %v3126, %v3154
        %v3196 = vmul.f32 %v3127, %v3158
        %v3197 = vmul.f32 %v2919, %v3154
        %v3198 = vmul.f32 %v2920, %v3158
        %v3199 = vmul.f32 %v2921, %v3154
        %v3200 = vmul.f32 %v2922, %v3158
        %v3201 = vmul.f32 %v3128, %v3154
        %v3202 = vmul.f32 %v3129, %v3158
        %v3203 = vmul.f32 %v2923, %v3154
        %v3204 = vmul.f32 %v2924, %v3158
        %v3205 = vmul.f32 %v2925, %v3154
        %v3206 = vmul.f32 %v2926, %v3158
        %v3207 = vmul.f32 %v3130, %v3154
        %v3208 = vmul.f32 %v3131, %v3158
        %v3209 = vmul.f32 %v2927, %v3154
        %v3210 = vmul.f32 %v2928, %v3158
        %v3211 = vmul.f32 %v2929, %v3154
        %v3212 = vmul.f32 %v2930, %v3158
        %v3213 = vmul.f32 %v3132, %v3154
        %v3214 = vmul.f32 %v3133, %v3158
        %v3215 = vmul.f32 %v2931, %v3154
        %v3216 = vmul.f32 %v2932, %v3158
        %v3217 = vmul.f32 %v2933, %v3154
        %v3218 = vmul.f32 %v2934, %v3158
        %v3219 = vmul.f32 %v3134, %v3154
        %v3220 = vmul.f32 %v3135, %v3158
        %v3221 = vmul.f32 %v2935, %v3154
        %v3222 = vmul.f32 %v2936, %v3158
        %v3223 = vmul.f32 %v2937, %v3154
        %v3224 = vmul.f32 %v2938, %v3158
        %v3225 = vmul.f32 %v3136, %v3154
        %v3226 = vmul.f32 %v3137, %v3158
        %v3227 = vmul.f32 %v2939, %v3154
        %v3228 = vmul.f32 %v2940, %v3158
        %v3229 = vmul.f32 %v2941, %v3154
        %v3230 = vmul.f32 %v2942, %v3158
        %v3231 = vmul.f32 %v3138, %v3154
        %v3232 = vmul.f32 %v3139, %v3158
        %v3233 = vmul.f32 %v2943, %v3154
        %v3234 = vmul.f32 %v2944, %v3158
        %v3235 = vmul.f32 %v2945, %v3154
        %v3236 = vmul.f32 %v2946, %v3158
        %v3237 = vmul.f32 %v3140, %v3154
        %v3238 = vmul.f32 %v3141, %v3158
        %v3239 = vmul.f32 %v2947, %v3154
        %v3240 = vmul.f32 %v2948, %v3158
        %v3241 = vmul.f32 %v2949, %v3154
        %v3242 = vmul.f32 %v2950, %v3158
        %v3243 = vmul.f32 %v3142, %v3154
        %v3244 = vmul.f32 %v3143, %v3158
        %v3245 = vmul.f32 %v2951, %v3154
        %v3246 = vmul.f32 %v2952, %v3158
        %v3247 = vmul.f32 %v2953, %v3154
        %v3248 = vmul.f32 %v2954, %v3158
        %v3249 = vmul.f32 %v3144, %v3154
        %v3250 = vmul.f32 %v3145, %v3158
        %v3251 = vmul.f32 %v2955, %v3154
        %v3252 = vmul.f32 %v2956, %v3158
        %v3253 = vmul.f32 %v2957, %v3154
        %v3254 = vmul.f32 %v2958, %v3158
        %v3255 = vmul.f32 %v3146, %v3154
        %v3256 = vmul.f32 %v3147, %v3158
        %v3353 = vrot.slane %v3161, 1
        %v3354 = vrot.slane %v3163, 1
        %v3355 = vsel %vm2031, %v3353, %v3354
        %v3356 = vrot.slane %v3162, 1
        %v3357 = vrot.slane %v3164, 1
        %v3358 = vsel %vm2031, %v3356, %v3357
        %v3359 = vrot.slane %v3165, 1
        %v3360 = vsel %vm2031, %v3354, %v3359
        %v3361 = vrot.slane %v3166, 1
        %v3362 = vsel %vm2031, %v3357, %v3361
        %v3363 = vrot.slane %v3167, 1
        %v3364 = vrot.slane %v3169, 1
        %v3365 = vsel %vm2031, %v3363, %v3364
        %v3366 = vrot.slane %v3168, 1
        %v3367 = vrot.slane %v3170, 1
        %v3368 = vsel %vm2031, %v3366, %v3367
        %v3369 = vrot.slane %v3171, 1
        %v3370 = vsel %vm2031, %v3364, %v3369
        %v3371 = vrot.slane %v3172, 1
        %v3372 = vsel %vm2031, %v3367, %v3371
        %v3373 = vrot.slane %v3173, 1
        %v3374 = vrot.slane %v3175, 1
        %v3375 = vsel %vm2031, %v3373, %v3374
        %v3376 = vrot.slane %v3174, 1
        %v3377 = vrot.slane %v3176, 1
        %v3378 = vsel %vm2031, %v3376, %v3377
        %v3379 = vrot.slane %v3177, 1
        %v3380 = vsel %vm2031, %v3374, %v3379
        %v3381 = vrot.slane %v3178, 1
        %v3382 = vsel %vm2031, %v3377, %v3381
        %v3383 = vrot.slane %v3179, 1
        %v3384 = vrot.slane %v3181, 1
        %v3385 = vsel %vm2031, %v3383, %v3384
        %v3386 = vrot.slane %v3180, 1
        %v3387 = vrot.slane %v3182, 1
        %v3388 = vsel %vm2031, %v3386, %v3387
        %v3389 = vrot.slane %v3183, 1
        %v3390 = vsel %vm2031, %v3384, %v3389
        %v3391 = vrot.slane %v3184, 1
        %v3392 = vsel %vm2031, %v3387, %v3391
        %v3393 = vrot.slane %v3185, 1
        %v3394 = vrot.slane %v3187, 1
        %v3395 = vsel %vm2031, %v3393, %v3394
        %v3396 = vrot.slane %v3186, 1
        %v3397 = vrot.slane %v3188, 1
        %v3398 = vsel %vm2031, %v3396, %v3397
        %v3399 = vrot.slane %v3189, 1
        %v3400 = vsel %vm2031, %v3394, %v3399
        %v3401 = vrot.slane %v3190, 1
        %v3402 = vsel %vm2031, %v3397, %v3401
        %v3403 = vrot.slane %v3191, 1
        %v3404 = vrot.slane %v3193, 1
        %v3405 = vsel %vm2031, %v3403, %v3404
        %v3406 = vrot.slane %v3192, 1
        %v3407 = vrot.slane %v3194, 1
        %v3408 = vsel %vm2031, %v3406, %v3407
        %v3409 = vrot.slane %v3195, 1
        %v3410 = vsel %vm2031, %v3404, %v3409
        %v3411 = vrot.slane %v3196, 1
        %v3412 = vsel %vm2031, %v3407, %v3411
        %v3413 = vrot.slane %v3197, 1
        %v3414 = vrot.slane %v3199, 1
        %v3415 = vsel %vm2031, %v3413, %v3414
        %v3416 = vrot.slane %v3198, 1
        %v3417 = vrot.slane %v3200, 1
        %v3418 = vsel %vm2031, %v3416, %v3417
        %v3419 = vrot.slane %v3201, 1
        %v3420 = vsel %vm2031, %v3414, %v3419
        %v3421 = vrot.slane %v3202, 1
        %v3422 = vsel %vm2031, %v3417, %v3421
        %v3423 = vrot.slane %v3203, 1
        %v3424 = vrot.slane %v3205, 1
        %v3425 = vsel %vm2031, %v3423, %v3424
        %v3426 = vrot.slane %v3204, 1
        %v3427 = vrot.slane %v3206, 1
        %v3428 = vsel %vm2031, %v3426, %v3427
        %v3429 = vrot.slane %v3207, 1
        %v3430 = vsel %vm2031, %v3424, %v3429
        %v3431 = vrot.slane %v3208, 1
        %v3432 = vsel %vm2031, %v3427, %v3431
        %v3433 = vrot.slane %v3209, 1
        %v3434 = vrot.slane %v3211, 1
        %v3435 = vsel %vm2031, %v3433, %v3434
        %v3436 = vrot.slane %v3210, 1
        %v3437 = vrot.slane %v3212, 1
        %v3438 = vsel %vm2031, %v3436, %v3437
        %v3439 = vrot.slane %v3213, 1
        %v3440 = vsel %vm2031, %v3434, %v3439
        %v3441 = vrot.slane %v3214, 1
        %v3442 = vsel %vm2031, %v3437, %v3441
        %v3443 = vrot.slane %v3215, 1
        %v3444 = vrot.slane %v3217, 1
        %v3445 = vsel %vm2031, %v3443, %v3444
        %v3446 = vrot.slane %v3216, 1
        %v3447 = vrot.slane %v3218, 1
        %v3448 = vsel %vm2031, %v3446, %v3447
        %v3449 = vrot.slane %v3219, 1
        %v3450 = vsel %vm2031, %v3444, %v3449
        %v3451 = vrot.slane %v3220, 1
        %v3452 = vsel %vm2031, %v3447, %v3451
        %v3453 = vrot.slane %v3221, 1
        %v3454 = vrot.slane %v3223, 1
        %v3455 = vsel %vm2031, %v3453, %v3454
        %v3456 = vrot.slane %v3222, 1
        %v3457 = vrot.slane %v3224, 1
        %v3458 = vsel %vm2031, %v3456, %v3457
        %v3459 = vrot.slane %v3225, 1
        %v3460 = vsel %vm2031, %v3454, %v3459
        %v3461 = vrot.slane %v3226, 1
        %v3462 = vsel %vm2031, %v3457, %v3461
        %v3463 = vrot.slane %v3227, 1
        %v3464 = vrot.slane %v3229, 1
        %v3465 = vsel %vm2031, %v3463, %v3464
        %v3466 = vrot.slane %v3228, 1
        %v3467 = vrot.slane %v3230, 1
        %v3468 = vsel %vm2031, %v3466, %v3467
        %v3469 = vrot.slane %v3231, 1
        %v3470 = vsel %vm2031, %v3464, %v3469
        %v3471 = vrot.slane %v3232, 1
        %v3472 = vsel %vm2031, %v3467, %v3471
        %v3473 = vrot.slane %v3233, 1
        %v3474 = vrot.slane %v3235, 1
        %v3475 = vsel %vm2031, %v3473, %v3474
        %v3476 = vrot.slane %v3234, 1
        %v3477 = vrot.slane %v3236, 1
        %v3478 = vsel %vm2031, %v3476, %v3477
        %v3479 = vrot.slane %v3237, 1
        %v3480 = vsel %vm2031, %v3474, %v3479
        %v3481 = vrot.slane %v3238, 1
        %v3482 = vsel %vm2031, %v3477, %v3481
        %v3483 = vrot.slane %v3239, 1
        %v3484 = vrot.slane %v3241, 1
        %v3485 = vsel %vm2031, %v3483, %v3484
        %v3486 = vrot.slane %v3240, 1
        %v3487 = vrot.slane %v3242, 1
        %v3488 = vsel %vm2031, %v3486, %v3487
        %v3489 = vrot.slane %v3243, 1
        %v3490 = vsel %vm2031, %v3484, %v3489
        %v3491 = vrot.slane %v3244, 1
        %v3492 = vsel %vm2031, %v3487, %v3491
        %v3493 = vrot.slane %v3245, 1
        %v3494 = vrot.slane %v3247, 1
        %v3495 = vsel %vm2031, %v3493, %v3494
        %v3496 = vrot.slane %v3246, 1
        %v3497 = vrot.slane %v3248, 1
        %v3498 = vsel %vm2031, %v3496, %v3497
        %v3499 = vrot.slane %v3249, 1
        %v3500 = vsel %vm2031, %v3494, %v3499
        %v3501 = vrot.slane %v3250, 1
        %v3502 = vsel %vm2031, %v3497, %v3501
        %v3503 = vrot.slane %v3251, 1
        %v3504 = vrot.slane %v3253, 1
        %v3505 = vsel %vm2031, %v3503, %v3504
        %v3506 = vrot.slane %v3252, 1
        %v3507 = vrot.slane %v3254, 1
        %v3508 = vsel %vm2031, %v3506, %v3507
        %v3509 = vrot.slane %v3255, 1
        %v3510 = vsel %vm2031, %v3504, %v3509
        %v3511 = vrot.slane %v3256, 1
        %v3512 = vsel %vm2031, %v3507, %v3511
        %v3577 = vadd.f32 %v3036, %v3355
        %v3578 = vadd.f32 %v3037, %v3358
        %v3579 = vadd.f32 %v3038, %v3360
        %v3580 = vadd.f32 %v3039, %v3362
        %v3581 = vadd.f32 %v3040, %v3365
        %v3582 = vadd.f32 %v3041, %v3368
        %v3583 = vadd.f32 %v3042, %v3370
        %v3584 = vadd.f32 %v3043, %v3372
        %v3585 = vadd.f32 %v3044, %v3375
        %v3586 = vadd.f32 %v3045, %v3378
        %v3587 = vadd.f32 %v3046, %v3380
        %v3588 = vadd.f32 %v3047, %v3382
        %v3589 = vadd.f32 %v3048, %v3385
        %v3590 = vadd.f32 %v3049, %v3388
        %v3591 = vadd.f32 %v3050, %v3390
        %v3592 = vadd.f32 %v3051, %v3392
        %v3593 = vadd.f32 %v3052, %v3395
        %v3594 = vadd.f32 %v3053, %v3398
        %v3595 = vadd.f32 %v3054, %v3400
        %v3596 = vadd.f32 %v3055, %v3402
        %v3597 = vadd.f32 %v3056, %v3405
        %v3598 = vadd.f32 %v3057, %v3408
        %v3599 = vadd.f32 %v3058, %v3410
        %v3600 = vadd.f32 %v3059, %v3412
        %v3601 = vadd.f32 %v3060, %v3415
        %v3602 = vadd.f32 %v3061, %v3418
        %v3603 = vadd.f32 %v3062, %v3420
        %v3604 = vadd.f32 %v3063, %v3422
        %v3605 = vadd.f32 %v3064, %v3425
        %v3606 = vadd.f32 %v3065, %v3428
        %v3607 = vadd.f32 %v3066, %v3430
        %v3608 = vadd.f32 %v3067, %v3432
        %v3609 = vadd.f32 %v3068, %v3435
        %v3610 = vadd.f32 %v3069, %v3438
        %v3611 = vadd.f32 %v3070, %v3440
        %v3612 = vadd.f32 %v3071, %v3442
        %v3613 = vadd.f32 %v3072, %v3445
        %v3614 = vadd.f32 %v3073, %v3448
        %v3615 = vadd.f32 %v3074, %v3450
        %v3616 = vadd.f32 %v3075, %v3452
        %v3617 = vadd.f32 %v3076, %v3455
        %v3618 = vadd.f32 %v3077, %v3458
        %v3619 = vadd.f32 %v3078, %v3460
        %v3620 = vadd.f32 %v3079, %v3462
        %v3621 = vadd.f32 %v3080, %v3465
        %v3622 = vadd.f32 %v3081, %v3468
        %v3623 = vadd.f32 %v3082, %v3470
        %v3624 = vadd.f32 %v3083, %v3472
        %v3625 = vadd.f32 %v3084, %v3475
        %v3626 = vadd.f32 %v3085, %v3478
        %v3627 = vadd.f32 %v3086, %v3480
        %v3628 = vadd.f32 %v3087, %v3482
        %v3629 = vadd.f32 %v3088, %v3485
        %v3630 = vadd.f32 %v3089, %v3488
        %v3631 = vadd.f32 %v3090, %v3490
        %v3632 = vadd.f32 %v3091, %v3492
        %v3633 = vadd.f32 %v3092, %v3495
        %v3634 = vadd.f32 %v3093, %v3498
        %v3635 = vadd.f32 %v3094, %v3500
        %v3636 = vadd.f32 %v3095, %v3502
        %v3637 = vadd.f32 %v3096, %v3505
        %v3638 = vadd.f32 %v3097, %v3508
        %v3639 = vadd.f32 %v3098, %v3510
        %v3640 = vadd.f32 %v3099, %v3512
        %v3641 = vld [vmem:[%s2862] sm:$0xee]
        %v3642 = vld [vmem:[%s2862 + $0x18] sm:$0xee]
        %v3643 = vld [vmem:[%s2862 + $0x30] sm:$0xee]
        %v3644 = vld [vmem:[%s2862 + $0x48] sm:$0xee]
        %v3645 = vld [vmem:[%s2862 + $0x60] sm:$0xee]
        %v3646 = vld [vmem:[%s2862 + $0x78] sm:$0xee]
        %v3647 = vld [vmem:[%s2862 + $0x90] sm:$0xee]
        %v3648 = vld [vmem:[%s2862 + $0xa8] sm:$0xee]
        %v3649 = vld [vmem:[%s2862 + $0xc0] sm:$0xee]
        %v3650 = vld [vmem:[%s2862 + $0xd8] sm:$0xee]
        %v3651 = vld [vmem:[%s2862 + $0xf0] sm:$0xee]
        %v3652 = vld [vmem:[%s2862 + $0x108] sm:$0xee]
        %v3653 = vld [vmem:[%s2862 + $0x120] sm:$0xee]
        %v3654 = vld [vmem:[%s2862 + $0x138] sm:$0xee]
        %v3655 = vld [vmem:[%s2862 + $0x150] sm:$0xee]
        %v3656 = vld [vmem:[%s2862 + $0x168] sm:$0xee]
        %v3657 = vunpack.c.l.bf16 %v3641
        %v3658 = vunpack.c.h.bf16 %v3641
        %v3659 = vunpack.c.l.bf16 %v3642
        %v3660 = vunpack.c.h.bf16 %v3642
        %v3661 = vunpack.c.l.bf16 %v3643
        %v3662 = vunpack.c.h.bf16 %v3643
        %v3663 = vunpack.c.l.bf16 %v3644
        %v3664 = vunpack.c.h.bf16 %v3644
        %v3665 = vunpack.c.l.bf16 %v3645
        %v3666 = vunpack.c.h.bf16 %v3645
        %v3667 = vunpack.c.l.bf16 %v3646
        %v3668 = vunpack.c.h.bf16 %v3646
        %v3669 = vunpack.c.l.bf16 %v3647
        %v3670 = vunpack.c.h.bf16 %v3647
        %v3671 = vunpack.c.l.bf16 %v3648
        %v3672 = vunpack.c.h.bf16 %v3648
        %v3673 = vunpack.c.l.bf16 %v3649
        %v3674 = vunpack.c.h.bf16 %v3649
        %v3675 = vunpack.c.l.bf16 %v3650
        %v3676 = vunpack.c.h.bf16 %v3650
        %v3677 = vunpack.c.l.bf16 %v3651
        %v3678 = vunpack.c.h.bf16 %v3651
        %v3679 = vunpack.c.l.bf16 %v3652
        %v3680 = vunpack.c.h.bf16 %v3652
        %v3681 = vunpack.c.l.bf16 %v3653
        %v3682 = vunpack.c.h.bf16 %v3653
        %v3683 = vunpack.c.l.bf16 %v3654
        %v3684 = vunpack.c.h.bf16 %v3654
        %v3685 = vunpack.c.l.bf16 %v3655
        %v3686 = vunpack.c.h.bf16 %v3655
        %v3687 = vunpack.c.l.bf16 %v3656
        %v3688 = vunpack.c.h.bf16 %v3656
        %s3689 = scalar_lea.vmem %s3, 10
        %v3690 = vld [vmem:[%s3689] sm:$0x3]
        %v3692 = vlaneseq
        %v3693 = vshrl.u32 %v3692, 7
        %v3694 = vsub.s32 0, %v3693
        %v3695 = vrot.slane %v3690, %v3694
        %v3696 = vlaneseq
        %v3697 = vshrl.u32 %v3696, 7
        %v3698 = vsub.s32 1, %v3697
        %v3699 = vrot.slane %v3690, %v3698
        %v3702 = vmul.f32 %v3657, %v3695
        %v3703 = vmul.f32 %v3658, %v3699
        %v3704 = vmul.f32 %v2897, %v3695
        %v3705 = vmul.f32 %v2898, %v3699
        %v3706 = vmul.f32 %v3116, %v3695
        %v3707 = vmul.f32 %v3117, %v3699
        %v3708 = vmul.f32 %v3659, %v3695
        %v3709 = vmul.f32 %v3660, %v3699
        %v3710 = vmul.f32 %v2901, %v3695
        %v3711 = vmul.f32 %v2902, %v3699
        %v3712 = vmul.f32 %v3118, %v3695
        %v3713 = vmul.f32 %v3119, %v3699
        %v3714 = vmul.f32 %v3661, %v3695
        %v3715 = vmul.f32 %v3662, %v3699
        %v3716 = vmul.f32 %v2905, %v3695
        %v3717 = vmul.f32 %v2906, %v3699
        %v3718 = vmul.f32 %v3120, %v3695
        %v3719 = vmul.f32 %v3121, %v3699
        %v3720 = vmul.f32 %v3663, %v3695
        %v3721 = vmul.f32 %v3664, %v3699
        %v3722 = vmul.f32 %v2909, %v3695
        %v3723 = vmul.f32 %v2910, %v3699
        %v3724 = vmul.f32 %v3122, %v3695
        %v3725 = vmul.f32 %v3123, %v3699
        %v3726 = vmul.f32 %v3665, %v3695
        %v3727 = vmul.f32 %v3666, %v3699
        %v3728 = vmul.f32 %v2913, %v3695
        %v3729 = vmul.f32 %v2914, %v3699
        %v3730 = vmul.f32 %v3124, %v3695
        %v3731 = vmul.f32 %v3125, %v3699
        %v3732 = vmul.f32 %v3667, %v3695
        %v3733 = vmul.f32 %v3668, %v3699
        %v3734 = vmul.f32 %v2917, %v3695
        %v3735 = vmul.f32 %v2918, %v3699
        %v3736 = vmul.f32 %v3126, %v3695
        %v3737 = vmul.f32 %v3127, %v3699
        %v3738 = vmul.f32 %v3669, %v3695
        %v3739 = vmul.f32 %v3670, %v3699
        %v3740 = vmul.f32 %v2921, %v3695
        %v3741 = vmul.f32 %v2922, %v3699
        %v3742 = vmul.f32 %v3128, %v3695
        %v3743 = vmul.f32 %v3129, %v3699
        %v3744 = vmul.f32 %v3671, %v3695
        %v3745 = vmul.f32 %v3672, %v3699
        %v3746 = vmul.f32 %v2925, %v3695
        %v3747 = vmul.f32 %v2926, %v3699
        %v3748 = vmul.f32 %v3130, %v3695
        %v3749 = vmul.f32 %v3131, %v3699
        %v3750 = vmul.f32 %v3673, %v3695
        %v3751 = vmul.f32 %v3674, %v3699
        %v3752 = vmul.f32 %v2929, %v3695
        %v3753 = vmul.f32 %v2930, %v3699
        %v3754 = vmul.f32 %v3132, %v3695
        %v3755 = vmul.f32 %v3133, %v3699
        %v3756 = vmul.f32 %v3675, %v3695
        %v3757 = vmul.f32 %v3676, %v3699
        %v3758 = vmul.f32 %v2933, %v3695
        %v3759 = vmul.f32 %v2934, %v3699
        %v3760 = vmul.f32 %v3134, %v3695
        %v3761 = vmul.f32 %v3135, %v3699
        %v3762 = vmul.f32 %v3677, %v3695
        %v3763 = vmul.f32 %v3678, %v3699
        %v3764 = vmul.f32 %v2937, %v3695
        %v3765 = vmul.f32 %v2938, %v3699
        %v3766 = vmul.f32 %v3136, %v3695
        %v3767 = vmul.f32 %v3137, %v3699
        %v3768 = vmul.f32 %v3679, %v3695
        %v3769 = vmul.f32 %v3680, %v3699
        %v3770 = vmul.f32 %v2941, %v3695
        %v3771 = vmul.f32 %v2942, %v3699
        %v3772 = vmul.f32 %v3138, %v3695
        %v3773 = vmul.f32 %v3139, %v3699
        %v3774 = vmul.f32 %v3681, %v3695
        %v3775 = vmul.f32 %v3682, %v3699
        %v3776 = vmul.f32 %v2945, %v3695
        %v3777 = vmul.f32 %v2946, %v3699
        %v3778 = vmul.f32 %v3140, %v3695
        %v3779 = vmul.f32 %v3141, %v3699
        %v3780 = vmul.f32 %v3683, %v3695
        %v3781 = vmul.f32 %v3684, %v3699
        %v3782 = vmul.f32 %v2949, %v3695
        %v3783 = vmul.f32 %v2950, %v3699
        %v3784 = vmul.f32 %v3142, %v3695
        %v3785 = vmul.f32 %v3143, %v3699
        %v3786 = vmul.f32 %v3685, %v3695
        %v3787 = vmul.f32 %v3686, %v3699
        %v3788 = vmul.f32 %v2953, %v3695
        %v3789 = vmul.f32 %v2954, %v3699
        %v3790 = vmul.f32 %v3144, %v3695
        %v3791 = vmul.f32 %v3145, %v3699
        %v3792 = vmul.f32 %v3687, %v3695
        %v3793 = vmul.f32 %v3688, %v3699
        %v3794 = vmul.f32 %v2957, %v3695
        %v3795 = vmul.f32 %v2958, %v3699
        %v3796 = vmul.f32 %v3146, %v3695
        %v3797 = vmul.f32 %v3147, %v3699
        %v3894 = vrot.slane %v3702, 2
        %v3895 = vrot.slane %v3704, 2
        %v3896 = vsel %vm2573, %v3894, %v3895
        %v3897 = vrot.slane %v3703, 2
        %v3898 = vrot.slane %v3705, 2
        %v3899 = vsel %vm2573, %v3897, %v3898
        %v3900 = vrot.slane %v3706, 2
        %v3901 = vsel %vm2573, %v3895, %v3900
        %v3902 = vrot.slane %v3707, 2
        %v3903 = vsel %vm2573, %v3898, %v3902
        %v3904 = vrot.slane %v3708, 2
        %v3905 = vrot.slane %v3710, 2
        %v3906 = vsel %vm2573, %v3904, %v3905
        %v3907 = vrot.slane %v3709, 2
        %v3908 = vrot.slane %v3711, 2
        %v3909 = vsel %vm2573, %v3907, %v3908
        %v3910 = vrot.slane %v3712, 2
        %v3911 = vsel %vm2573, %v3905, %v3910
        %v3912 = vrot.slane %v3713, 2
        %v3913 = vsel %vm2573, %v3908, %v3912
        %v3914 = vrot.slane %v3714, 2
        %v3915 = vrot.slane %v3716, 2
        %v3916 = vsel %vm2573, %v3914, %v3915
        %v3917 = vrot.slane %v3715, 2
        %v3918 = vrot.slane %v3717, 2
        %v3919 = vsel %vm2573, %v3917, %v3918
        %v3920 = vrot.slane %v3718, 2
        %v3921 = vsel %vm2573, %v3915, %v3920
        %v3922 = vrot.slane %v3719, 2
        %v3923 = vsel %vm2573, %v3918, %v3922
        %v3924 = vrot.slane %v3720, 2
        %v3925 = vrot.slane %v3722, 2
        %v3926 = vsel %vm2573, %v3924, %v3925
        %v3927 = vrot.slane %v3721, 2
        %v3928 = vrot.slane %v3723, 2
        %v3929 = vsel %vm2573, %v3927, %v3928
        %v3930 = vrot.slane %v3724, 2
        %v3931 = vsel %vm2573, %v3925, %v3930
        %v3932 = vrot.slane %v3725, 2
        %v3933 = vsel %vm2573, %v3928, %v3932
        %v3934 = vrot.slane %v3726, 2
        %v3935 = vrot.slane %v3728, 2
        %v3936 = vsel %vm2573, %v3934, %v3935
        %v3937 = vrot.slane %v3727, 2
        %v3938 = vrot.slane %v3729, 2
        %v3939 = vsel %vm2573, %v3937, %v3938
        %v3940 = vrot.slane %v3730, 2
        %v3941 = vsel %vm2573, %v3935, %v3940
        %v3942 = vrot.slane %v3731, 2
        %v3943 = vsel %vm2573, %v3938, %v3942
        %v3944 = vrot.slane %v3732, 2
        %v3945 = vrot.slane %v3734, 2
        %v3946 = vsel %vm2573, %v3944, %v3945
        %v3947 = vrot.slane %v3733, 2
        %v3948 = vrot.slane %v3735, 2
        %v3949 = vsel %vm2573, %v3947, %v3948
        %v3950 = vrot.slane %v3736, 2
        %v3951 = vsel %vm2573, %v3945, %v3950
        %v3952 = vrot.slane %v3737, 2
        %v3953 = vsel %vm2573, %v3948, %v3952
        %v3954 = vrot.slane %v3738, 2
        %v3955 = vrot.slane %v3740, 2
        %v3956 = vsel %vm2573, %v3954, %v3955
        %v3957 = vrot.slane %v3739, 2
        %v3958 = vrot.slane %v3741, 2
        %v3959 = vsel %vm2573, %v3957, %v3958
        %v3960 = vrot.slane %v3742, 2
        %v3961 = vsel %vm2573, %v3955, %v3960
        %v3962 = vrot.slane %v3743, 2
        %v3963 = vsel %vm2573, %v3958, %v3962
        %v3964 = vrot.slane %v3744, 2
        %v3965 = vrot.slane %v3746, 2
        %v3966 = vsel %vm2573, %v3964, %v3965
        %v3967 = vrot.slane %v3745, 2
        %v3968 = vrot.slane %v3747, 2
        %v3969 = vsel %vm2573, %v3967, %v3968
        %v3970 = vrot.slane %v3748, 2
        %v3971 = vsel %vm2573, %v3965, %v3970
        %v3972 = vrot.slane %v3749, 2
        %v3973 = vsel %vm2573, %v3968, %v3972
        %v3974 = vrot.slane %v3750, 2
        %v3975 = vrot.slane %v3752, 2
        %v3976 = vsel %vm2573, %v3974, %v3975
        %v3977 = vrot.slane %v3751, 2
        %v3978 = vrot.slane %v3753, 2
        %v3979 = vsel %vm2573, %v3977, %v3978
        %v3980 = vrot.slane %v3754, 2
        %v3981 = vsel %vm2573, %v3975, %v3980
        %v3982 = vrot.slane %v3755, 2
        %v3983 = vsel %vm2573, %v3978, %v3982
        %v3984 = vrot.slane %v3756, 2
        %v3985 = vrot.slane %v3758, 2
        %v3986 = vsel %vm2573, %v3984, %v3985
        %v3987 = vrot.slane %v3757, 2
        %v3988 = vrot.slane %v3759, 2
        %v3989 = vsel %vm2573, %v3987, %v3988
        %v3990 = vrot.slane %v3760, 2
        %v3991 = vsel %vm2573, %v3985, %v3990
        %v3992 = vrot.slane %v3761, 2
        %v3993 = vsel %vm2573, %v3988, %v3992
        %v3994 = vrot.slane %v3762, 2
        %v3995 = vrot.slane %v3764, 2
        %v3996 = vsel %vm2573, %v3994, %v3995
        %v3997 = vrot.slane %v3763, 2
        %v3998 = vrot.slane %v3765, 2
        %v3999 = vsel %vm2573, %v3997, %v3998
        %v4000 = vrot.slane %v3766, 2
        %v4001 = vsel %vm2573, %v3995, %v4000
        %v4002 = vrot.slane %v3767, 2
        %v4003 = vsel %vm2573, %v3998, %v4002
        %v4004 = vrot.slane %v3768, 2
        %v4005 = vrot.slane %v3770, 2
        %v4006 = vsel %vm2573, %v4004, %v4005
        %v4007 = vrot.slane %v3769, 2
        %v4008 = vrot.slane %v3771, 2
        %v4009 = vsel %vm2573, %v4007, %v4008
        %v4010 = vrot.slane %v3772, 2
        %v4011 = vsel %vm2573, %v4005, %v4010
        %v4012 = vrot.slane %v3773, 2
        %v4013 = vsel %vm2573, %v4008, %v4012
        %v4014 = vrot.slane %v3774, 2
        %v4015 = vrot.slane %v3776, 2
        %v4016 = vsel %vm2573, %v4014, %v4015
        %v4017 = vrot.slane %v3775, 2
        %v4018 = vrot.slane %v3777, 2
        %v4019 = vsel %vm2573, %v4017, %v4018
        %v4020 = vrot.slane %v3778, 2
        %v4021 = vsel %vm2573, %v4015, %v4020
        %v4022 = vrot.slane %v3779, 2
        %v4023 = vsel %vm2573, %v4018, %v4022
        %v4024 = vrot.slane %v3780, 2
        %v4025 = vrot.slane %v3782, 2
        %v4026 = vsel %vm2573, %v4024, %v4025
        %v4027 = vrot.slane %v3781, 2
        %v4028 = vrot.slane %v3783, 2
        %v4029 = vsel %vm2573, %v4027, %v4028
        %v4030 = vrot.slane %v3784, 2
        %v4031 = vsel %vm2573, %v4025, %v4030
        %v4032 = vrot.slane %v3785, 2
        %v4033 = vsel %vm2573, %v4028, %v4032
        %v4034 = vrot.slane %v3786, 2
        %v4035 = vrot.slane %v3788, 2
        %v4036 = vsel %vm2573, %v4034, %v4035
        %v4037 = vrot.slane %v3787, 2
        %v4038 = vrot.slane %v3789, 2
        %v4039 = vsel %vm2573, %v4037, %v4038
        %v4040 = vrot.slane %v3790, 2
        %v4041 = vsel %vm2573, %v4035, %v4040
        %v4042 = vrot.slane %v3791, 2
        %v4043 = vsel %vm2573, %v4038, %v4042
        %v4044 = vrot.slane %v3792, 2
        %v4045 = vrot.slane %v3794, 2
        %v4046 = vsel %vm2573, %v4044, %v4045
        %v4047 = vrot.slane %v3793, 2
        %v4048 = vrot.slane %v3795, 2
        %v4049 = vsel %vm2573, %v4047, %v4048
        %v4050 = vrot.slane %v3796, 2
        %v4051 = vsel %vm2573, %v4045, %v4050
        %v4052 = vrot.slane %v3797, 2
        %v4053 = vsel %vm2573, %v4048, %v4052
        %v4118 = vadd.f32 %v3577, %v3896
        %v4119 = vadd.f32 %v3578, %v3899
        %v4120 = vadd.f32 %v3579, %v3901
        %v4121 = vadd.f32 %v3580, %v3903
        %v4122 = vadd.f32 %v3581, %v3906
        %v4123 = vadd.f32 %v3582, %v3909
        %v4124 = vadd.f32 %v3583, %v3911
        %v4125 = vadd.f32 %v3584, %v3913
        %v4126 = vadd.f32 %v3585, %v3916
        %v4127 = vadd.f32 %v3586, %v3919
        %v4128 = vadd.f32 %v3587, %v3921
        %v4129 = vadd.f32 %v3588, %v3923
        %v4130 = vadd.f32 %v3589, %v3926
        %v4131 = vadd.f32 %v3590, %v3929
        %v4132 = vadd.f32 %v3591, %v3931
        %v4133 = vadd.f32 %v3592, %v3933
        %v4134 = vadd.f32 %v3593, %v3936
        %v4135 = vadd.f32 %v3594, %v3939
        %v4136 = vadd.f32 %v3595, %v3941
        %v4137 = vadd.f32 %v3596, %v3943
        %v4138 = vadd.f32 %v3597, %v3946
        %v4139 = vadd.f32 %v3598, %v3949
        %v4140 = vadd.f32 %v3599, %v3951
        %v4141 = vadd.f32 %v3600, %v3953
        %v4142 = vadd.f32 %v3601, %v3956
        %v4143 = vadd.f32 %v3602, %v3959
        %v4144 = vadd.f32 %v3603, %v3961
        %v4145 = vadd.f32 %v3604, %v3963
        %v4146 = vadd.f32 %v3605, %v3966
        %v4147 = vadd.f32 %v3606, %v3969
        %v4148 = vadd.f32 %v3607, %v3971
        %v4149 = vadd.f32 %v3608, %v3973
        %v4150 = vadd.f32 %v3609, %v3976
        %v4151 = vadd.f32 %v3610, %v3979
        %v4152 = vadd.f32 %v3611, %v3981
        %v4153 = vadd.f32 %v3612, %v3983
        %v4154 = vadd.f32 %v3613, %v3986
        %v4155 = vadd.f32 %v3614, %v3989
        %v4156 = vadd.f32 %v3615, %v3991
        %v4157 = vadd.f32 %v3616, %v3993
        %v4158 = vadd.f32 %v3617, %v3996
        %v4159 = vadd.f32 %v3618, %v3999
        %v4160 = vadd.f32 %v3619, %v4001
        %v4161 = vadd.f32 %v3620, %v4003
        %v4162 = vadd.f32 %v3621, %v4006
        %v4163 = vadd.f32 %v3622, %v4009
        %v4164 = vadd.f32 %v3623, %v4011
        %v4165 = vadd.f32 %v3624, %v4013
        %v4166 = vadd.f32 %v3625, %v4016
        %v4167 = vadd.f32 %v3626, %v4019
        %v4168 = vadd.f32 %v3627, %v4021
        %v4169 = vadd.f32 %v3628, %v4023
        %v4170 = vadd.f32 %v3629, %v4026
        %v4171 = vadd.f32 %v3630, %v4029
        %v4172 = vadd.f32 %v3631, %v4031
        %v4173 = vadd.f32 %v3632, %v4033
        %v4174 = vadd.f32 %v3633, %v4036
        %v4175 = vadd.f32 %v3634, %v4039
        %v4176 = vadd.f32 %v3635, %v4041
        %v4177 = vadd.f32 %v3636, %v4043
        %v4178 = vadd.f32 %v3637, %v4046
        %v4179 = vadd.f32 %v3638, %v4049
        %v4180 = vadd.f32 %v3639, %v4051
        %v4181 = vadd.f32 %v3640, %v4053
        %s4182 = scalar_lea.vmem [#allocation2], 48
        %v4183 = vld [vmem:[%s4182] sm:$0xff]
        %v4184 = vld [vmem:[%s4182 + $0x8] sm:$0xff]
        %v4185 = vld [vmem:[%s4182 + $0x18] sm:$0xff]
        %v4186 = vld [vmem:[%s4182 + $0x20] sm:$0xff]
        %v4187 = vld [vmem:[%s4182 + $0x30] sm:$0xff]
        %v4188 = vld [vmem:[%s4182 + $0x38] sm:$0xff]
        %v4189 = vld [vmem:[%s4182 + $0x48] sm:$0xff]
        %v4190 = vld [vmem:[%s4182 + $0x50] sm:$0xff]
        %v4191 = vld [vmem:[%s4182 + $0x60] sm:$0xff]
        %v4192 = vld [vmem:[%s4182 + $0x68] sm:$0xff]
        %v4193 = vld [vmem:[%s4182 + $0x78] sm:$0xff]
        %v4194 = vld [vmem:[%s4182 + $0x80] sm:$0xff]
        %v4195 = vld [vmem:[%s4182 + $0x90] sm:$0xff]
        %v4196 = vld [vmem:[%s4182 + $0x98] sm:$0xff]
        %v4197 = vld [vmem:[%s4182 + $0xa8] sm:$0xff]
        %v4198 = vld [vmem:[%s4182 + $0xb0] sm:$0xff]
        %v4199 = vld [vmem:[%s4182 + $0xc0] sm:$0xff]
        %v4200 = vld [vmem:[%s4182 + $0xc8] sm:$0xff]
        %v4201 = vld [vmem:[%s4182 + $0xd8] sm:$0xff]
        %v4202 = vld [vmem:[%s4182 + $0xe0] sm:$0xff]
        %v4203 = vld [vmem:[%s4182 + $0xf0] sm:$0xff]
        %v4204 = vld [vmem:[%s4182 + $0xf8] sm:$0xff]
        %v4205 = vld [vmem:[%s4182 + $0x108] sm:$0xff]
        %v4206 = vld [vmem:[%s4182 + $0x110] sm:$0xff]
        %v4207 = vld [vmem:[%s4182 + $0x120] sm:$0xff]
        %v4208 = vld [vmem:[%s4182 + $0x128] sm:$0xff]
        %v4209 = vld [vmem:[%s4182 + $0x138] sm:$0xff]
        %v4210 = vld [vmem:[%s4182 + $0x140] sm:$0xff]
        %v4211 = vld [vmem:[%s4182 + $0x150] sm:$0xff]
        %v4212 = vld [vmem:[%s4182 + $0x158] sm:$0xff]
        %v4213 = vld [vmem:[%s4182 + $0x168] sm:$0xff]
        %v4214 = vld [vmem:[%s4182 + $0x170] sm:$0xff]
        %v4215 = vunpack.c.l.bf16 %v4183
        %v4216 = vunpack.c.h.bf16 %v4183
        %v4217 = vunpack.c.l.bf16 %v4184
        %v4218 = vunpack.c.h.bf16 %v4184
        %v4219 = vunpack.c.l.bf16 %v4185
        %v4220 = vunpack.c.h.bf16 %v4185
        %v4221 = vunpack.c.l.bf16 %v4186
        %v4222 = vunpack.c.h.bf16 %v4186
        %v4223 = vunpack.c.l.bf16 %v4187
        %v4224 = vunpack.c.h.bf16 %v4187
        %v4225 = vunpack.c.l.bf16 %v4188
        %v4226 = vunpack.c.h.bf16 %v4188
        %v4227 = vunpack.c.l.bf16 %v4189
        %v4228 = vunpack.c.h.bf16 %v4189
        %v4229 = vunpack.c.l.bf16 %v4190
        %v4230 = vunpack.c.h.bf16 %v4190
        %v4231 = vunpack.c.l.bf16 %v4191
        %v4232 = vunpack.c.h.bf16 %v4191
        %v4233 = vunpack.c.l.bf16 %v4192
        %v4234 = vunpack.c.h.bf16 %v4192
        %v4235 = vunpack.c.l.bf16 %v4193
        %v4236 = vunpack.c.h.bf16 %v4193
        %v4237 = vunpack.c.l.bf16 %v4194
        %v4238 = vunpack.c.h.bf16 %v4194
        %v4239 = vunpack.c.l.bf16 %v4195
        %v4240 = vunpack.c.h.bf16 %v4195
        %v4241 = vunpack.c.l.bf16 %v4196
        %v4242 = vunpack.c.h.bf16 %v4196
        %v4243 = vunpack.c.l.bf16 %v4197
        %v4244 = vunpack.c.h.bf16 %v4197
        %v4245 = vunpack.c.l.bf16 %v4198
        %v4246 = vunpack.c.h.bf16 %v4198
        %v4247 = vunpack.c.l.bf16 %v4199
        %v4248 = vunpack.c.h.bf16 %v4199
        %v4249 = vunpack.c.l.bf16 %v4200
        %v4250 = vunpack.c.h.bf16 %v4200
        %v4251 = vunpack.c.l.bf16 %v4201
        %v4252 = vunpack.c.h.bf16 %v4201
        %v4253 = vunpack.c.l.bf16 %v4202
        %v4254 = vunpack.c.h.bf16 %v4202
        %v4255 = vunpack.c.l.bf16 %v4203
        %v4256 = vunpack.c.h.bf16 %v4203
        %v4257 = vunpack.c.l.bf16 %v4204
        %v4258 = vunpack.c.h.bf16 %v4204
        %v4259 = vunpack.c.l.bf16 %v4205
        %v4260 = vunpack.c.h.bf16 %v4205
        %v4261 = vunpack.c.l.bf16 %v4206
        %v4262 = vunpack.c.h.bf16 %v4206
        %v4263 = vunpack.c.l.bf16 %v4207
        %v4264 = vunpack.c.h.bf16 %v4207
        %v4265 = vunpack.c.l.bf16 %v4208
        %v4266 = vunpack.c.h.bf16 %v4208
        %v4267 = vunpack.c.l.bf16 %v4209
        %v4268 = vunpack.c.h.bf16 %v4209
        %v4269 = vunpack.c.l.bf16 %v4210
        %v4270 = vunpack.c.h.bf16 %v4210
        %v4271 = vunpack.c.l.bf16 %v4211
        %v4272 = vunpack.c.h.bf16 %v4211
        %v4273 = vunpack.c.l.bf16 %v4212
        %v4274 = vunpack.c.h.bf16 %v4212
        %v4275 = vunpack.c.l.bf16 %v4213
        %v4276 = vunpack.c.h.bf16 %v4213
        %v4277 = vunpack.c.l.bf16 %v4214
        %v4278 = vunpack.c.h.bf16 %v4214
        %s4279 = scalar_lea.vmem %s3, 12
        %v4280 = vld [vmem:[%s4279] sm:$0x3]
        %v4282 = vlaneseq
        %v4283 = vshrl.u32 %v4282, 7
        %v4284 = vsub.s32 0, %v4283
        %v4285 = vrot.slane %v4280, %v4284
        %v4286 = vlaneseq
        %v4287 = vshrl.u32 %v4286, 7
        %v4288 = vsub.s32 1, %v4287
        %v4289 = vrot.slane %v4280, %v4288
        %v4292 = vmul.f32 %v4215, %v4285
        %v4293 = vmul.f32 %v4216, %v4289
        %v4294 = vmul.f32 %v4217, %v4285
        %v4295 = vmul.f32 %v4218, %v4289
        %v4296 = vmul.f32 %v4219, %v4285
        %v4297 = vmul.f32 %v4220, %v4289
        %v4298 = vmul.f32 %v4221, %v4285
        %v4299 = vmul.f32 %v4222, %v4289
        %v4300 = vmul.f32 %v4223, %v4285
        %v4301 = vmul.f32 %v4224, %v4289
        %v4302 = vmul.f32 %v4225, %v4285
        %v4303 = vmul.f32 %v4226, %v4289
        %v4304 = vmul.f32 %v4227, %v4285
        %v4305 = vmul.f32 %v4228, %v4289
        %v4306 = vmul.f32 %v4229, %v4285
        %v4307 = vmul.f32 %v4230, %v4289
        %v4308 = vmul.f32 %v4231, %v4285
        %v4309 = vmul.f32 %v4232, %v4289
        %v4310 = vmul.f32 %v4233, %v4285
        %v4311 = vmul.f32 %v4234, %v4289
        %v4312 = vmul.f32 %v4235, %v4285
        %v4313 = vmul.f32 %v4236, %v4289
        %v4314 = vmul.f32 %v4237, %v4285
        %v4315 = vmul.f32 %v4238, %v4289
        %v4316 = vmul.f32 %v4239, %v4285
        %v4317 = vmul.f32 %v4240, %v4289
        %v4318 = vmul.f32 %v4241, %v4285
        %v4319 = vmul.f32 %v4242, %v4289
        %v4320 = vmul.f32 %v4243, %v4285
        %v4321 = vmul.f32 %v4244, %v4289
        %v4322 = vmul.f32 %v4245, %v4285
        %v4323 = vmul.f32 %v4246, %v4289
        %v4324 = vmul.f32 %v4247, %v4285
        %v4325 = vmul.f32 %v4248, %v4289
        %v4326 = vmul.f32 %v4249, %v4285
        %v4327 = vmul.f32 %v4250, %v4289
        %v4328 = vmul.f32 %v4251, %v4285
        %v4329 = vmul.f32 %v4252, %v4289
        %v4330 = vmul.f32 %v4253, %v4285
        %v4331 = vmul.f32 %v4254, %v4289
        %v4332 = vmul.f32 %v4255, %v4285
        %v4333 = vmul.f32 %v4256, %v4289
        %v4334 = vmul.f32 %v4257, %v4285
        %v4335 = vmul.f32 %v4258, %v4289
        %v4336 = vmul.f32 %v4259, %v4285
        %v4337 = vmul.f32 %v4260, %v4289
        %v4338 = vmul.f32 %v4261, %v4285
        %v4339 = vmul.f32 %v4262, %v4289
        %v4340 = vmul.f32 %v4263, %v4285
        %v4341 = vmul.f32 %v4264, %v4289
        %v4342 = vmul.f32 %v4265, %v4285
        %v4343 = vmul.f32 %v4266, %v4289
        %v4344 = vmul.f32 %v4267, %v4285
        %v4345 = vmul.f32 %v4268, %v4289
        %v4346 = vmul.f32 %v4269, %v4285
        %v4347 = vmul.f32 %v4270, %v4289
        %v4348 = vmul.f32 %v4271, %v4285
        %v4349 = vmul.f32 %v4272, %v4289
        %v4350 = vmul.f32 %v4273, %v4285
        %v4351 = vmul.f32 %v4274, %v4289
        %v4352 = vmul.f32 %v4275, %v4285
        %v4353 = vmul.f32 %v4276, %v4289
        %v4354 = vmul.f32 %v4277, %v4285
        %v4355 = vmul.f32 %v4278, %v4289
        %v4356 = vadd.f32 %v4118, %v4292
        %v4357 = vadd.f32 %v4119, %v4293
        %v4358 = vadd.f32 %v4120, %v4294
        %v4359 = vadd.f32 %v4121, %v4295
        %v4360 = vadd.f32 %v4122, %v4296
        %v4361 = vadd.f32 %v4123, %v4297
        %v4362 = vadd.f32 %v4124, %v4298
        %v4363 = vadd.f32 %v4125, %v4299
        %v4364 = vadd.f32 %v4126, %v4300
        %v4365 = vadd.f32 %v4127, %v4301
        %v4366 = vadd.f32 %v4128, %v4302
        %v4367 = vadd.f32 %v4129, %v4303
        %v4368 = vadd.f32 %v4130, %v4304
        %v4369 = vadd.f32 %v4131, %v4305
        %v4370 = vadd.f32 %v4132, %v4306
        %v4371 = vadd.f32 %v4133, %v4307
        %v4372 = vadd.f32 %v4134, %v4308
        %v4373 = vadd.f32 %v4135, %v4309
        %v4374 = vadd.f32 %v4136, %v4310
        %v4375 = vadd.f32 %v4137, %v4311
        %v4376 = vadd.f32 %v4138, %v4312
        %v4377 = vadd.f32 %v4139, %v4313
        %v4378 = vadd.f32 %v4140, %v4314
        %v4379 = vadd.f32 %v4141, %v4315
        %v4380 = vadd.f32 %v4142, %v4316
        %v4381 = vadd.f32 %v4143, %v4317
        %v4382 = vadd.f32 %v4144, %v4318
        %v4383 = vadd.f32 %v4145, %v4319
        %v4384 = vadd.f32 %v4146, %v4320
        %v4385 = vadd.f32 %v4147, %v4321
        %v4386 = vadd.f32 %v4148, %v4322
        %v4387 = vadd.f32 %v4149, %v4323
        %v4388 = vadd.f32 %v4150, %v4324
        %v4389 = vadd.f32 %v4151, %v4325
        %v4390 = vadd.f32 %v4152, %v4326
        %v4391 = vadd.f32 %v4153, %v4327
        %v4392 = vadd.f32 %v4154, %v4328
        %v4393 = vadd.f32 %v4155, %v4329
        %v4394 = vadd.f32 %v4156, %v4330
        %v4395 = vadd.f32 %v4157, %v4331
        %v4396 = vadd.f32 %v4158, %v4332
        %v4397 = vadd.f32 %v4159, %v4333
        %v4398 = vadd.f32 %v4160, %v4334
        %v4399 = vadd.f32 %v4161, %v4335
        %v4400 = vadd.f32 %v4162, %v4336
        %v4401 = vadd.f32 %v4163, %v4337
        %v4402 = vadd.f32 %v4164, %v4338
        %v4403 = vadd.f32 %v4165, %v4339
        %v4404 = vadd.f32 %v4166, %v4340
        %v4405 = vadd.f32 %v4167, %v4341
        %v4406 = vadd.f32 %v4168, %v4342
        %v4407 = vadd.f32 %v4169, %v4343
        %v4408 = vadd.f32 %v4170, %v4344
        %v4409 = vadd.f32 %v4171, %v4345
        %v4410 = vadd.f32 %v4172, %v4346
        %v4411 = vadd.f32 %v4173, %v4347
        %v4412 = vadd.f32 %v4174, %v4348
        %v4413 = vadd.f32 %v4175, %v4349
        %v4414 = vadd.f32 %v4176, %v4350
        %v4415 = vadd.f32 %v4177, %v4351
        %v4416 = vadd.f32 %v4178, %v4352
        %v4417 = vadd.f32 %v4179, %v4353
        %v4418 = vadd.f32 %v4180, %v4354
        %v4419 = vadd.f32 %v4181, %v4355
        %v4420 = vld [vmem:[%s4182 + $0x10] sm:$0x11]
        %v4421 = vld [vmem:[%s4182 + $0x28] sm:$0x11]
        %v4422 = vld [vmem:[%s4182 + $0x40] sm:$0x11]
        %v4423 = vld [vmem:[%s4182 + $0x58] sm:$0x11]
        %v4424 = vld [vmem:[%s4182 + $0x70] sm:$0x11]
        %v4425 = vld [vmem:[%s4182 + $0x88] sm:$0x11]
        %v4426 = vld [vmem:[%s4182 + $0xa0] sm:$0x11]
        %v4427 = vld [vmem:[%s4182 + $0xb8] sm:$0x11]
        %v4428 = vld [vmem:[%s4182 + $0xd0] sm:$0x11]
        %v4429 = vld [vmem:[%s4182 + $0xe8] sm:$0x11]
        %v4430 = vld [vmem:[%s4182 + $0x100] sm:$0x11]
        %v4431 = vld [vmem:[%s4182 + $0x118] sm:$0x11]
        %v4432 = vld [vmem:[%s4182 + $0x130] sm:$0x11]
        %v4433 = vld [vmem:[%s4182 + $0x148] sm:$0x11]
        %v4434 = vld [vmem:[%s4182 + $0x160] sm:$0x11]
        %v4435 = vld [vmem:[%s4182 + $0x178] sm:$0x11]
        %v4436 = vunpack.c.l.bf16 %v4420
        %v4437 = vunpack.c.h.bf16 %v4420
        %v4438 = vunpack.c.l.bf16 %v4421
        %v4439 = vunpack.c.h.bf16 %v4421
        %v4440 = vunpack.c.l.bf16 %v4422
        %v4441 = vunpack.c.h.bf16 %v4422
        %v4442 = vunpack.c.l.bf16 %v4423
        %v4443 = vunpack.c.h.bf16 %v4423
        %v4444 = vunpack.c.l.bf16 %v4424
        %v4445 = vunpack.c.h.bf16 %v4424
        %v4446 = vunpack.c.l.bf16 %v4425
        %v4447 = vunpack.c.h.bf16 %v4425
        %v4448 = vunpack.c.l.bf16 %v4426
        %v4449 = vunpack.c.h.bf16 %v4426
        %v4450 = vunpack.c.l.bf16 %v4427
        %v4451 = vunpack.c.h.bf16 %v4427
        %v4452 = vunpack.c.l.bf16 %v4428
        %v4453 = vunpack.c.h.bf16 %v4428
        %v4454 = vunpack.c.l.bf16 %v4429
        %v4455 = vunpack.c.h.bf16 %v4429
        %v4456 = vunpack.c.l.bf16 %v4430
        %v4457 = vunpack.c.h.bf16 %v4430
        %v4458 = vunpack.c.l.bf16 %v4431
        %v4459 = vunpack.c.h.bf16 %v4431
        %v4460 = vunpack.c.l.bf16 %v4432
        %v4461 = vunpack.c.h.bf16 %v4432
        %v4462 = vunpack.c.l.bf16 %v4433
        %v4463 = vunpack.c.h.bf16 %v4433
        %v4464 = vunpack.c.l.bf16 %v4434
        %v4465 = vunpack.c.h.bf16 %v4434
        %v4466 = vunpack.c.l.bf16 %v4435
        %v4467 = vunpack.c.h.bf16 %v4435
        %s4468 = scalar_lea.vmem %s3, 14
        %v4469 = vld [vmem:[%s4468] sm:$0x3]
        %v4471 = vlaneseq
        %v4472 = vshrl.u32 %v4471, 7
        %v4473 = vsub.s32 0, %v4472
        %v4474 = vrot.slane %v4469, %v4473
        %v4475 = vlaneseq
        %v4476 = vshrl.u32 %v4475, 7
        %v4477 = vsub.s32 1, %v4476
        %v4478 = vrot.slane %v4469, %v4477
        %v4481 = vmul.f32 %v4215, %v4474
        %v4482 = vmul.f32 %v4216, %v4478
        %v4483 = vmul.f32 %v4217, %v4474
        %v4484 = vmul.f32 %v4218, %v4478
        %v4485 = vmul.f32 %v4436, %v4474
        %v4486 = vmul.f32 %v4437, %v4478
        %v4487 = vmul.f32 %v4219, %v4474
        %v4488 = vmul.f32 %v4220, %v4478
        %v4489 = vmul.f32 %v4221, %v4474
        %v4490 = vmul.f32 %v4222, %v4478
        %v4491 = vmul.f32 %v4438, %v4474
        %v4492 = vmul.f32 %v4439, %v4478
        %v4493 = vmul.f32 %v4223, %v4474
        %v4494 = vmul.f32 %v4224, %v4478
        %v4495 = vmul.f32 %v4225, %v4474
        %v4496 = vmul.f32 %v4226, %v4478
        %v4497 = vmul.f32 %v4440, %v4474
        %v4498 = vmul.f32 %v4441, %v4478
        %v4499 = vmul.f32 %v4227, %v4474
        %v4500 = vmul.f32 %v4228, %v4478
        %v4501 = vmul.f32 %v4229, %v4474
        %v4502 = vmul.f32 %v4230, %v4478
        %v4503 = vmul.f32 %v4442, %v4474
        %v4504 = vmul.f32 %v4443, %v4478
        %v4505 = vmul.f32 %v4231, %v4474
        %v4506 = vmul.f32 %v4232, %v4478
        %v4507 = vmul.f32 %v4233, %v4474
        %v4508 = vmul.f32 %v4234, %v4478
        %v4509 = vmul.f32 %v4444, %v4474
        %v4510 = vmul.f32 %v4445, %v4478
        %v4511 = vmul.f32 %v4235, %v4474
        %v4512 = vmul.f32 %v4236, %v4478
        %v4513 = vmul.f32 %v4237, %v4474
        %v4514 = vmul.f32 %v4238, %v4478
        %v4515 = vmul.f32 %v4446, %v4474
        %v4516 = vmul.f32 %v4447, %v4478
        %v4517 = vmul.f32 %v4239, %v4474
        %v4518 = vmul.f32 %v4240, %v4478
        %v4519 = vmul.f32 %v4241, %v4474
        %v4520 = vmul.f32 %v4242, %v4478
        %v4521 = vmul.f32 %v4448, %v4474
        %v4522 = vmul.f32 %v4449, %v4478
        %v4523 = vmul.f32 %v4243, %v4474
        %v4524 = vmul.f32 %v4244, %v4478
        %v4525 = vmul.f32 %v4245, %v4474
        %v4526 = vmul.f32 %v4246, %v4478
        %v4527 = vmul.f32 %v4450, %v4474
        %v4528 = vmul.f32 %v4451, %v4478
        %v4529 = vmul.f32 %v4247, %v4474
        %v4530 = vmul.f32 %v4248, %v4478
        %v4531 = vmul.f32 %v4249, %v4474
        %v4532 = vmul.f32 %v4250, %v4478
        %v4533 = vmul.f32 %v4452, %v4474
        %v4534 = vmul.f32 %v4453, %v4478
        %v4535 = vmul.f32 %v4251, %v4474
        %v4536 = vmul.f32 %v4252, %v4478
        %v4537 = vmul.f32 %v4253, %v4474
        %v4538 = vmul.f32 %v4254, %v4478
        %v4539 = vmul.f32 %v4454, %v4474
        %v4540 = vmul.f32 %v4455, %v4478
        %v4541 = vmul.f32 %v4255, %v4474
        %v4542 = vmul.f32 %v4256, %v4478
        %v4543 = vmul.f32 %v4257, %v4474
        %v4544 = vmul.f32 %v4258, %v4478
        %v4545 = vmul.f32 %v4456, %v4474
        %v4546 = vmul.f32 %v4457, %v4478
        %v4547 = vmul.f32 %v4259, %v4474
        %v4548 = vmul.f32 %v4260, %v4478
        %v4549 = vmul.f32 %v4261, %v4474
        %v4550 = vmul.f32 %v4262, %v4478
        %v4551 = vmul.f32 %v4458, %v4474
        %v4552 = vmul.f32 %v4459, %v4478
        %v4553 = vmul.f32 %v4263, %v4474
        %v4554 = vmul.f32 %v4264, %v4478
        %v4555 = vmul.f32 %v4265, %v4474
        %v4556 = vmul.f32 %v4266, %v4478
        %v4557 = vmul.f32 %v4460, %v4474
        %v4558 = vmul.f32 %v4461, %v4478
        %v4559 = vmul.f32 %v4267, %v4474
        %v4560 = vmul.f32 %v4268, %v4478
        %v4561 = vmul.f32 %v4269, %v4474
        %v4562 = vmul.f32 %v4270, %v4478
        %v4563 = vmul.f32 %v4462, %v4474
        %v4564 = vmul.f32 %v4463, %v4478
        %v4565 = vmul.f32 %v4271, %v4474
        %v4566 = vmul.f32 %v4272, %v4478
        %v4567 = vmul.f32 %v4273, %v4474
        %v4568 = vmul.f32 %v4274, %v4478
        %v4569 = vmul.f32 %v4464, %v4474
        %v4570 = vmul.f32 %v4465, %v4478
        %v4571 = vmul.f32 %v4275, %v4474
        %v4572 = vmul.f32 %v4276, %v4478
        %v4573 = vmul.f32 %v4277, %v4474
        %v4574 = vmul.f32 %v4278, %v4478
        %v4575 = vmul.f32 %v4466, %v4474
        %v4576 = vmul.f32 %v4467, %v4478
        %v4673 = vrot.slane %v4481, 1
        %v4674 = vrot.slane %v4483, 1
        %v4675 = vsel %vm2031, %v4673, %v4674
        %v4676 = vrot.slane %v4482, 1
        %v4677 = vrot.slane %v4484, 1
        %v4678 = vsel %vm2031, %v4676, %v4677
        %v4679 = vrot.slane %v4485, 1
        %v4680 = vsel %vm2031, %v4674, %v4679
        %v4681 = vrot.slane %v4486, 1
        %v4682 = vsel %vm2031, %v4677, %v4681
        %v4683 = vrot.slane %v4487, 1
        %v4684 = vrot.slane %v4489, 1
        %v4685 = vsel %vm2031, %v4683, %v4684
        %v4686 = vrot.slane %v4488, 1
        %v4687 = vrot.slane %v4490, 1
        %v4688 = vsel %vm2031, %v4686, %v4687
        %v4689 = vrot.slane %v4491, 1
        %v4690 = vsel %vm2031, %v4684, %v4689
        %v4691 = vrot.slane %v4492, 1
        %v4692 = vsel %vm2031, %v4687, %v4691
        %v4693 = vrot.slane %v4493, 1
        %v4694 = vrot.slane %v4495, 1
        %v4695 = vsel %vm2031, %v4693, %v4694
        %v4696 = vrot.slane %v4494, 1
        %v4697 = vrot.slane %v4496, 1
        %v4698 = vsel %vm2031, %v4696, %v4697
        %v4699 = vrot.slane %v4497, 1
        %v4700 = vsel %vm2031, %v4694, %v4699
        %v4701 = vrot.slane %v4498, 1
        %v4702 = vsel %vm2031, %v4697, %v4701
        %v4703 = vrot.slane %v4499, 1
        %v4704 = vrot.slane %v4501, 1
        %v4705 = vsel %vm2031, %v4703, %v4704
        %v4706 = vrot.slane %v4500, 1
        %v4707 = vrot.slane %v4502, 1
        %v4708 = vsel %vm2031, %v4706, %v4707
        %v4709 = vrot.slane %v4503, 1
        %v4710 = vsel %vm2031, %v4704, %v4709
        %v4711 = vrot.slane %v4504, 1
        %v4712 = vsel %vm2031, %v4707, %v4711
        %v4713 = vrot.slane %v4505, 1
        %v4714 = vrot.slane %v4507, 1
        %v4715 = vsel %vm2031, %v4713, %v4714
        %v4716 = vrot.slane %v4506, 1
        %v4717 = vrot.slane %v4508, 1
        %v4718 = vsel %vm2031, %v4716, %v4717
        %v4719 = vrot.slane %v4509, 1
        %v4720 = vsel %vm2031, %v4714, %v4719
        %v4721 = vrot.slane %v4510, 1
        %v4722 = vsel %vm2031, %v4717, %v4721
        %v4723 = vrot.slane %v4511, 1
        %v4724 = vrot.slane %v4513, 1
        %v4725 = vsel %vm2031, %v4723, %v4724
        %v4726 = vrot.slane %v4512, 1
        %v4727 = vrot.slane %v4514, 1
        %v4728 = vsel %vm2031, %v4726, %v4727
        %v4729 = vrot.slane %v4515, 1
        %v4730 = vsel %vm2031, %v4724, %v4729
        %v4731 = vrot.slane %v4516, 1
        %v4732 = vsel %vm2031, %v4727, %v4731
        %v4733 = vrot.slane %v4517, 1
        %v4734 = vrot.slane %v4519, 1
        %v4735 = vsel %vm2031, %v4733, %v4734
        %v4736 = vrot.slane %v4518, 1
        %v4737 = vrot.slane %v4520, 1
        %v4738 = vsel %vm2031, %v4736, %v4737
        %v4739 = vrot.slane %v4521, 1
        %v4740 = vsel %vm2031, %v4734, %v4739
        %v4741 = vrot.slane %v4522, 1
        %v4742 = vsel %vm2031, %v4737, %v4741
        %v4743 = vrot.slane %v4523, 1
        %v4744 = vrot.slane %v4525, 1
        %v4745 = vsel %vm2031, %v4743, %v4744
        %v4746 = vrot.slane %v4524, 1
        %v4747 = vrot.slane %v4526, 1
        %v4748 = vsel %vm2031, %v4746, %v4747
        %v4749 = vrot.slane %v4527, 1
        %v4750 = vsel %vm2031, %v4744, %v4749
        %v4751 = vrot.slane %v4528, 1
        %v4752 = vsel %vm2031, %v4747, %v4751
        %v4753 = vrot.slane %v4529, 1
        %v4754 = vrot.slane %v4531, 1
        %v4755 = vsel %vm2031, %v4753, %v4754
        %v4756 = vrot.slane %v4530, 1
        %v4757 = vrot.slane %v4532, 1
        %v4758 = vsel %vm2031, %v4756, %v4757
        %v4759 = vrot.slane %v4533, 1
        %v4760 = vsel %vm2031, %v4754, %v4759
        %v4761 = vrot.slane %v4534, 1
        %v4762 = vsel %vm2031, %v4757, %v4761
        %v4763 = vrot.slane %v4535, 1
        %v4764 = vrot.slane %v4537, 1
        %v4765 = vsel %vm2031, %v4763, %v4764
        %v4766 = vrot.slane %v4536, 1
        %v4767 = vrot.slane %v4538, 1
        %v4768 = vsel %vm2031, %v4766, %v4767
        %v4769 = vrot.slane %v4539, 1
        %v4770 = vsel %vm2031, %v4764, %v4769
        %v4771 = vrot.slane %v4540, 1
        %v4772 = vsel %vm2031, %v4767, %v4771
        %v4773 = vrot.slane %v4541, 1
        %v4774 = vrot.slane %v4543, 1
        %v4775 = vsel %vm2031, %v4773, %v4774
        %v4776 = vrot.slane %v4542, 1
        %v4777 = vrot.slane %v4544, 1
        %v4778 = vsel %vm2031, %v4776, %v4777
        %v4779 = vrot.slane %v4545, 1
        %v4780 = vsel %vm2031, %v4774, %v4779
        %v4781 = vrot.slane %v4546, 1
        %v4782 = vsel %vm2031, %v4777, %v4781
        %v4783 = vrot.slane %v4547, 1
        %v4784 = vrot.slane %v4549, 1
        %v4785 = vsel %vm2031, %v4783, %v4784
        %v4786 = vrot.slane %v4548, 1
        %v4787 = vrot.slane %v4550, 1
        %v4788 = vsel %vm2031, %v4786, %v4787
        %v4789 = vrot.slane %v4551, 1
        %v4790 = vsel %vm2031, %v4784, %v4789
        %v4791 = vrot.slane %v4552, 1
        %v4792 = vsel %vm2031, %v4787, %v4791
        %v4793 = vrot.slane %v4553, 1
        %v4794 = vrot.slane %v4555, 1
        %v4795 = vsel %vm2031, %v4793, %v4794
        %v4796 = vrot.slane %v4554, 1
        %v4797 = vrot.slane %v4556, 1
        %v4798 = vsel %vm2031, %v4796, %v4797
        %v4799 = vrot.slane %v4557, 1
        %v4800 = vsel %vm2031, %v4794, %v4799
        %v4801 = vrot.slane %v4558, 1
        %v4802 = vsel %vm2031, %v4797, %v4801
        %v4803 = vrot.slane %v4559, 1
        %v4804 = vrot.slane %v4561, 1
        %v4805 = vsel %vm2031, %v4803, %v4804
        %v4806 = vrot.slane %v4560, 1
        %v4807 = vrot.slane %v4562, 1
        %v4808 = vsel %vm2031, %v4806, %v4807
        %v4809 = vrot.slane %v4563, 1
        %v4810 = vsel %vm2031, %v4804, %v4809
        %v4811 = vrot.slane %v4564, 1
        %v4812 = vsel %vm2031, %v4807, %v4811
        %v4813 = vrot.slane %v4565, 1
        %v4814 = vrot.slane %v4567, 1
        %v4815 = vsel %vm2031, %v4813, %v4814
        %v4816 = vrot.slane %v4566, 1
        %v4817 = vrot.slane %v4568, 1
        %v4818 = vsel %vm2031, %v4816, %v4817
        %v4819 = vrot.slane %v4569, 1
        %v4820 = vsel %vm2031, %v4814, %v4819
        %v4821 = vrot.slane %v4570, 1
        %v4822 = vsel %vm2031, %v4817, %v4821
        %v4823 = vrot.slane %v4571, 1
        %v4824 = vrot.slane %v4573, 1
        %v4825 = vsel %vm2031, %v4823, %v4824
        %v4826 = vrot.slane %v4572, 1
        %v4827 = vrot.slane %v4574, 1
        %v4828 = vsel %vm2031, %v4826, %v4827
        %v4829 = vrot.slane %v4575, 1
        %v4830 = vsel %vm2031, %v4824, %v4829
        %v4831 = vrot.slane %v4576, 1
        %v4832 = vsel %vm2031, %v4827, %v4831
        %v4897 = vadd.f32 %v4356, %v4675
        %v4898 = vadd.f32 %v4357, %v4678
        %v4899 = vadd.f32 %v4358, %v4680
        %v4900 = vadd.f32 %v4359, %v4682
        %v4901 = vadd.f32 %v4360, %v4685
        %v4902 = vadd.f32 %v4361, %v4688
        %v4903 = vadd.f32 %v4362, %v4690
        %v4904 = vadd.f32 %v4363, %v4692
        %v4905 = vadd.f32 %v4364, %v4695
        %v4906 = vadd.f32 %v4365, %v4698
        %v4907 = vadd.f32 %v4366, %v4700
        %v4908 = vadd.f32 %v4367, %v4702
        %v4909 = vadd.f32 %v4368, %v4705
        %v4910 = vadd.f32 %v4369, %v4708
        %v4911 = vadd.f32 %v4370, %v4710
        %v4912 = vadd.f32 %v4371, %v4712
        %v4913 = vadd.f32 %v4372, %v4715
        %v4914 = vadd.f32 %v4373, %v4718
        %v4915 = vadd.f32 %v4374, %v4720
        %v4916 = vadd.f32 %v4375, %v4722
        %v4917 = vadd.f32 %v4376, %v4725
        %v4918 = vadd.f32 %v4377, %v4728
        %v4919 = vadd.f32 %v4378, %v4730
        %v4920 = vadd.f32 %v4379, %v4732
        %v4921 = vadd.f32 %v4380, %v4735
        %v4922 = vadd.f32 %v4381, %v4738
        %v4923 = vadd.f32 %v4382, %v4740
        %v4924 = vadd.f32 %v4383, %v4742
        %v4925 = vadd.f32 %v4384, %v4745
        %v4926 = vadd.f32 %v4385, %v4748
        %v4927 = vadd.f32 %v4386, %v4750
        %v4928 = vadd.f32 %v4387, %v4752
        %v4929 = vadd.f32 %v4388, %v4755
        %v4930 = vadd.f32 %v4389, %v4758
        %v4931 = vadd.f32 %v4390, %v4760
        %v4932 = vadd.f32 %v4391, %v4762
        %v4933 = vadd.f32 %v4392, %v4765
        %v4934 = vadd.f32 %v4393, %v4768
        %v4935 = vadd.f32 %v4394, %v4770
        %v4936 = vadd.f32 %v4395, %v4772
        %v4937 = vadd.f32 %v4396, %v4775
        %v4938 = vadd.f32 %v4397, %v4778
        %v4939 = vadd.f32 %v4398, %v4780
        %v4940 = vadd.f32 %v4399, %v4782
        %v4941 = vadd.f32 %v4400, %v4785
        %v4942 = vadd.f32 %v4401, %v4788
        %v4943 = vadd.f32 %v4402, %v4790
        %v4944 = vadd.f32 %v4403, %v4792
        %v4945 = vadd.f32 %v4404, %v4795
        %v4946 = vadd.f32 %v4405, %v4798
        %v4947 = vadd.f32 %v4406, %v4800
        %v4948 = vadd.f32 %v4407, %v4802
        %v4949 = vadd.f32 %v4408, %v4805
        %v4950 = vadd.f32 %v4409, %v4808
        %v4951 = vadd.f32 %v4410, %v4810
        %v4952 = vadd.f32 %v4411, %v4812
        %v4953 = vadd.f32 %v4412, %v4815
        %v4954 = vadd.f32 %v4413, %v4818
        %v4955 = vadd.f32 %v4414, %v4820
        %v4956 = vadd.f32 %v4415, %v4822
        %v4957 = vadd.f32 %v4416, %v4825
        %v4958 = vadd.f32 %v4417, %v4828
        %v4959 = vadd.f32 %v4418, %v4830
        %v4960 = vadd.f32 %v4419, %v4832
        %v4961 = vld [vmem:[%s4182] sm:$0xee]
        %v4962 = vld [vmem:[%s4182 + $0x18] sm:$0xee]
        %v4963 = vld [vmem:[%s4182 + $0x30] sm:$0xee]
        %v4964 = vld [vmem:[%s4182 + $0x48] sm:$0xee]
        %v4965 = vld [vmem:[%s4182 + $0x60] sm:$0xee]
        %v4966 = vld [vmem:[%s4182 + $0x78] sm:$0xee]
        %v4967 = vld [vmem:[%s4182 + $0x90] sm:$0xee]
        %v4968 = vld [vmem:[%s4182 + $0xa8] sm:$0xee]
        %v4969 = vld [vmem:[%s4182 + $0xc0] sm:$0xee]
        %v4970 = vld [vmem:[%s4182 + $0xd8] sm:$0xee]
        %v4971 = vld [vmem:[%s4182 + $0xf0] sm:$0xee]
        %v4972 = vld [vmem:[%s4182 + $0x108] sm:$0xee]
        %v4973 = vld [vmem:[%s4182 + $0x120] sm:$0xee]
        %v4974 = vld [vmem:[%s4182 + $0x138] sm:$0xee]
        %v4975 = vld [vmem:[%s4182 + $0x150] sm:$0xee]
        %v4976 = vld [vmem:[%s4182 + $0x168] sm:$0xee]
        %v4977 = vunpack.c.l.bf16 %v4961
        %v4978 = vunpack.c.h.bf16 %v4961
        %v4979 = vunpack.c.l.bf16 %v4962
        %v4980 = vunpack.c.h.bf16 %v4962
        %v4981 = vunpack.c.l.bf16 %v4963
        %v4982 = vunpack.c.h.bf16 %v4963
        %v4983 = vunpack.c.l.bf16 %v4964
        %v4984 = vunpack.c.h.bf16 %v4964
        %v4985 = vunpack.c.l.bf16 %v4965
        %v4986 = vunpack.c.h.bf16 %v4965
        %v4987 = vunpack.c.l.bf16 %v4966
        %v4988 = vunpack.c.h.bf16 %v4966
        %v4989 = vunpack.c.l.bf16 %v4967
        %v4990 = vunpack.c.h.bf16 %v4967
        %v4991 = vunpack.c.l.bf16 %v4968
        %v4992 = vunpack.c.h.bf16 %v4968
        %v4993 = vunpack.c.l.bf16 %v4969
        %v4994 = vunpack.c.h.bf16 %v4969
        %v4995 = vunpack.c.l.bf16 %v4970
        %v4996 = vunpack.c.h.bf16 %v4970
        %v4997 = vunpack.c.l.bf16 %v4971
        %v4998 = vunpack.c.h.bf16 %v4971
        %v4999 = vunpack.c.l.bf16 %v4972
        %v5000 = vunpack.c.h.bf16 %v4972
        %v5001 = vunpack.c.l.bf16 %v4973
        %v5002 = vunpack.c.h.bf16 %v4973
        %v5003 = vunpack.c.l.bf16 %v4974
        %v5004 = vunpack.c.h.bf16 %v4974
        %v5005 = vunpack.c.l.bf16 %v4975
        %v5006 = vunpack.c.h.bf16 %v4975
        %v5007 = vunpack.c.l.bf16 %v4976
        %v5008 = vunpack.c.h.bf16 %v4976
        %s5009 = scalar_lea.vmem %s3, 16
        %v5010 = vld [vmem:[%s5009] sm:$0x3]
        %v5012 = vlaneseq
        %v5013 = vshrl.u32 %v5012, 7
        %v5014 = vsub.s32 0, %v5013
        %v5015 = vrot.slane %v5010, %v5014
        %v5016 = vlaneseq
        %v5017 = vshrl.u32 %v5016, 7
        %v5018 = vsub.s32 1, %v5017
        %v5019 = vrot.slane %v5010, %v5018
        %v5022 = vmul.f32 %v4977, %v5015
        %v5023 = vmul.f32 %v4978, %v5019
        %v5024 = vmul.f32 %v4217, %v5015
        %v5025 = vmul.f32 %v4218, %v5019
        %v5026 = vmul.f32 %v4436, %v5015
        %v5027 = vmul.f32 %v4437, %v5019
        %v5028 = vmul.f32 %v4979, %v5015
        %v5029 = vmul.f32 %v4980, %v5019
        %v5030 = vmul.f32 %v4221, %v5015
        %v5031 = vmul.f32 %v4222, %v5019
        %v5032 = vmul.f32 %v4438, %v5015
        %v5033 = vmul.f32 %v4439, %v5019
        %v5034 = vmul.f32 %v4981, %v5015
        %v5035 = vmul.f32 %v4982, %v5019
        %v5036 = vmul.f32 %v4225, %v5015
        %v5037 = vmul.f32 %v4226, %v5019
        %v5038 = vmul.f32 %v4440, %v5015
        %v5039 = vmul.f32 %v4441, %v5019
        %v5040 = vmul.f32 %v4983, %v5015
        %v5041 = vmul.f32 %v4984, %v5019
        %v5042 = vmul.f32 %v4229, %v5015
        %v5043 = vmul.f32 %v4230, %v5019
        %v5044 = vmul.f32 %v4442, %v5015
        %v5045 = vmul.f32 %v4443, %v5019
        %v5046 = vmul.f32 %v4985, %v5015
        %v5047 = vmul.f32 %v4986, %v5019
        %v5048 = vmul.f32 %v4233, %v5015
        %v5049 = vmul.f32 %v4234, %v5019
        %v5050 = vmul.f32 %v4444, %v5015
        %v5051 = vmul.f32 %v4445, %v5019
        %v5052 = vmul.f32 %v4987, %v5015
        %v5053 = vmul.f32 %v4988, %v5019
        %v5054 = vmul.f32 %v4237, %v5015
        %v5055 = vmul.f32 %v4238, %v5019
        %v5056 = vmul.f32 %v4446, %v5015
        %v5057 = vmul.f32 %v4447, %v5019
        %v5058 = vmul.f32 %v4989, %v5015
        %v5059 = vmul.f32 %v4990, %v5019
        %v5060 = vmul.f32 %v4241, %v5015
        %v5061 = vmul.f32 %v4242, %v5019
        %v5062 = vmul.f32 %v4448, %v5015
        %v5063 = vmul.f32 %v4449, %v5019
        %v5064 = vmul.f32 %v4991, %v5015
        %v5065 = vmul.f32 %v4992, %v5019
        %v5066 = vmul.f32 %v4245, %v5015
        %v5067 = vmul.f32 %v4246, %v5019
        %v5068 = vmul.f32 %v4450, %v5015
        %v5069 = vmul.f32 %v4451, %v5019
        %v5070 = vmul.f32 %v4993, %v5015
        %v5071 = vmul.f32 %v4994, %v5019
        %v5072 = vmul.f32 %v4249, %v5015
        %v5073 = vmul.f32 %v4250, %v5019
        %v5074 = vmul.f32 %v4452, %v5015
        %v5075 = vmul.f32 %v4453, %v5019
        %v5076 = vmul.f32 %v4995, %v5015
        %v5077 = vmul.f32 %v4996, %v5019
        %v5078 = vmul.f32 %v4253, %v5015
        %v5079 = vmul.f32 %v4254, %v5019
        %v5080 = vmul.f32 %v4454, %v5015
        %v5081 = vmul.f32 %v4455, %v5019
        %v5082 = vmul.f32 %v4997, %v5015
        %v5083 = vmul.f32 %v4998, %v5019
        %v5084 = vmul.f32 %v4257, %v5015
        %v5085 = vmul.f32 %v4258, %v5019
        %v5086 = vmul.f32 %v4456, %v5015
        %v5087 = vmul.f32 %v4457, %v5019
        %v5088 = vmul.f32 %v4999, %v5015
        %v5089 = vmul.f32 %v5000, %v5019
        %v5090 = vmul.f32 %v4261, %v5015
        %v5091 = vmul.f32 %v4262, %v5019
        %v5092 = vmul.f32 %v4458, %v5015
        %v5093 = vmul.f32 %v4459, %v5019
        %v5094 = vmul.f32 %v5001, %v5015
        %v5095 = vmul.f32 %v5002, %v5019
        %v5096 = vmul.f32 %v4265, %v5015
        %v5097 = vmul.f32 %v4266, %v5019
        %v5098 = vmul.f32 %v4460, %v5015
        %v5099 = vmul.f32 %v4461, %v5019
        %v5100 = vmul.f32 %v5003, %v5015
        %v5101 = vmul.f32 %v5004, %v5019
        %v5102 = vmul.f32 %v4269, %v5015
        %v5103 = vmul.f32 %v4270, %v5019
        %v5104 = vmul.f32 %v4462, %v5015
        %v5105 = vmul.f32 %v4463, %v5019
        %v5106 = vmul.f32 %v5005, %v5015
        %v5107 = vmul.f32 %v5006, %v5019
        %v5108 = vmul.f32 %v4273, %v5015
        %v5109 = vmul.f32 %v4274, %v5019
        %v5110 = vmul.f32 %v4464, %v5015
        %v5111 = vmul.f32 %v4465, %v5019
        %v5112 = vmul.f32 %v5007, %v5015
        %v5113 = vmul.f32 %v5008, %v5019
        %v5114 = vmul.f32 %v4277, %v5015
        %v5115 = vmul.f32 %v4278, %v5019
        %v5116 = vmul.f32 %v4466, %v5015
        %v5117 = vmul.f32 %v4467, %v5019
        %v5214 = vrot.slane %v5022, 2
        %v5215 = vrot.slane %v5024, 2
        %v5216 = vsel %vm2573, %v5214, %v5215
        %v5217 = vrot.slane %v5023, 2
        %v5218 = vrot.slane %v5025, 2
        %v5219 = vsel %vm2573, %v5217, %v5218
        %v5220 = vrot.slane %v5026, 2
        %v5221 = vsel %vm2573, %v5215, %v5220
        %v5222 = vrot.slane %v5027, 2
        %v5223 = vsel %vm2573, %v5218, %v5222
        %v5224 = vrot.slane %v5028, 2
        %v5225 = vrot.slane %v5030, 2
        %v5226 = vsel %vm2573, %v5224, %v5225
        %v5227 = vrot.slane %v5029, 2
        %v5228 = vrot.slane %v5031, 2
        %v5229 = vsel %vm2573, %v5227, %v5228
        %v5230 = vrot.slane %v5032, 2
        %v5231 = vsel %vm2573, %v5225, %v5230
        %v5232 = vrot.slane %v5033, 2
        %v5233 = vsel %vm2573, %v5228, %v5232
        %v5234 = vrot.slane %v5034, 2
        %v5235 = vrot.slane %v5036, 2
        %v5236 = vsel %vm2573, %v5234, %v5235
        %v5237 = vrot.slane %v5035, 2
        %v5238 = vrot.slane %v5037, 2
        %v5239 = vsel %vm2573, %v5237, %v5238
        %v5240 = vrot.slane %v5038, 2
        %v5241 = vsel %vm2573, %v5235, %v5240
        %v5242 = vrot.slane %v5039, 2
        %v5243 = vsel %vm2573, %v5238, %v5242
        %v5244 = vrot.slane %v5040, 2
        %v5245 = vrot.slane %v5042, 2
        %v5246 = vsel %vm2573, %v5244, %v5245
        %v5247 = vrot.slane %v5041, 2
        %v5248 = vrot.slane %v5043, 2
        %v5249 = vsel %vm2573, %v5247, %v5248
        %v5250 = vrot.slane %v5044, 2
        %v5251 = vsel %vm2573, %v5245, %v5250
        %v5252 = vrot.slane %v5045, 2
        %v5253 = vsel %vm2573, %v5248, %v5252
        %v5254 = vrot.slane %v5046, 2
        %v5255 = vrot.slane %v5048, 2
        %v5256 = vsel %vm2573, %v5254, %v5255
        %v5257 = vrot.slane %v5047, 2
        %v5258 = vrot.slane %v5049, 2
        %v5259 = vsel %vm2573, %v5257, %v5258
        %v5260 = vrot.slane %v5050, 2
        %v5261 = vsel %vm2573, %v5255, %v5260
        %v5262 = vrot.slane %v5051, 2
        %v5263 = vsel %vm2573, %v5258, %v5262
        %v5264 = vrot.slane %v5052, 2
        %v5265 = vrot.slane %v5054, 2
        %v5266 = vsel %vm2573, %v5264, %v5265
        %v5267 = vrot.slane %v5053, 2
        %v5268 = vrot.slane %v5055, 2
        %v5269 = vsel %vm2573, %v5267, %v5268
        %v5270 = vrot.slane %v5056, 2
        %v5271 = vsel %vm2573, %v5265, %v5270
        %v5272 = vrot.slane %v5057, 2
        %v5273 = vsel %vm2573, %v5268, %v5272
        %v5274 = vrot.slane %v5058, 2
        %v5275 = vrot.slane %v5060, 2
        %v5276 = vsel %vm2573, %v5274, %v5275
        %v5277 = vrot.slane %v5059, 2
        %v5278 = vrot.slane %v5061, 2
        %v5279 = vsel %vm2573, %v5277, %v5278
        %v5280 = vrot.slane %v5062, 2
        %v5281 = vsel %vm2573, %v5275, %v5280
        %v5282 = vrot.slane %v5063, 2
        %v5283 = vsel %vm2573, %v5278, %v5282
        %v5284 = vrot.slane %v5064, 2
        %v5285 = vrot.slane %v5066, 2
        %v5286 = vsel %vm2573, %v5284, %v5285
        %v5287 = vrot.slane %v5065, 2
        %v5288 = vrot.slane %v5067, 2
        %v5289 = vsel %vm2573, %v5287, %v5288
        %v5290 = vrot.slane %v5068, 2
        %v5291 = vsel %vm2573, %v5285, %v5290
        %v5292 = vrot.slane %v5069, 2
        %v5293 = vsel %vm2573, %v5288, %v5292
        %v5294 = vrot.slane %v5070, 2
        %v5295 = vrot.slane %v5072, 2
        %v5296 = vsel %vm2573, %v5294, %v5295
        %v5297 = vrot.slane %v5071, 2
        %v5298 = vrot.slane %v5073, 2
        %v5299 = vsel %vm2573, %v5297, %v5298
        %v5300 = vrot.slane %v5074, 2
        %v5301 = vsel %vm2573, %v5295, %v5300
        %v5302 = vrot.slane %v5075, 2
        %v5303 = vsel %vm2573, %v5298, %v5302
        %v5304 = vrot.slane %v5076, 2
        %v5305 = vrot.slane %v5078, 2
        %v5306 = vsel %vm2573, %v5304, %v5305
        %v5307 = vrot.slane %v5077, 2
        %v5308 = vrot.slane %v5079, 2
        %v5309 = vsel %vm2573, %v5307, %v5308
        %v5310 = vrot.slane %v5080, 2
        %v5311 = vsel %vm2573, %v5305, %v5310
        %v5312 = vrot.slane %v5081, 2
        %v5313 = vsel %vm2573, %v5308, %v5312
        %v5314 = vrot.slane %v5082, 2
        %v5315 = vrot.slane %v5084, 2
        %v5316 = vsel %vm2573, %v5314, %v5315
        %v5317 = vrot.slane %v5083, 2
        %v5318 = vrot.slane %v5085, 2
        %v5319 = vsel %vm2573, %v5317, %v5318
        %v5320 = vrot.slane %v5086, 2
        %v5321 = vsel %vm2573, %v5315, %v5320
        %v5322 = vrot.slane %v5087, 2
        %v5323 = vsel %vm2573, %v5318, %v5322
        %v5324 = vrot.slane %v5088, 2
        %v5325 = vrot.slane %v5090, 2
        %v5326 = vsel %vm2573, %v5324, %v5325
        %v5327 = vrot.slane %v5089, 2
        %v5328 = vrot.slane %v5091, 2
        %v5329 = vsel %vm2573, %v5327, %v5328
        %v5330 = vrot.slane %v5092, 2
        %v5331 = vsel %vm2573, %v5325, %v5330
        %v5332 = vrot.slane %v5093, 2
        %v5333 = vsel %vm2573, %v5328, %v5332
        %v5334 = vrot.slane %v5094, 2
        %v5335 = vrot.slane %v5096, 2
        %v5336 = vsel %vm2573, %v5334, %v5335
        %v5337 = vrot.slane %v5095, 2
        %v5338 = vrot.slane %v5097, 2
        %v5339 = vsel %vm2573, %v5337, %v5338
        %v5340 = vrot.slane %v5098, 2
        %v5341 = vsel %vm2573, %v5335, %v5340
        %v5342 = vrot.slane %v5099, 2
        %v5343 = vsel %vm2573, %v5338, %v5342
        %v5344 = vrot.slane %v5100, 2
        %v5345 = vrot.slane %v5102, 2
        %v5346 = vsel %vm2573, %v5344, %v5345
        %v5347 = vrot.slane %v5101, 2
        %v5348 = vrot.slane %v5103, 2
        %v5349 = vsel %vm2573, %v5347, %v5348
        %v5350 = vrot.slane %v5104, 2
        %v5351 = vsel %vm2573, %v5345, %v5350
        %v5352 = vrot.slane %v5105, 2
        %v5353 = vsel %vm2573, %v5348, %v5352
        %v5354 = vrot.slane %v5106, 2
        %v5355 = vrot.slane %v5108, 2
        %v5356 = vsel %vm2573, %v5354, %v5355
        %v5357 = vrot.slane %v5107, 2
        %v5358 = vrot.slane %v5109, 2
        %v5359 = vsel %vm2573, %v5357, %v5358
        %v5360 = vrot.slane %v5110, 2
        %v5361 = vsel %vm2573, %v5355, %v5360
        %v5362 = vrot.slane %v5111, 2
        %v5363 = vsel %vm2573, %v5358, %v5362
        %v5364 = vrot.slane %v5112, 2
        %v5365 = vrot.slane %v5114, 2
        %v5366 = vsel %vm2573, %v5364, %v5365
        %v5367 = vrot.slane %v5113, 2
        %v5368 = vrot.slane %v5115, 2
        %v5369 = vsel %vm2573, %v5367, %v5368
        %v5370 = vrot.slane %v5116, 2
        %v5371 = vsel %vm2573, %v5365, %v5370
        %v5372 = vrot.slane %v5117, 2
        %v5373 = vsel %vm2573, %v5368, %v5372
        %v5438 = vadd.f32 %v4897, %v5216
        %v5439 = vadd.f32 %v4898, %v5219
        %v5440 = vadd.f32 %v4899, %v5221
        %v5441 = vadd.f32 %v4900, %v5223
        %v5442 = vadd.f32 %v4901, %v5226
        %v5443 = vadd.f32 %v4902, %v5229
        %v5444 = vadd.f32 %v4903, %v5231
        %v5445 = vadd.f32 %v4904, %v5233
        %v5446 = vadd.f32 %v4905, %v5236
        %v5447 = vadd.f32 %v4906, %v5239
        %v5448 = vadd.f32 %v4907, %v5241
        %v5449 = vadd.f32 %v4908, %v5243
        %v5450 = vadd.f32 %v4909, %v5246
        %v5451 = vadd.f32 %v4910, %v5249
        %v5452 = vadd.f32 %v4911, %v5251
        %v5453 = vadd.f32 %v4912, %v5253
        %v5454 = vadd.f32 %v4913, %v5256
        %v5455 = vadd.f32 %v4914, %v5259
        %v5456 = vadd.f32 %v4915, %v5261
        %v5457 = vadd.f32 %v4916, %v5263
        %v5458 = vadd.f32 %v4917, %v5266
        %v5459 = vadd.f32 %v4918, %v5269
        %v5460 = vadd.f32 %v4919, %v5271
        %v5461 = vadd.f32 %v4920, %v5273
        %v5462 = vadd.f32 %v4921, %v5276
        %v5463 = vadd.f32 %v4922, %v5279
        %v5464 = vadd.f32 %v4923, %v5281
        %v5465 = vadd.f32 %v4924, %v5283
        %v5466 = vadd.f32 %v4925, %v5286
        %v5467 = vadd.f32 %v4926, %v5289
        %v5468 = vadd.f32 %v4927, %v5291
        %v5469 = vadd.f32 %v4928, %v5293
        %v5470 = vadd.f32 %v4929, %v5296
        %v5471 = vadd.f32 %v4930, %v5299
        %v5472 = vadd.f32 %v4931, %v5301
        %v5473 = vadd.f32 %v4932, %v5303
        %v5474 = vadd.f32 %v4933, %v5306
        %v5475 = vadd.f32 %v4934, %v5309
        %v5476 = vadd.f32 %v4935, %v5311
        %v5477 = vadd.f32 %v4936, %v5313
        %v5478 = vadd.f32 %v4937, %v5316
        %v5479 = vadd.f32 %v4938, %v5319
        %v5480 = vadd.f32 %v4939, %v5321
        %v5481 = vadd.f32 %v4940, %v5323
        %v5482 = vadd.f32 %v4941, %v5326
        %v5483 = vadd.f32 %v4942, %v5329
        %v5484 = vadd.f32 %v4943, %v5331
        %v5485 = vadd.f32 %v4944, %v5333
        %v5486 = vadd.f32 %v4945, %v5336
        %v5487 = vadd.f32 %v4946, %v5339
        %v5488 = vadd.f32 %v4947, %v5341
        %v5489 = vadd.f32 %v4948, %v5343
        %v5490 = vadd.f32 %v4949, %v5346
        %v5491 = vadd.f32 %v4950, %v5349
        %v5492 = vadd.f32 %v4951, %v5351
        %v5493 = vadd.f32 %v4952, %v5353
        %v5494 = vadd.f32 %v4953, %v5356
        %v5495 = vadd.f32 %v4954, %v5359
        %v5496 = vadd.f32 %v4955, %v5361
        %v5497 = vadd.f32 %v4956, %v5363
        %v5498 = vadd.f32 %v4957, %v5366
        %v5499 = vadd.f32 %v4958, %v5369
        %v5500 = vadd.f32 %v4959, %v5371
        %v5501 = vadd.f32 %v4960, %v5373
        %v5502 = vld [vmem:[%s4] sm:$0x3]
        %v5504 = vlaneseq
        %v5505 = vshrl.u32 %v5504, 7
        %v5506 = vsub.s32 0, %v5505
        %v5507 = vrot.slane %v5502, %v5506
        %v5508 = vlaneseq
        %v5509 = vshrl.u32 %v5508, 7
        %v5510 = vsub.s32 1, %v5509
        %v5511 = vrot.slane %v5502, %v5510
        %v5514 = vadd.f32 %v5438, %v5507
        %v5515 = vadd.f32 %v5439, %v5511
        %v5516 = vadd.f32 %v5440, %v5507
        %v5517 = vadd.f32 %v5441, %v5511
        %v5518 = vadd.f32 %v5442, %v5507
        %v5519 = vadd.f32 %v5443, %v5511
        %v5520 = vadd.f32 %v5444, %v5507
        %v5521 = vadd.f32 %v5445, %v5511
        %v5522 = vadd.f32 %v5446, %v5507
        %v5523 = vadd.f32 %v5447, %v5511
        %v5524 = vadd.f32 %v5448, %v5507
        %v5525 = vadd.f32 %v5449, %v5511
        %v5526 = vadd.f32 %v5450, %v5507
        %v5527 = vadd.f32 %v5451, %v5511
        %v5528 = vadd.f32 %v5452, %v5507
        %v5529 = vadd.f32 %v5453, %v5511
        %v5530 = vadd.f32 %v5454, %v5507
        %v5531 = vadd.f32 %v5455, %v5511
        %v5532 = vadd.f32 %v5456, %v5507
        %v5533 = vadd.f32 %v5457, %v5511
        %v5534 = vadd.f32 %v5458, %v5507
        %v5535 = vadd.f32 %v5459, %v5511
        %v5536 = vadd.f32 %v5460, %v5507
        %v5537 = vadd.f32 %v5461, %v5511
        %v5538 = vadd.f32 %v5462, %v5507
        %v5539 = vadd.f32 %v5463, %v5511
        %v5540 = vadd.f32 %v5464, %v5507
        %v5541 = vadd.f32 %v5465, %v5511
        %v5542 = vadd.f32 %v5466, %v5507
        %v5543 = vadd.f32 %v5467, %v5511
        %v5544 = vadd.f32 %v5468, %v5507
        %v5545 = vadd.f32 %v5469, %v5511
        %v5546 = vadd.f32 %v5470, %v5507
        %v5547 = vadd.f32 %v5471, %v5511
        %v5548 = vadd.f32 %v5472, %v5507
        %v5549 = vadd.f32 %v5473, %v5511
        %v5550 = vadd.f32 %v5474, %v5507
        %v5551 = vadd.f32 %v5475, %v5511
        %v5552 = vadd.f32 %v5476, %v5507
        %v5553 = vadd.f32 %v5477, %v5511
        %v5554 = vadd.f32 %v5478, %v5507
        %v5555 = vadd.f32 %v5479, %v5511
        %v5556 = vadd.f32 %v5480, %v5507
        %v5557 = vadd.f32 %v5481, %v5511
        %v5558 = vadd.f32 %v5482, %v5507
        %v5559 = vadd.f32 %v5483, %v5511
        %v5560 = vadd.f32 %v5484, %v5507
        %v5561 = vadd.f32 %v5485, %v5511
        %v5562 = vadd.f32 %v5486, %v5507
        %v5563 = vadd.f32 %v5487, %v5511
        %v5564 = vadd.f32 %v5488, %v5507
        %v5565 = vadd.f32 %v5489, %v5511
        %v5566 = vadd.f32 %v5490, %v5507
        %v5567 = vadd.f32 %v5491, %v5511
        %v5568 = vadd.f32 %v5492, %v5507
        %v5569 = vadd.f32 %v5493, %v5511
        %v5570 = vadd.f32 %v5494, %v5507
        %v5571 = vadd.f32 %v5495, %v5511
        %v5572 = vadd.f32 %v5496, %v5507
        %v5573 = vadd.f32 %v5497, %v5511
        %v5574 = vadd.f32 %v5498, %v5507
        %v5575 = vadd.f32 %v5499, %v5511
        %v5576 = vadd.f32 %v5500, %v5507
        %v5577 = vadd.f32 %v5501, %v5511
        %v5578 = vmax.f32 %v5514, 0.0
        %v5579 = vmax.f32 %v5515, 0.0
        %v5580 = vmax.f32 %v5516, 0.0
        %v5581 = vmax.f32 %v5517, 0.0
        %v5582 = vmax.f32 %v5518, 0.0
        %v5583 = vmax.f32 %v5519, 0.0
        %v5584 = vmax.f32 %v5520, 0.0
        %v5585 = vmax.f32 %v5521, 0.0
        %v5586 = vmax.f32 %v5522, 0.0
        %v5587 = vmax.f32 %v5523, 0.0
        %v5588 = vmax.f32 %v5524, 0.0
        %v5589 = vmax.f32 %v5525, 0.0
        %v5590 = vmax.f32 %v5526, 0.0
        %v5591 = vmax.f32 %v5527, 0.0
        %v5592 = vmax.f32 %v5528, 0.0
        %v5593 = vmax.f32 %v5529, 0.0
        %v5594 = vmax.f32 %v5530, 0.0
        %v5595 = vmax.f32 %v5531, 0.0
        %v5596 = vmax.f32 %v5532, 0.0
        %v5597 = vmax.f32 %v5533, 0.0
        %v5598 = vmax.f32 %v5534, 0.0
        %v5599 = vmax.f32 %v5535, 0.0
        %v5600 = vmax.f32 %v5536, 0.0
        %v5601 = vmax.f32 %v5537, 0.0
        %v5602 = vmax.f32 %v5538, 0.0
        %v5603 = vmax.f32 %v5539, 0.0
        %v5604 = vmax.f32 %v5540, 0.0
        %v5605 = vmax.f32 %v5541, 0.0
        %v5606 = vmax.f32 %v5542, 0.0
        %v5607 = vmax.f32 %v5543, 0.0
        %v5608 = vmax.f32 %v5544, 0.0
        %v5609 = vmax.f32 %v5545, 0.0
        %v5610 = vmax.f32 %v5546, 0.0
        %v5611 = vmax.f32 %v5547, 0.0
        %v5612 = vmax.f32 %v5548, 0.0
        %v5613 = vmax.f32 %v5549, 0.0
        %v5614 = vmax.f32 %v5550, 0.0
        %v5615 = vmax.f32 %v5551, 0.0
        %v5616 = vmax.f32 %v5552, 0.0
        %v5617 = vmax.f32 %v5553, 0.0
        %v5618 = vmax.f32 %v5554, 0.0
        %v5619 = vmax.f32 %v5555, 0.0
        %v5620 = vmax.f32 %v5556, 0.0
        %v5621 = vmax.f32 %v5557, 0.0
        %v5622 = vmax.f32 %v5558, 0.0
        %v5623 = vmax.f32 %v5559, 0.0
        %v5624 = vmax.f32 %v5560, 0.0
        %v5625 = vmax.f32 %v5561, 0.0
        %v5626 = vmax.f32 %v5562, 0.0
        %v5627 = vmax.f32 %v5563, 0.0
        %v5628 = vmax.f32 %v5564, 0.0
        %v5629 = vmax.f32 %v5565, 0.0
        %v5630 = vmax.f32 %v5566, 0.0
        %v5631 = vmax.f32 %v5567, 0.0
        %v5632 = vmax.f32 %v5568, 0.0
        %v5633 = vmax.f32 %v5569, 0.0
        %v5634 = vmax.f32 %v5570, 0.0
        %v5635 = vmax.f32 %v5571, 0.0
        %v5636 = vmax.f32 %v5572, 0.0
        %v5637 = vmax.f32 %v5573, 0.0
        %v5638 = vmax.f32 %v5574, 0.0
        %v5639 = vmax.f32 %v5575, 0.0
        %v5640 = vmax.f32 %v5576, 0.0
        %v5641 = vmax.f32 %v5577, 0.0
        %v5642 = vmin.f32 %v5578, 6.0
        %v5643 = vmin.f32 %v5579, 6.0
        %v5644 = vmin.f32 %v5580, 6.0
        %v5645 = vmin.f32 %v5581, 6.0
        %v5646 = vmin.f32 %v5582, 6.0
        %v5647 = vmin.f32 %v5583, 6.0
        %v5648 = vmin.f32 %v5584, 6.0
        %v5649 = vmin.f32 %v5585, 6.0
        %v5650 = vmin.f32 %v5586, 6.0
        %v5651 = vmin.f32 %v5587, 6.0
        %v5652 = vmin.f32 %v5588, 6.0
        %v5653 = vmin.f32 %v5589, 6.0
        %v5654 = vmin.f32 %v5590, 6.0
        %v5655 = vmin.f32 %v5591, 6.0
        %v5656 = vmin.f32 %v5592, 6.0
        %v5657 = vmin.f32 %v5593, 6.0
        %v5658 = vmin.f32 %v5594, 6.0
        %v5659 = vmin.f32 %v5595, 6.0
        %v5660 = vmin.f32 %v5596, 6.0
        %v5661 = vmin.f32 %v5597, 6.0
        %v5662 = vmin.f32 %v5598, 6.0
        %v5663 = vmin.f32 %v5599, 6.0
        %v5664 = vmin.f32 %v5600, 6.0
        %v5665 = vmin.f32 %v5601, 6.0
        %v5666 = vmin.f32 %v5602, 6.0
        %v5667 = vmin.f32 %v5603, 6.0
        %v5668 = vmin.f32 %v5604, 6.0
        %v5669 = vmin.f32 %v5605, 6.0
        %v5670 = vmin.f32 %v5606, 6.0
        %v5671 = vmin.f32 %v5607, 6.0
        %v5672 = vmin.f32 %v5608, 6.0
        %v5673 = vmin.f32 %v5609, 6.0
        %v5674 = vmin.f32 %v5610, 6.0
        %v5675 = vmin.f32 %v5611, 6.0
        %v5676 = vmin.f32 %v5612, 6.0
        %v5677 = vmin.f32 %v5613, 6.0
        %v5678 = vmin.f32 %v5614, 6.0
        %v5679 = vmin.f32 %v5615, 6.0
        %v5680 = vmin.f32 %v5616, 6.0
        %v5681 = vmin.f32 %v5617, 6.0
        %v5682 = vmin.f32 %v5618, 6.0
        %v5683 = vmin.f32 %v5619, 6.0
        %v5684 = vmin.f32 %v5620, 6.0
        %v5685 = vmin.f32 %v5621, 6.0
        %v5686 = vmin.f32 %v5622, 6.0
        %v5687 = vmin.f32 %v5623, 6.0
        %v5688 = vmin.f32 %v5624, 6.0
        %v5689 = vmin.f32 %v5625, 6.0
        %v5690 = vmin.f32 %v5626, 6.0
        %v5691 = vmin.f32 %v5627, 6.0
        %v5692 = vmin.f32 %v5628, 6.0
        %v5693 = vmin.f32 %v5629, 6.0
        %v5694 = vmin.f32 %v5630, 6.0
        %v5695 = vmin.f32 %v5631, 6.0
        %v5696 = vmin.f32 %v5632, 6.0
        %v5697 = vmin.f32 %v5633, 6.0
        %v5698 = vmin.f32 %v5634, 6.0
        %v5699 = vmin.f32 %v5635, 6.0
        %v5700 = vmin.f32 %v5636, 6.0
        %v5701 = vmin.f32 %v5637, 6.0
        %v5702 = vmin.f32 %v5638, 6.0
        %v5703 = vmin.f32 %v5639, 6.0
        %v5704 = vmin.f32 %v5640, 6.0
        %v5705 = vmin.f32 %v5641, 6.0
        %v5706 = vpack.c.bf16 %v5644, %v5642
        %v5707 = vpack.c.bf16 %v5645, %v5643
        %v5708 = vpack.c.bf16 %v5648, %v5646
        %v5709 = vpack.c.bf16 %v5649, %v5647
        %v5710 = vpack.c.bf16 %v5652, %v5650
        %v5711 = vpack.c.bf16 %v5653, %v5651
        %v5712 = vpack.c.bf16 %v5656, %v5654
        %v5713 = vpack.c.bf16 %v5657, %v5655
        %v5714 = vpack.c.bf16 %v5660, %v5658
        %v5715 = vpack.c.bf16 %v5661, %v5659
        %v5716 = vpack.c.bf16 %v5664, %v5662
        %v5717 = vpack.c.bf16 %v5665, %v5663
        %v5718 = vpack.c.bf16 %v5668, %v5666
        %v5719 = vpack.c.bf16 %v5669, %v5667
        %v5720 = vpack.c.bf16 %v5672, %v5670
        %v5721 = vpack.c.bf16 %v5673, %v5671
        %v5722 = vpack.c.bf16 %v5676, %v5674
        %v5723 = vpack.c.bf16 %v5677, %v5675
        %v5724 = vpack.c.bf16 %v5680, %v5678
        %v5725 = vpack.c.bf16 %v5681, %v5679
        %v5726 = vpack.c.bf16 %v5684, %v5682
        %v5727 = vpack.c.bf16 %v5685, %v5683
        %v5728 = vpack.c.bf16 %v5688, %v5686
        %v5729 = vpack.c.bf16 %v5689, %v5687
        %v5730 = vpack.c.bf16 %v5692, %v5690
        %v5731 = vpack.c.bf16 %v5693, %v5691
        %v5732 = vpack.c.bf16 %v5696, %v5694
        %v5733 = vpack.c.bf16 %v5697, %v5695
        %v5734 = vpack.c.bf16 %v5700, %v5698
        %v5735 = vpack.c.bf16 %v5701, %v5699
        %v5736 = vpack.c.bf16 %v5704, %v5702
        %v5737 = vpack.c.bf16 %v5705, %v5703
        %v5738 = vld [vmem:[%s5] sm:$0xf]
        %v5739 = vld [vmem:[%s5 + $0x4] sm:$0xf]
        %v5740 = vld [vmem:[%s5 + $0x8] sm:$0xf]
        %v5741 = vld [vmem:[%s5 + $0xc] sm:$0xf]
        %v5742 = vld [vmem:[%s5 + $0x10] sm:$0xf]
        %v5743 = vld [vmem:[%s5 + $0x14] sm:$0xf]
        %v5744 = vld [vmem:[%s5 + $0x18] sm:$0xf]
        %v5745 = vld [vmem:[%s5 + $0x1c] sm:$0xf]
        %v5746 = vld [vmem:[%s5 + $0x20] sm:$0xf]
        %v5747 = vld [vmem:[%s5 + $0x24] sm:$0xf]
        %v5748 = vld [vmem:[%s5 + $0x28] sm:$0xf]
        %v5749 = vld [vmem:[%s5 + $0x2c] sm:$0xf]
        %v5750 = vld [vmem:[%s5 + $0x30] sm:$0xf]
        %v5751 = vld [vmem:[%s5 + $0x34] sm:$0xf]
        %v5752 = vld [vmem:[%s5 + $0x38] sm:$0xf]
        %v5753 = vld [vmem:[%s5 + $0x3c] sm:$0xf]
        %v5754 = vld [vmem:[%s5 + $0x40] sm:$0xf]
        %v5755 = vld [vmem:[%s5 + $0x44] sm:$0xf]
        %v5756 = vld [vmem:[%s5 + $0x48] sm:$0xf]
        %v5757 = vld [vmem:[%s5 + $0x4c] sm:$0xf]
        %v5758 = vld [vmem:[%s5 + $0x50] sm:$0xf]
        %v5759 = vld [vmem:[%s5 + $0x54] sm:$0xf]
        %v5760 = vld [vmem:[%s5 + $0x58] sm:$0xf]
        %v5761 = vld [vmem:[%s5 + $0x5c] sm:$0xf]
        %v5762 = vld [vmem:[%s6] sm:$0x1]
        %v5764 = vlaneseq
        %v5765 = vshrl.u32 %v5764, 7
        %v5766 = vsub.s32 0, %v5765
        %v5767 = vrot.slane %v5762, %v5766
        %v5793 = vunpack.c.l.b16 %v5738
        %v5794 = vunpack.c.l.b16 %v5739
        %v5795 = vunpack.c.l.b16 %v5740
        %v5796 = vunpack.c.l.b16 %v5741
        %v5797 = vunpack.c.l.b16 %v5742
        %v5798 = vunpack.c.l.b16 %v5743
        %v5799 = vunpack.c.l.b16 %v5744
        %v5800 = vunpack.c.l.b16 %v5745
        %v5801 = vunpack.c.l.b16 %v5746
        %v5802 = vunpack.c.l.b16 %v5747
        %v5803 = vunpack.c.l.b16 %v5748
        %v5804 = vunpack.c.l.b16 %v5749
        %v5805 = vunpack.c.l.b16 %v5750
        %v5806 = vunpack.c.l.b16 %v5751
        %v5807 = vunpack.c.l.b16 %v5752
        %v5808 = vunpack.c.l.b16 %v5753
        %v5809 = vunpack.c.l.b16 %v5754
        %v5810 = vunpack.c.l.b16 %v5755
        %v5811 = vunpack.c.l.b16 %v5756
        %v5812 = vunpack.c.l.b16 %v5757
        %v5813 = vunpack.c.l.b16 %v5758
        %v5814 = vunpack.c.l.b16 %v5759
        %v5815 = vunpack.c.l.b16 %v5760
        %v5816 = vunpack.c.l.b16 %v5761
        %v5817 = vpack.c.b16 %v5794, %v5793
        %v5818 = vpack.c.b16 %v5796, %v5795
        %v5819 = vpack.c.b16 %v5798, %v5797
        %v5820 = vpack.c.b16 %v5800, %v5799
        %v5821 = vpack.c.b16 %v5802, %v5801
        %v5822 = vpack.c.b16 %v5804, %v5803
        %v5823 = vpack.c.b16 %v5806, %v5805
        %v5824 = vpack.c.b16 %v5808, %v5807
        %v5825 = vpack.c.b16 %v5810, %v5809
        %v5826 = vpack.c.b16 %v5812, %v5811
        %v5827 = vpack.c.b16 %v5814, %v5813
        %v5828 = vpack.c.b16 %v5816, %v5815
        %vm5841 = vcmask 523264
        %v5843 = vsel %vm5841, %v5707, 0
        %v5846 = vsel %vm5841, %v5709, 0
        %v5849 = vsel %vm5841, %v5711, 0
        %v5852 = vsel %vm5841, %v5713, 0
        %v5855 = vsel %vm5841, %v5715, 0
        %v5858 = vsel %vm5841, %v5717, 0
        %v5861 = vsel %vm5841, %v5719, 0
        %v5864 = vsel %vm5841, %v5721, 0
        %v5867 = vsel %vm5841, %v5723, 0
        %v5870 = vsel %vm5841, %v5725, 0
        %v5873 = vsel %vm5841, %v5727, 0
        %v5876 = vsel %vm5841, %v5729, 0
        %v5879 = vsel %vm5841, %v5731, 0
        %v5882 = vsel %vm5841, %v5733, 0
        %v5885 = vsel %vm5841, %v5735, 0
        %v5888 = vsel %vm5841, %v5737, 0
        %5890 = vmatprep.subr.bf16.mxu0 0
        %5891 = vmatpush1.bf16.msra.mxu0 %v5817
        %5892 = vmatprep.subr.bf16.mxu0 0
        %5893 = vmatpush1.bf16.msra.mxu0 %v5818
        %5894 = vmatprep.subr.bf16.mxu0 0
        %5895 = vmatpush1.bf16.msra.mxu0 %v5819
        %5896 = vmatprep.subr.bf16.mxu0 0
        %5897 = vmatpush1.bf16.msra.mxu0 %v5820
        %5898 = vmatprep.subr.bf16.mxu0 0
        %5899 = vmatpush1.bf16.msra.mxu0 %v5821
        %5900 = vmatprep.subr.bf16.mxu0 0
        %5901 = vmatpush1.bf16.msra.mxu0 %v5822
        %5902 = vmatprep.subr.bf16.mxu0 0
        %5903 = vmatpush1.bf16.msra.mxu0 %v5823
        %5904 = vmatprep.subr.bf16.mxu0 0
        %5905 = vmatpush1.bf16.msra.mxu0 %v5824
        %5906 = vmatprep.subr.bf16.mxu0 0
        %5907 = vmatpush1.bf16.msra.mxu0 %v5825
        %5908 = vmatprep.subr.bf16.mxu0 0
        %5909 = vmatpush1.bf16.msra.mxu0 %v5826
        %5910 = vmatprep.subr.bf16.mxu0 0
        %5911 = vmatpush1.bf16.msra.mxu0 %v5827
        %5912 = vmatprep.subr.bf16.mxu0 0
        %5913 = vmatpush1.bf16.msra.mxu0 %v5828
        %5914 = vmatprep.subr.bf16.mxu0 0
        %5915 = vmatpush1.bf16.msra.mxu0 0
        %5916 = vmatprep.subr.bf16.mxu0 0
        %5917 = vmatpush1.bf16.msra.mxu0 0
        %5918 = vmatprep.subr.bf16.mxu0 0
        %5919 = vmatpush1.bf16.msra.mxu0 0
        %5920 = vmatprep.subr.bf16.mxu0 0
        %5921 = vmatpush1.bf16.msra.mxu0 0
        %5922 = vmatprep.mubr.bf16.mxu0 %v5843
        %5923 = vmatmul.mubr.bf16.gmra.mrb[0].mxu0 %v5706
        %v5924 = vpop.f32.mrb[0].mxu0
        %v5925 = vadd.f32 %v5767, %v5924
        %v5926 = vpop.f32.mrb[0].mxu0
        %v5927 = vpop.f32.mrb[0].mxu0
        %v5928 = vadd.f32 %v5767, %v5927
        %v5929 = vpop.f32.mrb[0].mxu0
        %5930 = vmatprep.mubr.bf16.mxu0 %v5846
        %5931 = vmatmul.mubr.bf16.gmra.mrb[0].mxu0 %v5708
        %v5932 = vpop.f32.mrb[0].mxu0
        %v5933 = vadd.f32 %v5767, %v5932
        %v5934 = vpop.f32.mrb[0].mxu0
        %v5935 = vpop.f32.mrb[0].mxu0
        %v5936 = vadd.f32 %v5767, %v5935
        %v5937 = vpop.f32.mrb[0].mxu0
        %5938 = vmatprep.mubr.bf16.mxu0 %v5849
        %5939 = vmatmul.mubr.bf16.gmra.mrb[0].mxu0 %v5710
        %v5940 = vpop.f32.mrb[0].mxu0
        %v5941 = vadd.f32 %v5767, %v5940
        %v5942 = vpop.f32.mrb[0].mxu0
        %v5943 = vpop.f32.mrb[0].mxu0
        %v5944 = vadd.f32 %v5767, %v5943
        %v5945 = vpop.f32.mrb[0].mxu0
        %5946 = vmatprep.mubr.bf16.mxu0 %v5852
        %5947 = vmatmul.mubr.bf16.gmra.mrb[0].mxu0 %v5712
        %v5948 = vpop.f32.mrb[0].mxu0
        %v5949 = vadd.f32 %v5767, %v5948
        %v5950 = vpop.f32.mrb[0].mxu0
        %v5951 = vpop.f32.mrb[0].mxu0
        %v5952 = vadd.f32 %v5767, %v5951
        %v5953 = vpop.f32.mrb[0].mxu0
        %5954 = vmatprep.mubr.bf16.mxu0 %v5855
        %5955 = vmatmul.mubr.bf16.gmra.mrb[0].mxu0 %v5714
        %v5956 = vpop.f32.mrb[0].mxu0
        %v5957 = vadd.f32 %v5767, %v5956
        %v5958 = vpop.f32.mrb[0].mxu0
        %v5959 = vpop.f32.mrb[0].mxu0
        %v5960 = vadd.f32 %v5767, %v5959
        %v5961 = vpop.f32.mrb[0].mxu0
        %5962 = vmatprep.mubr.bf16.mxu0 %v5858
        %5963 = vmatmul.mubr.bf16.gmra.mrb[0].mxu0 %v5716
        %v5964 = vpop.f32.mrb[0].mxu0
        %v5965 = vadd.f32 %v5767, %v5964
        %v5966 = vpop.f32.mrb[0].mxu0
        %v5967 = vpop.f32.mrb[0].mxu0
        %v5968 = vadd.f32 %v5767, %v5967
        %v5969 = vpop.f32.mrb[0].mxu0
        %5970 = vmatprep.mubr.bf16.mxu0 %v5861
        %5971 = vmatmul.mubr.bf16.gmra.mrb[0].mxu0 %v5718
        %v5972 = vpop.f32.mrb[0].mxu0
        %v5973 = vadd.f32 %v5767, %v5972
        %v5974 = vpop.f32.mrb[0].mxu0
        %v5975 = vpop.f32.mrb[0].mxu0
        %v5976 = vadd.f32 %v5767, %v5975
        %v5977 = vpop.f32.mrb[0].mxu0
        %5978 = vmatprep.mubr.bf16.mxu0 %v5864
        %5979 = vmatmul.mubr.bf16.gmra.mrb[0].mxu0 %v5720
        %v5980 = vpop.f32.mrb[0].mxu0
        %v5981 = vadd.f32 %v5767, %v5980
        %v5982 = vpop.f32.mrb[0].mxu0
        %v5983 = vpop.f32.mrb[0].mxu0
        %v5984 = vadd.f32 %v5767, %v5983
        %v5985 = vpop.f32.mrb[0].mxu0
        %5986 = vmatprep.mubr.bf16.mxu0 %v5867
        %5987 = vmatmul.mubr.bf16.gmra.mrb[0].mxu0 %v5722
        %v5988 = vpop.f32.mrb[0].mxu0
        %v5989 = vadd.f32 %v5767, %v5988
        %v5990 = vpop.f32.mrb[0].mxu0
        %v5991 = vpop.f32.mrb[0].mxu0
        %v5992 = vadd.f32 %v5767, %v5991
        %v5993 = vpop.f32.mrb[0].mxu0
        %5994 = vmatprep.mubr.bf16.mxu0 %v5870
        %5995 = vmatmul.mubr.bf16.gmra.mrb[0].mxu0 %v5724
        %v5996 = vpop.f32.mrb[0].mxu0
        %v5997 = vadd.f32 %v5767, %v5996
        %v5998 = vpop.f32.mrb[0].mxu0
        %v5999 = vpop.f32.mrb[0].mxu0
        %v6000 = vadd.f32 %v5767, %v5999
        %v6001 = vpop.f32.mrb[0].mxu0
        %6002 = vmatprep.mubr.bf16.mxu0 %v5873
        %6003 = vmatmul.mubr.bf16.gmra.mrb[0].mxu0 %v5726
        %v6004 = vpop.f32.mrb[0].mxu0
        %v6005 = vadd.f32 %v5767, %v6004
        %v6006 = vpop.f32.mrb[0].mxu0
        %v6007 = vpop.f32.mrb[0].mxu0
        %v6008 = vadd.f32 %v5767, %v6007
        %v6009 = vpop.f32.mrb[0].mxu0
        %6010 = vmatprep.mubr.bf16.mxu0 %v5876
        %6011 = vmatmul.mubr.bf16.gmra.mrb[0].mxu0 %v5728
        %v6012 = vpop.f32.mrb[0].mxu0
        %v6013 = vadd.f32 %v5767, %v6012
        %v6014 = vpop.f32.mrb[0].mxu0
        %v6015 = vpop.f32.mrb[0].mxu0
        %v6016 = vadd.f32 %v5767, %v6015
        %v6017 = vpop.f32.mrb[0].mxu0
        %6018 = vmatprep.mubr.bf16.mxu0 %v5879
        %6019 = vmatmul.mubr.bf16.gmra.mrb[0].mxu0 %v5730
        %v6020 = vpop.f32.mrb[0].mxu0
        %v6021 = vadd.f32 %v5767, %v6020
        %v6022 = vpop.f32.mrb[0].mxu0
        %v6023 = vpop.f32.mrb[0].mxu0
        %v6024 = vadd.f32 %v5767, %v6023
        %v6025 = vpop.f32.mrb[0].mxu0
        %6026 = vmatprep.mubr.bf16.mxu0 %v5882
        %6027 = vmatmul.mubr.bf16.gmra.mrb[0].mxu0 %v5732
        %v6028 = vpop.f32.mrb[0].mxu0
        %v6029 = vadd.f32 %v5767, %v6028
        %v6030 = vpop.f32.mrb[0].mxu0
        %v6031 = vpop.f32.mrb[0].mxu0
        %v6032 = vadd.f32 %v5767, %v6031
        %v6033 = vpop.f32.mrb[0].mxu0
        %6034 = vmatprep.mubr.bf16.mxu0 %v5885
        %6035 = vmatmul.mubr.bf16.gmra.mrb[0].mxu0 %v5734
        %v6036 = vpop.f32.mrb[0].mxu0
        %v6037 = vadd.f32 %v5767, %v6036
        %v6038 = vpop.f32.mrb[0].mxu0
        %v6039 = vpop.f32.mrb[0].mxu0
        %v6040 = vadd.f32 %v5767, %v6039
        %v6041 = vpop.f32.mrb[0].mxu0
        %6042 = vmatprep.mubr.bf16.mxu0 %v5888
        %6043 = vmatmul.mubr.bf16.gmra.mrb[0].mxu0 %v5736
        %v6044 = vpop.f32.mrb[0].mxu0
        %v6045 = vadd.f32 %v5767, %v6044
        %v6046 = vpop.f32.mrb[0].mxu0
        %v6047 = vpop.f32.mrb[0].mxu0
        %v6048 = vadd.f32 %v5767, %v6047
        %v6049 = vpop.f32.mrb[0].mxu0
        %6050 = vdwg.mxu0
        %s6051 = scalar_lea.vmem %s276, 24
        %v6052 = vld [vmem:[%s6051 + $0x1] sm:$0xff]
        %v6053 = vld [vmem:[%s6051 + $0x9] sm:$0xff]
        %v6054 = vld [vmem:[%s6051 + $0x19] sm:$0xff]
        %v6055 = vld [vmem:[%s6051 + $0x21] sm:$0xff]
        %v6056 = vld [vmem:[%s6051 + $0x31] sm:$0xff]
        %v6057 = vld [vmem:[%s6051 + $0x39] sm:$0xff]
        %v6058 = vld [vmem:[%s6051 + $0x49] sm:$0xff]
        %v6059 = vld [vmem:[%s6051 + $0x51] sm:$0xff]
        %v6060 = vld [vmem:[%s6051 + $0x61] sm:$0xff]
        %v6061 = vld [vmem:[%s6051 + $0x69] sm:$0xff]
        %v6062 = vld [vmem:[%s6051 + $0x79] sm:$0xff]
        %v6063 = vld [vmem:[%s6051 + $0x81] sm:$0xff]
        %v6064 = vld [vmem:[%s6051 + $0x91] sm:$0xff]
        %v6065 = vld [vmem:[%s6051 + $0x99] sm:$0xff]
        %v6066 = vld [vmem:[%s6051 + $0xa9] sm:$0xff]
        %v6067 = vld [vmem:[%s6051 + $0xb1] sm:$0xff]
        %v6068 = vld [vmem:[%s6051 + $0xc1] sm:$0xff]
        %v6069 = vld [vmem:[%s6051 + $0xc9] sm:$0xff]
        %v6070 = vld [vmem:[%s6051 + $0xd9] sm:$0xff]
        %v6071 = vld [vmem:[%s6051 + $0xe1] sm:$0xff]
        %v6072 = vld [vmem:[%s6051 + $0xf1] sm:$0xff]
        %v6073 = vld [vmem:[%s6051 + $0xf9] sm:$0xff]
        %v6074 = vld [vmem:[%s6051 + $0x109] sm:$0xff]
        %v6075 = vld [vmem:[%s6051 + $0x111] sm:$0xff]
        %v6076 = vld [vmem:[%s6051 + $0x121] sm:$0xff]
        %v6077 = vld [vmem:[%s6051 + $0x129] sm:$0xff]
        %v6078 = vld [vmem:[%s6051 + $0x139] sm:$0xff]
        %v6079 = vld [vmem:[%s6051 + $0x141] sm:$0xff]
        %v6080 = vld [vmem:[%s6051 + $0x151] sm:$0xff]
        %v6081 = vld [vmem:[%s6051 + $0x159] sm:$0xff]
        %v6082 = vld [vmem:[%s6051 + $0x169] sm:$0xff]
        %v6083 = vld [vmem:[%s6051 + $0x171] sm:$0xff]
        %v6084 = vadd.f32 %v5925, %v6052
        %v6085 = vadd.f32 %v5928, %v6053
        %v6086 = vadd.f32 %v5933, %v6054
        %v6087 = vadd.f32 %v5936, %v6055
        %v6088 = vadd.f32 %v5941, %v6056
        %v6089 = vadd.f32 %v5944, %v6057
        %v6090 = vadd.f32 %v5949, %v6058
        %v6091 = vadd.f32 %v5952, %v6059
        %v6092 = vadd.f32 %v5957, %v6060
        %v6093 = vadd.f32 %v5960, %v6061
        %v6094 = vadd.f32 %v5965, %v6062
        %v6095 = vadd.f32 %v5968, %v6063
        %v6096 = vadd.f32 %v5973, %v6064
        %v6097 = vadd.f32 %v5976, %v6065
        %v6098 = vadd.f32 %v5981, %v6066
        %v6099 = vadd.f32 %v5984, %v6067
        %v6100 = vadd.f32 %v5989, %v6068
        %v6101 = vadd.f32 %v5992, %v6069
        %v6102 = vadd.f32 %v5997, %v6070
        %v6103 = vadd.f32 %v6000, %v6071
        %v6104 = vadd.f32 %v6005, %v6072
        %v6105 = vadd.f32 %v6008, %v6073
        %v6106 = vadd.f32 %v6013, %v6074
        %v6107 = vadd.f32 %v6016, %v6075
        %v6108 = vadd.f32 %v6021, %v6076
        %v6109 = vadd.f32 %v6024, %v6077
        %v6110 = vadd.f32 %v6029, %v6078
        %v6111 = vadd.f32 %v6032, %v6079
        %v6112 = vadd.f32 %v6037, %v6080
        %v6113 = vadd.f32 %v6040, %v6081
        %v6114 = vadd.f32 %v6045, %v6082
        %v6115 = vadd.f32 %v6048, %v6083
        %6116 = vst.msk [vmem:[%s271] sm:$0xff] %vm395, %v6084
        %6117 = vst.msk [vmem:[%s271 + $0x8] sm:$0xff] %vm395, %v6085
        %6118 = vst.msk [vmem:[%s271 + $0x10] sm:$0xff] %vm395, %v6086
        %6119 = vst.msk [vmem:[%s271 + $0x18] sm:$0xff] %vm395, %v6087
        %6120 = vst.msk [vmem:[%s271 + $0x20] sm:$0xff] %vm395, %v6088
        %6121 = vst.msk [vmem:[%s271 + $0x28] sm:$0xff] %vm395, %v6089
        %6122 = vst.msk [vmem:[%s271 + $0x30] sm:$0xff] %vm395, %v6090
        %6123 = vst.msk [vmem:[%s271 + $0x38] sm:$0xff] %vm395, %v6091
        %6124 = vst.msk [vmem:[%s271 + $0x40] sm:$0xff] %vm395, %v6092
        %6125 = vst.msk [vmem:[%s271 + $0x48] sm:$0xff] %vm395, %v6093
        %6126 = vst.msk [vmem:[%s271 + $0x50] sm:$0xff] %vm395, %v6094
        %6127 = vst.msk [vmem:[%s271 + $0x58] sm:$0xff] %vm395, %v6095
        %6128 = vst.msk [vmem:[%s271 + $0x60] sm:$0xff] %vm395, %v6096
        %6129 = vst.msk [vmem:[%s271 + $0x68] sm:$0xff] %vm395, %v6097
        %6130 = vst.msk [vmem:[%s271 + $0x70] sm:$0xff] %vm395, %v6098
        %6131 = vst.msk [vmem:[%s271 + $0x78] sm:$0xff] %vm395, %v6099
        %6132 = vst.msk [vmem:[%s271 + $0x80] sm:$0xff] %vm395, %v6100
        %6133 = vst.msk [vmem:[%s271 + $0x88] sm:$0xff] %vm395, %v6101
        %6134 = vst.msk [vmem:[%s271 + $0x90] sm:$0xff] %vm395, %v6102
        %6135 = vst.msk [vmem:[%s271 + $0x98] sm:$0xff] %vm395, %v6103
        %6136 = vst.msk [vmem:[%s271 + $0xa0] sm:$0xff] %vm395, %v6104
        %6137 = vst.msk [vmem:[%s271 + $0xa8] sm:$0xff] %vm395, %v6105
        %6138 = vst.msk [vmem:[%s271 + $0xb0] sm:$0xff] %vm395, %v6106
        %6139 = vst.msk [vmem:[%s271 + $0xb8] sm:$0xff] %vm395, %v6107
        %6140 = vst.msk [vmem:[%s271 + $0xc0] sm:$0xff] %vm395, %v6108
        %6141 = vst.msk [vmem:[%s271 + $0xc8] sm:$0xff] %vm395, %v6109
        %6142 = vst.msk [vmem:[%s271 + $0xd0] sm:$0xff] %vm395, %v6110
        %6143 = vst.msk [vmem:[%s271 + $0xd8] sm:$0xff] %vm395, %v6111
        %6144 = vst.msk [vmem:[%s271 + $0xe0] sm:$0xff] %vm395, %v6112
        %6145 = vst.msk [vmem:[%s271 + $0xe8] sm:$0xff] %vm395, %v6113
        %6146 = vst.msk [vmem:[%s271 + $0xf0] sm:$0xff] %vm395, %v6114
        %6147 = vst.msk [vmem:[%s271 + $0xf8] sm:$0xff] %vm395, %v6115
        %s6148 = sand.u32 %s181, 1
        %s6149 = scalar_lea.sflag [#allocation4], %s6148
        %s6150 = sand.u32 %s181, 1
        %s6151 = smul.addr %s6150, 256
        %s6152 = scalar_lea.vmem [#allocation3], %s6151
        // Predicated region
        $region49: #{inverted_residual.1} parent=47 // pred_check
          %p6153 = pneg %p191
        $region50: #{inverted_residual.1} parent=47 // pred_check_branch
          %6155 = sbr.rel (%p6153) target = $region52
        $region51: #{inverted_residual.1} parent=47 // pred_region
          %s6157 = ssub.s32 4096, 4096
          %6158 = vsyncadd %s6149, %s6157
          %s6159 = smul.addr %s21, 32
          %s6160 = smul.addr %s6159, 128
          %s6161 = scalar_lea.hbm %s7, %s6160
          %s6162 = sshll.u32 %s6152, 4
          %s6163 = int_to_ptr.vmem [resolvable:$true] %s6162
          %6168 = dma.vmem_to_hbm [thread:$0]  %s6163, 4096, %s6161, %s6149, 128, 128, 8
        $region52: #{inverted_residual.1} parent=47 // pred_fallthru
          _
      $region48: #{inverted_residual.1} parent=5 // pred_fallthru
        _
      %p6169 = scmp.le.s32.totalorder 2, %s16
      // Predicated region
      $region53: #{inverted_residual.1} parent=5 // pred_check
        %p6170 = pneg %p6169
      $region54: #{inverted_residual.1} parent=5 // pred_check_branch
        %6172 = sbr.rel (%p6170) target = $region56
      $region55: #{inverted_residual.1} parent=5 // pred_region
        %s6173 = ssub.s32 %s16, 2
        // Predicated region
        $region57: #{inverted_residual.1} parent=55 // pred_check
          %p6174 = pneg %p197
        $region58: #{inverted_residual.1} parent=55 // pred_check_branch
          %6176 = sbr.rel (%p6174) target = $region60
        $region59: #{inverted_residual.1} parent=55 // pred_region
          %s6177 = sand.u32 %s182, 1
          %s6178 = scalar_lea.sflag [#allocation4], %s6177
          %s6179 = sand.u32 %s182, 1
          %s6180 = smul.addr %s6179, 256
          %s6181 = scalar_lea.vmem [#allocation3], %s6180
          %6182 = dma.done %s6178, 4096
        $region60: #{inverted_residual.1} parent=55 // pred_fallthru
          _
      $region56: #{inverted_residual.1} parent=5 // pred_fallthru
        _
    $region6: #{inverted_residual.1} parent=1 // loop_footer
      %s20 = sadd.s32 1, %s16
    $region7: #{inverted_residual.1} parent=1 // loop_footer_branch
      %15 = sbr.rel target = $region3
    $region8: #{inverted_residual.1} parent=1 // loop_exit
      _
    %6183 = vsyncpa [#allocation4], 1
    %s6184 = scalar_lea.sflag [#allocation4], 1
    %6185 = vsyncpa %s6184, 1

</llo_original>
